<compile_context>
chip_gen: v7x
topology: tpu7x:2x2x1
jax: 0.10.0
libtpu: 0.0.40
codegen_flags: <defaults>
</compile_context>

<pallas_src>
import functools

import jax
import jax.numpy as jnp
from jax import lax
from jax.experimental import pallas as pl
from jax.experimental.pallas import tpu as pltpu

LANE = 128
SUBLANE = 8


def _round_up(x, m):
    return (x + m - 1) // m * m


def _pad_gate_cols(w, h, hp):
    """Pad each of the 4 gate blocks along the last axis from h to hp columns."""
    if hp == h:
        return w
    parts = jnp.split(w, 4, axis=-1)
    pad_width = [(0, 0)] * (w.ndim - 1) + [(0, hp - h)]
    return jnp.concatenate([jnp.pad(p, pad_width) for p in parts], axis=-1)


# ------------------------------ fused Pallas kernel ------------------------------ #

def fused_lstm_kernel(xt_ref, wg_ref, bg_ref, whh_ref, wout_ref, bout_ref,
                      o_ref, gx_ref, hs_ref, *, seq_len, hidden_p, unroll):
    # xt_ref:   (S, Bt, K*F)  time-major conv-tap-folded input (bf16)
    # wg_ref:   (K*F, 4Hp)    folded conv x W_ih weights, gate cols 128-aligned (bf16)
    # bg_ref:   (1, 4Hp)      folded bias  b_conv@W_ih + b_ih + b_hh (f32)
    # whh_ref:  (Hp, 4Hp)     recurrent weights, gate cols 128-aligned (bf16)
    # wout_ref: (Hp, O)       output head weights (bf16)
    # bout_ref: (1, O)        output head bias (f32)
    # o_ref:    (S, Bt, O)    model output block (time-major)
    # gx_ref:   VMEM (S, Bt, 4Hp) f32 scratch: hoisted input-gate pre-activations
    # hs_ref:   VMEM (S, Bt, Hp)  bf16 scratch: all hidden states (head epilogue operand)
    S = seq_len
    Hp = hidden_p
    G = 4 * Hp
    Bt = xt_ref.shape[1]
    KF = xt_ref.shape[2]

    # ---- hoisted non-recurrent part: one dense (S*Bt, K*F) x (K*F, 4Hp) bf16 matmul ----
    gx = jnp.dot(xt_ref[...].reshape(S * Bt, KF), wg_ref[...],
                 preferred_element_type=jnp.float32)
    gx_ref[...] = (gx + bg_ref[...]).reshape(S, Bt, G)

    def sigmoid(v):  # 0.5*tanh(0.5x)+0.5 == sigmoid(x): a single EUP push per gate
        return 0.5 * jnp.tanh(0.5 * v) + 0.5

    # ---- serial recurrence: time-major scratch -> contiguous (Bt, .) tile per step ----
    def step(t, carry):
        h, c = carry                                               # (Bt, Hp) f32
        g = gx_ref[t] + jnp.dot(h.astype(whh_ref.dtype), whh_ref[...],
                                preferred_element_type=jnp.float32)  # (Bt, 4Hp) f32
        # PyTorch gate order: i, f, g, o ; gate slices are 128-lane aligned.
        i = sigmoid(g[:, 0:Hp])
        f = sigmoid(g[:, Hp:2 * Hp])
        gg = jnp.tanh(g[:, 2 * Hp:3 * Hp])
        o = sigmoid(g[:, 3 * Hp:4 * Hp])
        c_new = f * c + i * gg
        h_new = o * jnp.tanh(c_new)
        hs_ref[t] = h_new.astype(hs_ref.dtype)                     # contiguous tile store
        return h_new, c_new

    h0 = jnp.zeros((Bt, Hp), jnp.float32)
    c0 = jnp.zeros((Bt, Hp), jnp.float32)
    lax.fori_loop(0, S, step, (h0, c0), unroll=unroll)

    # ---- epilogue: linear head on the VMEM-resident hidden states, one dense store ----
    out = jnp.dot(hs_ref[...].reshape(S * Bt, Hp), wout_ref[...],
                  preferred_element_type=jnp.float32) + bout_ref[...]
    o_ref[...] = out.reshape(S, Bt, -1).astype(o_ref.dtype)


# --------------------------------- JAX wrapper ----------------------------------- #

def lstm_model_forward(x, params, *, block_b=None, mxu_dtype=jnp.bfloat16):
    """Full LSTMModel forward: conv embed -> LSTM -> linear head, fused into one kernel."""
    w_conv, b_conv, w_ih_t, w_hh_t, b_lstm, w_out_t, b_out = params
    B, S, F = x.shape
    K = w_conv.shape[0]
    H = w_hh_t.shape[0]
    O = w_out_t.shape[1]
    pad = (K - 1) // 2      # reproduces Conv1d(padding=1) for odd K (K=3 here)
    KF = K * F
    Hp = _round_up(H, LANE)  # gate blocks aligned to 128 lanes
    Gp = 4 * Hp

    # ---- fold Conv1d taps into the LSTM input projection (tiny host-side matmuls) ----
    w_gates = jnp.einsum("kfh,hg->kfg", w_conv, w_ih_t)                      # (K, F, 4H)
    w_gates = _pad_gate_cols(w_gates, H, Hp).reshape(KF, Gp)                 # (K*F, 4Hp)
    b_gates = _pad_gate_cols((b_conv @ w_ih_t + b_lstm).reshape(1, 4 * H), H, Hp)
    w_hh_p = _pad_gate_cols(jnp.pad(w_hh_t, ((0, Hp - H), (0, 0))), H, Hp)   # (Hp, 4Hp)
    w_out_p = jnp.pad(w_out_t, ((0, Hp - H), (0, 0)))                        # (Hp, O)

    mxu_bytes = jnp.dtype(mxu_dtype).itemsize
    x_bytes = jnp.dtype(x.dtype).itemsize

    # ---- VMEM-budgeted batch tile (per-generation; v7x has 64 MiB, v5e/v6e 128 MiB) ----
    try:
        vmem_cap = int(pltpu.get_tpu_info().vmem_capacity_bytes)
    except Exception:  # conservative fallback that fits every generation
        vmem_cap = 64 * 1024 * 1024
    budget = int(vmem_cap * 0.70)
    # weights are double-buffered by the auto-pipeliner (constant index); count 2x.
    weight_bytes = 2 * (KF * Gp + Hp * Gp + Hp * O) * mxu_bytes + 2 * (Gp + O) * 4
    bytes_per_row = (S * Gp * 4                  # gx scratch (f32)
                     + S * Hp * mxu_bytes        # hs scratch (bf16)
                     + 2 * S * KF * mxu_bytes    # double-buffered input block
                     + 2 * S * O * x_bytes)      # double-buffered output block
    # NOTE: for very long S with large H, chunking gx/hs along the sequence would be
    # needed to keep block_b large; not implemented here.
    if block_b is None:
        bb_max = max(SUBLANE,
                     min(128, ((budget - weight_bytes) // bytes_per_row)
                         // SUBLANE * SUBLANE))
        # balanced tiles (avoid ~2x padding waste) and >=2 tiles to feed both v7x cores
        n_tiles = max(pl.cdiv(B, bb_max), 2 if B >= 2 * SUBLANE else 1)
        block_b = min(bb_max, _round_up(pl.cdiv(B, n_tiles), SUBLANE))
    else:
        block_b = _round_up(block_b, SUBLANE)
        n_tiles = pl.cdiv(B, block_b)
    Bp = n_tiles * block_b

    # ---- build the time-major, conv-tap-folded input: (S, Bp, K*F) ----
    xpad = jnp.pad(x, ((0, 0), (pad, pad), (0, 0)))
    x_taps = jnp.concatenate([xpad[:, k:k + S, :] for k in range(K)], axis=-1)  # (B,S,K*F)
    x_taps = jnp.transpose(x_taps, (1, 0, 2))                                   # (S,B,K*F)
    x_taps = jnp.pad(x_taps, ((0, 0), (0, Bp - B), (0, 0))).astype(mxu_dtype)

    unroll = True if S <= 16 else 2   # deep unroll just extends live ranges (serial dep)
    kern = functools.partial(fused_lstm_kernel, seq_len=S, hidden_p=Hp, unroll=unroll)

    out = pl.pallas_call(
        kern,
        out_shape=jax.ShapeDtypeStruct((S, Bp, O), x.dtype),
        grid=(Bp // block_b,),
        in_specs=[
            pl.BlockSpec((S, block_b, KF), lambda b: (0, b, 0)),   # input, tiled over batch
            pl.BlockSpec((KF, Gp), lambda b: (0, 0)),              # weights: constant index
            pl.BlockSpec((1, Gp), lambda b: (0, 0)),
            pl.BlockSpec((Hp, Gp), lambda b: (0, 0)),
            pl.BlockSpec((Hp, O), lambda b: (0, 0)),
            pl.BlockSpec((1, O), lambda b: (0, 0)),
        ],
        out_specs=pl.BlockSpec((S, block_b, O), lambda b: (0, b, 0)),
        scratch_shapes=[
            pltpu.VMEM((S, block_b, Gp), jnp.float32),             # gates_x (time-major)
            pltpu.VMEM((S, block_b, Hp), mxu_dtype),               # hidden states (bf16)
        ],
        compiler_params=pltpu.CompilerParams(
            dimension_semantics=("parallel",),
            vmem_limit_bytes=int(vmem_cap * 0.9),
        ),
    )(x_taps,
      w_gates.astype(mxu_dtype), b_gates.astype(jnp.float32),
      w_hh_p.astype(mxu_dtype),
      w_out_p.astype(mxu_dtype), b_out.reshape(1, O).astype(jnp.float32))

    return jnp.transpose(out, (1, 0, 2))[:B]   # (B, S, O)


# ------------------------------ pure-JAX reference -------------------------------- #

def lstm_model_reference(x, params):
    w_conv, b_conv, w_ih_t, w_hh_t, b_lstm, w_out_t, b_out = params
    B, S, F = x.shape
    K, _, H = w_conv.shape
    xpad = jnp.pad(x, ((0, 0), (1, 1), (0, 0)))
    emb = b_conv[None, None, :] + sum(
        jnp.einsum("bsf,fh->bsh", xpad[:, k:k + S, :], w_conv[k]) for k in range(K)
    )

    def cell(carry, x_t):
        h, c = carry
        gates = x_t @ w_ih_t + h @ w_hh_t + b_lstm
        i, f, g, o = jnp.split(gates, 4, axis=-1)
        i, f, o = jax.nn.sigmoid(i), jax.nn.sigmoid(f), jax.nn.sigmoid(o)
        g = jnp.tanh(g)
        c = f * c + i * g
        h = o * jnp.tanh(c)
        return (h, c), h

    h0 = jnp.zeros((B, H), jnp.float32)
    c0 = jnp.zeros((B, H), jnp.float32)
    _, hs = lax.scan(cell, (h0, c0), jnp.swapaxes(emb, 0, 1))
    lstm_out = jnp.swapaxes(hs, 0, 1)
    return lstm_out @ w_out_t + b_out


# ------------------------------------- main ---------------------------------------- #

def init_params(key, in_features, hidden_features, out_features):
    H, F, O = hidden_features, in_features, out_features
    ks = jax.random.split(key, 8)

    def unif(k, shape, bound):
        return jax.random.uniform(k, shape, jnp.float32, -bound, bound)

    # Conv1d(F -> H, kernel_size=3): torch weight (H, F, 3) stored here as (3, F, H).
    cb = 1.0 / jnp.sqrt(F * 3.0)
    w_conv = unif(ks[0], (3, F, H), cb)
    b_conv = unif(ks[1], (H,), cb)
    # LSTM(input=H, hidden=H): torch (4H, H) weights stored transposed as (H, 4H).
    lb = 1.0 / jnp.sqrt(float(H))
    w_ih_t = unif(ks[2], (H, 4 * H), lb)
    w_hh_t = unif(ks[3], (H, 4 * H), lb)
    b_lstm = unif(ks[4], (4 * H,), lb) + unif(ks[5], (4 * H,), lb)  # b_ih + b_hh
    # Linear(H -> O): torch (O, H) stored transposed as (H, O).
    w_out_t = unif(ks[6], (H, O), lb)
    b_out = unif(ks[7], (O,), lb)
    return (w_conv, b_conv, w_ih_t, w_hh_t, b_lstm, w_out_t, b_out)


if __name__ == "__main__":
    B, S = 2, 8
    in_features, hidden_features, out_features = 4, 32, 8

    key = jax.random.PRNGKey(0)
    k_x, k_p = jax.random.split(key)
    x = jax.random.normal(k_x, (B, S, in_features), jnp.float32)
    params = init_params(k_p, in_features, hidden_features, out_features)

    out = jax.block_until_ready(lstm_model_forward(x, params))
    ref = jax.block_until_ready(lstm_model_reference(x, params))

    assert out.shape == (B, S, out_features), out.shape
    # bf16 MXU operands (f32 accumulation / state) -> slightly looser tolerance vs f32 ref.
    assert jnp.allclose(out, ref, rtol=3e-2, atol=2e-2), float(jnp.max(jnp.abs(out - ref)))
    print("KERNEL_OK")
</pallas_src>

<mosaic_0001>
module attributes {stable_mosaic.version = 11 : i64} {
  func.func @fused_lstm_kernel(%arg0: i32, %arg1: memref<8x8x12xbf16, #tpu.memory_space<vmem>>, %arg2: memref<12x512xbf16, #tpu.memory_space<vmem>>, %arg3: memref<1x512xf32, #tpu.memory_space<vmem>>, %arg4: memref<128x512xbf16, #tpu.memory_space<vmem>>, %arg5: memref<128x8xbf16, #tpu.memory_space<vmem>>, %arg6: memref<1x8xf32, #tpu.memory_space<vmem>>, %arg7: memref<8x8x8xf32, #tpu.memory_space<vmem>>, %arg8: memref<8x8x512xf32, #tpu.memory_space<vmem>>, %arg9: memref<8x8x128xbf16, #tpu.memory_space<vmem>>) attributes {dimension_semantics = [#tpu.dimension_semantics<parallel>], iteration_bounds = array<i64: 1>, scalar_prefetch = 0 : i64, scratch_operands = 2 : i64, tpu.core_type = #tpu.core_type<tc>, window_params = [{transform_indices = @transform_0, window_bounds = array<i64: 8, 8, 12>}, {pipeline_mode = #tpu.pipeline_mode<synchronous>, transform_indices = @transform_1, window_bounds = array<i64: 12, 512>}, {pipeline_mode = #tpu.pipeline_mode<synchronous>, transform_indices = @transform_2, window_bounds = array<i64: 1, 512>}, {pipeline_mode = #tpu.pipeline_mode<synchronous>, transform_indices = @transform_3, window_bounds = array<i64: 128, 512>}, {pipeline_mode = #tpu.pipeline_mode<synchronous>, transform_indices = @transform_4, window_bounds = array<i64: 128, 8>}, {pipeline_mode = #tpu.pipeline_mode<synchronous>, transform_indices = @transform_5, window_bounds = array<i64: 1, 8>}, {transform_indices = @transform_6, window_bounds = array<i64: 8, 8, 8>}]} {
    %c0 = arith.constant 0 : index
    %c0_0 = arith.constant 0 : index
    %c0_1 = arith.constant 0 : index
    %0 = vector.load %arg1[%c0, %c0_0, %c0_1] : memref<8x8x12xbf16, #tpu.memory_space<vmem>>, vector<8x8x12xbf16>
    %1 = vector.shape_cast %0 : vector<8x8x12xbf16> to vector<64x12xbf16>
    %c0_2 = arith.constant 0 : index
    %c0_3 = arith.constant 0 : index
    %2 = vector.load %arg2[%c0_2, %c0_3] : memref<12x512xbf16, #tpu.memory_space<vmem>>, vector<12x512xbf16>
    %cst = arith.constant dense<0.000000e+00> : vector<64x512xf32>
    %3 = tpu.matmul %1, %2, %cst {dimension_numbers = #tpu.dot_dimension_numbers<[1], [0], [0], [1], [0, 0, 1, 1], [], []>} : vector<64x12xbf16>, vector<12x512xbf16>, vector<64x512xf32> -> vector<64x512xf32>
    %c0_4 = arith.constant 0 : index
    %c0_5 = arith.constant 0 : index
    %4 = vector.load %arg3[%c0_4, %c0_5] : memref<1x512xf32, #tpu.memory_space<vmem>>, vector<1x512xf32>
    %5 = vector.broadcast %4 : vector<1x512xf32> to vector<64x512xf32>
    %6 = arith.addf %3, %5 : vector<64x512xf32>
    %7 = vector.shape_cast %6 : vector<64x512xf32> to vector<8x8x512xf32>
    %c0_6 = arith.constant 0 : index
    %c0_7 = arith.constant 0 : index
    %c0_8 = arith.constant 0 : index
    %8 = vector.load %arg8[%c0_6, %c0_7, %c0_8] : memref<8x8x512xf32, #tpu.memory_space<vmem>>, vector<8x8x512xf32>
    tpu.vector_store %arg8[%c0_6, %c0_7, %c0_8], %7 {strides = array<i32>} : memref<8x8x512xf32, #tpu.memory_space<vmem>>, vector<8x8x512xf32>,
    %cst_9 = arith.constant 0.000000e+00 : f32
    %9 = vector.broadcast %cst_9 : f32 to vector<8x128xf32>
    %cst_10 = arith.constant 0.000000e+00 : f32
    %10 = vector.broadcast %cst_10 : f32 to vector<8x128xf32>
    %c0_i32 = arith.constant 0 : i32
    %11 = arith.index_cast %c0_i32 : i32 to index
    %c0_11 = arith.constant 0 : index
    %c0_12 = arith.constant 0 : index
    %12 = vector.load %arg8[%11, %c0_11, %c0_12] : memref<8x8x512xf32, #tpu.memory_space<vmem>>, vector<1x8x512xf32>
    %13 = vector.shape_cast %12 : vector<1x8x512xf32> to vector<8x512xf32>
    %14 = arith.truncf %9 : vector<8x128xf32> to vector<8x128xbf16>
    %c0_13 = arith.constant 0 : index
    %c0_14 = arith.constant 0 : index
    %15 = vector.load %arg4[%c0_13, %c0_14] : memref<128x512xbf16, #tpu.memory_space<vmem>>, vector<128x512xbf16>
    %cst_15 = arith.constant dense<0.000000e+00> : vector<8x512xf32>
    %16 = tpu.matmul %14, %15, %cst_15 {dimension_numbers = #tpu.dot_dimension_numbers<[1], [0], [0], [1], [0, 0, 1, 1], [], []>} : vector<8x128xbf16>, vector<128x512xbf16>, vector<8x512xf32> -> vector<8x512xf32>
    %17 = arith.addf %13, %16 : vector<8x512xf32>
    %18 = vector.extract_strided_slice %17 {offsets = [0, 0], sizes = [8, 128], strides = [1, 1]} : vector<8x512xf32> to vector<8x128xf32>
    %cst_16 = arith.constant 5.000000e-01 : f32
    %19 = vector.broadcast %cst_16 : f32 to vector<8x128xf32>
    %20 = arith.mulf %19, %18 : vector<8x128xf32>
    %21 = math.tanh %20 : vector<8x128xf32>
    %cst_17 = arith.constant 5.000000e-01 : f32
    %22 = vector.broadcast %cst_17 : f32 to vector<8x128xf32>
    %23 = arith.mulf %22, %21 : vector<8x128xf32>
    %cst_18 = arith.constant 5.000000e-01 : f32
    %24 = vector.broadcast %cst_18 : f32 to vector<8x128xf32>
    %25 = arith.addf %23, %24 : vector<8x128xf32>
    %26 = vector.extract_strided_slice %17 {offsets = [0, 128], sizes = [8, 128], strides = [1, 1]} : vector<8x512xf32> to vector<8x128xf32>
    %cst_19 = arith.constant 5.000000e-01 : f32
    %27 = vector.broadcast %cst_19 : f32 to vector<8x128xf32>
    %28 = arith.mulf %27, %26 : vector<8x128xf32>
    %29 = math.tanh %28 : vector<8x128xf32>
    %cst_20 = arith.constant 5.000000e-01 : f32
    %30 = vector.broadcast %cst_20 : f32 to vector<8x128xf32>
    %31 = arith.mulf %30, %29 : vector<8x128xf32>
    %cst_21 = arith.constant 5.000000e-01 : f32
    %32 = vector.broadcast %cst_21 : f32 to vector<8x128xf32>
    %33 = arith.addf %31, %32 : vector<8x128xf32>
    %34 = vector.extract_strided_slice %17 {offsets = [0, 256], sizes = [8, 128], strides = [1, 1]} : vector<8x512xf32> to vector<8x128xf32>
    %35 = math.tanh %34 : vector<8x128xf32>
    %36 = vector.extract_strided_slice %17 {offsets = [0, 384], sizes = [8, 128], strides = [1, 1]} : vector<8x512xf32> to vector<8x128xf32>
    %cst_22 = arith.constant 5.000000e-01 : f32
    %37 = vector.broadcast %cst_22 : f32 to vector<8x128xf32>
    %38 = arith.mulf %37, %36 : vector<8x128xf32>
    %39 = math.tanh %38 : vector<8x128xf32>
    %cst_23 = arith.constant 5.000000e-01 : f32
    %40 = vector.broadcast %cst_23 : f32 to vector<8x128xf32>
    %41 = arith.mulf %40, %39 : vector<8x128xf32>
    %cst_24 = arith.constant 5.000000e-01 : f32
    %42 = vector.broadcast %cst_24 : f32 to vector<8x128xf32>
    %43 = arith.addf %41, %42 : vector<8x128xf32>
    %44 = arith.mulf %33, %10 : vector<8x128xf32>
    %45 = arith.mulf %25, %35 : vector<8x128xf32>
    %46 = arith.addf %44, %45 : vector<8x128xf32>
    %47 = math.tanh %46 : vector<8x128xf32>
    %48 = arith.mulf %43, %47 : vector<8x128xf32>
    %49 = arith.truncf %48 : vector<8x128xf32> to vector<8x128xbf16>
    %50 = arith.index_cast %c0_i32 : i32 to index
    %c0_25 = arith.constant 0 : index
    %c0_26 = arith.constant 0 : index
    %51 = vector.load %arg9[%50, %c0_25, %c0_26] : memref<8x8x128xbf16, #tpu.memory_space<vmem>>, vector<1x8x128xbf16>
    %52 = vector.shape_cast %51 : vector<1x8x128xbf16> to vector<8x128xbf16>
    %53 = vector.shape_cast %49 : vector<8x128xbf16> to vector<1x8x128xbf16>
    tpu.vector_store %arg9[%50, %c0_25, %c0_26], %53 {strides = array<i32>} : memref<8x8x128xbf16, #tpu.memory_space<vmem>>, vector<1x8x128xbf16>,
    %c1_i32 = arith.constant 1 : i32
    %54 = arith.index_cast %c1_i32 : i32 to index
    %c0_27 = arith.constant 0 : index
    %c0_28 = arith.constant 0 : index
    %55 = vector.load %arg8[%54, %c0_27, %c0_28] : memref<8x8x512xf32, #tpu.memory_space<vmem>>, vector<1x8x512xf32>
    %56 = vector.shape_cast %55 : vector<1x8x512xf32> to vector<8x512xf32>
    %57 = arith.truncf %48 : vector<8x128xf32> to vector<8x128xbf16>
    %c0_29 = arith.constant 0 : index
    %c0_30 = arith.constant 0 : index
    %58 = vector.load %arg4[%c0_29, %c0_30] : memref<128x512xbf16, #tpu.memory_space<vmem>>, vector<128x512xbf16>
    %cst_31 = arith.constant dense<0.000000e+00> : vector<8x512xf32>
    %59 = tpu.matmul %57, %58, %cst_31 {dimension_numbers = #tpu.dot_dimension_numbers<[1], [0], [0], [1], [0, 0, 1, 1], [], []>} : vector<8x128xbf16>, vector<128x512xbf16>, vector<8x512xf32> -> vector<8x512xf32>
    %60 = arith.addf %56, %59 : vector<8x512xf32>
    %61 = vector.extract_strided_slice %60 {offsets = [0, 0], sizes = [8, 128], strides = [1, 1]} : vector<8x512xf32> to vector<8x128xf32>
    %cst_32 = arith.constant 5.000000e-01 : f32
    %62 = vector.broadcast %cst_32 : f32 to vector<8x128xf32>
    %63 = arith.mulf %62, %61 : vector<8x128xf32>
    %64 = math.tanh %63 : vector<8x128xf32>
    %cst_33 = arith.constant 5.000000e-01 : f32
    %65 = vector.broadcast %cst_33 : f32 to vector<8x128xf32>
    %66 = arith.mulf %65, %64 : vector<8x128xf32>
    %cst_34 = arith.constant 5.000000e-01 : f32
    %67 = vector.broadcast %cst_34 : f32 to vector<8x128xf32>
    %68 = arith.addf %66, %67 : vector<8x128xf32>
    %69 = vector.extract_strided_slice %60 {offsets = [0, 128], sizes = [8, 128], strides = [1, 1]} : vector<8x512xf32> to vector<8x128xf32>
    %cst_35 = arith.constant 5.000000e-01 : f32
    %70 = vector.broadcast %cst_35 : f32 to vector<8x128xf32>
    %71 = arith.mulf %70, %69 : vector<8x128xf32>
    %72 = math.tanh %71 : vector<8x128xf32>
    %cst_36 = arith.constant 5.000000e-01 : f32
    %73 = vector.broadcast %cst_36 : f32 to vector<8x128xf32>
    %74 = arith.mulf %73, %72 : vector<8x128xf32>
    %cst_37 = arith.constant 5.000000e-01 : f32
    %75 = vector.broadcast %cst_37 : f32 to vector<8x128xf32>
    %76 = arith.addf %74, %75 : vector<8x128xf32>
    %77 = vector.extract_strided_slice %60 {offsets = [0, 256], sizes = [8, 128], strides = [1, 1]} : vector<8x512xf32> to vector<8x128xf32>
    %78 = math.tanh %77 : vector<8x128xf32>
    %79 = vector.extract_strided_slice %60 {offsets = [0, 384], sizes = [8, 128], strides = [1, 1]} : vector<8x512xf32> to vector<8x128xf32>
    %cst_38 = arith.constant 5.000000e-01 : f32
    %80 = vector.broadcast %cst_38 : f32 to vector<8x128xf32>
    %81 = arith.mulf %80, %79 : vector<8x128xf32>
    %82 = math.tanh %81 : vector<8x128xf32>
    %cst_39 = arith.constant 5.000000e-01 : f32
    %83 = vector.broadcast %cst_39 : f32 to vector<8x128xf32>
    %84 = arith.mulf %83, %82 : vector<8x128xf32>
    %cst_40 = arith.constant 5.000000e-01 : f32
    %85 = vector.broadcast %cst_40 : f32 to vector<8x128xf32>
    %86 = arith.addf %84, %85 : vector<8x128xf32>
    %87 = arith.mulf %76, %46 : vector<8x128xf32>
    %88 = arith.mulf %68, %78 : vector<8x128xf32>
    %89 = arith.addf %87, %88 : vector<8x128xf32>
    %90 = math.tanh %89 : vector<8x128xf32>
    %91 = arith.mulf %86, %90 : vector<8x128xf32>
    %92 = arith.truncf %91 : vector<8x128xf32> to vector<8x128xbf16>
    %93 = arith.index_cast %c1_i32 : i32 to index
    %c0_41 = arith.constant 0 : index
    %c0_42 = arith.constant 0 : index
    %94 = vector.load %arg9[%93, %c0_41, %c0_42] : memref<8x8x128xbf16, #tpu.memory_space<vmem>>, vector<1x8x128xbf16>
    %95 = vector.shape_cast %94 : vector<1x8x128xbf16> to vector<8x128xbf16>
    %96 = vector.shape_cast %92 : vector<8x128xbf16> to vector<1x8x128xbf16>
    tpu.vector_store %arg9[%93, %c0_41, %c0_42], %96 {strides = array<i32>} : memref<8x8x128xbf16, #tpu.memory_space<vmem>>, vector<1x8x128xbf16>,
    %c2_i32 = arith.constant 2 : i32
    %97 = arith.index_cast %c2_i32 : i32 to index
    %c0_43 = arith.constant 0 : index
    %c0_44 = arith.constant 0 : index
    %98 = vector.load %arg8[%97, %c0_43, %c0_44] : memref<8x8x512xf32, #tpu.memory_space<vmem>>, vector<1x8x512xf32>
    %99 = vector.shape_cast %98 : vector<1x8x512xf32> to vector<8x512xf32>
    %100 = arith.truncf %91 : vector<8x128xf32> to vector<8x128xbf16>
    %c0_45 = arith.constant 0 : index
    %c0_46 = arith.constant 0 : index
    %101 = vector.load %arg4[%c0_45, %c0_46] : memref<128x512xbf16, #tpu.memory_space<vmem>>, vector<128x512xbf16>
    %cst_47 = arith.constant dense<0.000000e+00> : vector<8x512xf32>
    %102 = tpu.matmul %100, %101, %cst_47 {dimension_numbers = #tpu.dot_dimension_numbers<[1], [0], [0], [1], [0, 0, 1, 1], [], []>} : vector<8x128xbf16>, vector<128x512xbf16>, vector<8x512xf32> -> vector<8x512xf32>
    %103 = arith.addf %99, %102 : vector<8x512xf32>
    %104 = vector.extract_strided_slice %103 {offsets = [0, 0], sizes = [8, 128], strides = [1, 1]} : vector<8x512xf32> to vector<8x128xf32>
    %cst_48 = arith.constant 5.000000e-01 : f32
    %105 = vector.broadcast %cst_48 : f32 to vector<8x128xf32>
    %106 = arith.mulf %105, %104 : vector<8x128xf32>
    %107 = math.tanh %106 : vector<8x128xf32>
    %cst_49 = arith.constant 5.000000e-01 : f32
    %108 = vector.broadcast %cst_49 : f32 to vector<8x128xf32>
    %109 = arith.mulf %108, %107 : vector<8x128xf32>
    %cst_50 = arith.constant 5.000000e-01 : f32
    %110 = vector.broadcast %cst_50 : f32 to vector<8x128xf32>
    %111 = arith.addf %109, %110 : vector<8x128xf32>
    %112 = vector.extract_strided_slice %103 {offsets = [0, 128], sizes = [8, 128], strides = [1, 1]} : vector<8x512xf32> to vector<8x128xf32>
    %cst_51 = arith.constant 5.000000e-01 : f32
    %113 = vector.broadcast %cst_51 : f32 to vector<8x128xf32>
    %114 = arith.mulf %113, %112 : vector<8x128xf32>
    %115 = math.tanh %114 : vector<8x128xf32>
    %cst_52 = arith.constant 5.000000e-01 : f32
    %116 = vector.broadcast %cst_52 : f32 to vector<8x128xf32>
    %117 = arith.mulf %116, %115 : vector<8x128xf32>
    %cst_53 = arith.constant 5.000000e-01 : f32
    %118 = vector.broadcast %cst_53 : f32 to vector<8x128xf32>
    %119 = arith.addf %117, %118 : vector<8x128xf32>
    %120 = vector.extract_strided_slice %103 {offsets = [0, 256], sizes = [8, 128], strides = [1, 1]} : vector<8x512xf32> to vector<8x128xf32>
    %121 = math.tanh %120 : vector<8x128xf32>
    %122 = vector.extract_strided_slice %103 {offsets = [0, 384], sizes = [8, 128], strides = [1, 1]} : vector<8x512xf32> to vector<8x128xf32>
    %cst_54 = arith.constant 5.000000e-01 : f32
    %123 = vector.broadcast %cst_54 : f32 to vector<8x128xf32>
    %124 = arith.mulf %123, %122 : vector<8x128xf32>
    %125 = math.tanh %124 : vector<8x128xf32>
    %cst_55 = arith.constant 5.000000e-01 : f32
    %126 = vector.broadcast %cst_55 : f32 to vector<8x128xf32>
    %127 = arith.mulf %126, %125 : vector<8x128xf32>
    %cst_56 = arith.constant 5.000000e-01 : f32
    %128 = vector.broadcast %cst_56 : f32 to vector<8x128xf32>
    %129 = arith.addf %127, %128 : vector<8x128xf32>
    %130 = arith.mulf %119, %89 : vector<8x128xf32>
    %131 = arith.mulf %111, %121 : vector<8x128xf32>
    %132 = arith.addf %130, %131 : vector<8x128xf32>
    %133 = math.tanh %132 : vector<8x128xf32>
    %134 = arith.mulf %129, %133 : vector<8x128xf32>
    %135 = arith.truncf %134 : vector<8x128xf32> to vector<8x128xbf16>
    %136 = arith.index_cast %c2_i32 : i32 to index
    %c0_57 = arith.constant 0 : index
    %c0_58 = arith.constant 0 : index
    %137 = vector.load %arg9[%136, %c0_57, %c0_58] : memref<8x8x128xbf16, #tpu.memory_space<vmem>>, vector<1x8x128xbf16>
    %138 = vector.shape_cast %137 : vector<1x8x128xbf16> to vector<8x128xbf16>
    %139 = vector.shape_cast %135 : vector<8x128xbf16> to vector<1x8x128xbf16>
    tpu.vector_store %arg9[%136, %c0_57, %c0_58], %139 {strides = array<i32>} : memref<8x8x128xbf16, #tpu.memory_space<vmem>>, vector<1x8x128xbf16>,
    %c3_i32 = arith.constant 3 : i32
    %140 = arith.index_cast %c3_i32 : i32 to index
    %c0_59 = arith.constant 0 : index
    %c0_60 = arith.constant 0 : index
    %141 = vector.load %arg8[%140, %c0_59, %c0_60] : memref<8x8x512xf32, #tpu.memory_space<vmem>>, vector<1x8x512xf32>
    %142 = vector.shape_cast %141 : vector<1x8x512xf32> to vector<8x512xf32>
    %143 = arith.truncf %134 : vector<8x128xf32> to vector<8x128xbf16>
    %c0_61 = arith.constant 0 : index
    %c0_62 = arith.constant 0 : index
    %144 = vector.load %arg4[%c0_61, %c0_62] : memref<128x512xbf16, #tpu.memory_space<vmem>>, vector<128x512xbf16>
    %cst_63 = arith.constant dense<0.000000e+00> : vector<8x512xf32>
    %145 = tpu.matmul %143, %144, %cst_63 {dimension_numbers = #tpu.dot_dimension_numbers<[1], [0], [0], [1], [0, 0, 1, 1], [], []>} : vector<8x128xbf16>, vector<128x512xbf16>, vector<8x512xf32> -> vector<8x512xf32>
    %146 = arith.addf %142, %145 : vector<8x512xf32>
    %147 = vector.extract_strided_slice %146 {offsets = [0, 0], sizes = [8, 128], strides = [1, 1]} : vector<8x512xf32> to vector<8x128xf32>
    %cst_64 = arith.constant 5.000000e-01 : f32
    %148 = vector.broadcast %cst_64 : f32 to vector<8x128xf32>
    %149 = arith.mulf %148, %147 : vector<8x128xf32>
    %150 = math.tanh %149 : vector<8x128xf32>
    %cst_65 = arith.constant 5.000000e-01 : f32
    %151 = vector.broadcast %cst_65 : f32 to vector<8x128xf32>
    %152 = arith.mulf %151, %150 : vector<8x128xf32>
    %cst_66 = arith.constant 5.000000e-01 : f32
    %153 = vector.broadcast %cst_66 : f32 to vector<8x128xf32>
    %154 = arith.addf %152, %153 : vector<8x128xf32>
    %155 = vector.extract_strided_slice %146 {offsets = [0, 128], sizes = [8, 128], strides = [1, 1]} : vector<8x512xf32> to vector<8x128xf32>
    %cst_67 = arith.constant 5.000000e-01 : f32
    %156 = vector.broadcast %cst_67 : f32 to vector<8x128xf32>
    %157 = arith.mulf %156, %155 : vector<8x128xf32>
    %158 = math.tanh %157 : vector<8x128xf32>
    %cst_68 = arith.constant 5.000000e-01 : f32
    %159 = vector.broadcast %cst_68 : f32 to vector<8x128xf32>
    %160 = arith.mulf %159, %158 : vector<8x128xf32>
    %cst_69 = arith.constant 5.000000e-01 : f32
    %161 = vector.broadcast %cst_69 : f32 to vector<8x128xf32>
    %162 = arith.addf %160, %161 : vector<8x128xf32>
    %163 = vector.extract_strided_slice %146 {offsets = [0, 256], sizes = [8, 128], strides = [1, 1]} : vector<8x512xf32> to vector<8x128xf32>
    %164 = math.tanh %163 : vector<8x128xf32>
    %165 = vector.extract_strided_slice %146 {offsets = [0, 384], sizes = [8, 128], strides = [1, 1]} : vector<8x512xf32> to vector<8x128xf32>
    %cst_70 = arith.constant 5.000000e-01 : f32
    %166 = vector.broadcast %cst_70 : f32 to vector<8x128xf32>
    %167 = arith.mulf %166, %165 : vector<8x128xf32>
    %168 = math.tanh %167 : vector<8x128xf32>
    %cst_71 = arith.constant 5.000000e-01 : f32
    %169 = vector.broadcast %cst_71 : f32 to vector<8x128xf32>
    %170 = arith.mulf %169, %168 : vector<8x128xf32>
    %cst_72 = arith.constant 5.000000e-01 : f32
    %171 = vector.broadcast %cst_72 : f32 to vector<8x128xf32>
    %172 = arith.addf %170, %171 : vector<8x128xf32>
    %173 = arith.mulf %162, %132 : vector<8x128xf32>
    %174 = arith.mulf %154, %164 : vector<8x128xf32>
    %175 = arith.addf %173, %174 : vector<8x128xf32>
    %176 = math.tanh %175 : vector<8x128xf32>
    %177 = arith.mulf %172, %176 : vector<8x128xf32>
    %178 = arith.truncf %177 : vector<8x128xf32> to vector<8x128xbf16>
    %179 = arith.index_cast %c3_i32 : i32 to index
    %c0_73 = arith.constant 0 : index
    %c0_74 = arith.constant 0 : index
    %180 = vector.load %arg9[%179, %c0_73, %c0_74] : memref<8x8x128xbf16, #tpu.memory_space<vmem>>, vector<1x8x128xbf16>
    %181 = vector.shape_cast %180 : vector<1x8x128xbf16> to vector<8x128xbf16>
    %182 = vector.shape_cast %178 : vector<8x128xbf16> to vector<1x8x128xbf16>
    tpu.vector_store %arg9[%179, %c0_73, %c0_74], %182 {strides = array<i32>} : memref<8x8x128xbf16, #tpu.memory_space<vmem>>, vector<1x8x128xbf16>,
    %c4_i32 = arith.constant 4 : i32
    %183 = arith.index_cast %c4_i32 : i32 to index
    %c0_75 = arith.constant 0 : index
    %c0_76 = arith.constant 0 : index
    %184 = vector.load %arg8[%183, %c0_75, %c0_76] : memref<8x8x512xf32, #tpu.memory_space<vmem>>, vector<1x8x512xf32>
    %185 = vector.shape_cast %184 : vector<1x8x512xf32> to vector<8x512xf32>
    %186 = arith.truncf %177 : vector<8x128xf32> to vector<8x128xbf16>
    %c0_77 = arith.constant 0 : index
    %c0_78 = arith.constant 0 : index
    %187 = vector.load %arg4[%c0_77, %c0_78] : memref<128x512xbf16, #tpu.memory_space<vmem>>, vector<128x512xbf16>
    %cst_79 = arith.constant dense<0.000000e+00> : vector<8x512xf32>
    %188 = tpu.matmul %186, %187, %cst_79 {dimension_numbers = #tpu.dot_dimension_numbers<[1], [0], [0], [1], [0, 0, 1, 1], [], []>} : vector<8x128xbf16>, vector<128x512xbf16>, vector<8x512xf32> -> vector<8x512xf32>
    %189 = arith.addf %185, %188 : vector<8x512xf32>
    %190 = vector.extract_strided_slice %189 {offsets = [0, 0], sizes = [8, 128], strides = [1, 1]} : vector<8x512xf32> to vector<8x128xf32>
    %cst_80 = arith.constant 5.000000e-01 : f32
    %191 = vector.broadcast %cst_80 : f32 to vector<8x128xf32>
    %192 = arith.mulf %191, %190 : vector<8x128xf32>
    %193 = math.tanh %192 : vector<8x128xf32>
    %cst_81 = arith.constant 5.000000e-01 : f32
    %194 = vector.broadcast %cst_81 : f32 to vector<8x128xf32>
    %195 = arith.mulf %194, %193 : vector<8x128xf32>
    %cst_82 = arith.constant 5.000000e-01 : f32
    %196 = vector.broadcast %cst_82 : f32 to vector<8x128xf32>
    %197 = arith.addf %195, %196 : vector<8x128xf32>
    %198 = vector.extract_strided_slice %189 {offsets = [0, 128], sizes = [8, 128], strides = [1, 1]} : vector<8x512xf32> to vector<8x128xf32>
    %cst_83 = arith.constant 5.000000e-01 : f32
    %199 = vector.broadcast %cst_83 : f32 to vector<8x128xf32>
    %200 = arith.mulf %199, %198 : vector<8x128xf32>
    %201 = math.tanh %200 : vector<8x128xf32>
    %cst_84 = arith.constant 5.000000e-01 : f32
    %202 = vector.broadcast %cst_84 : f32 to vector<8x128xf32>
    %203 = arith.mulf %202, %201 : vector<8x128xf32>
    %cst_85 = arith.constant 5.000000e-01 : f32
    %204 = vector.broadcast %cst_85 : f32 to vector<8x128xf32>
    %205 = arith.addf %203, %204 : vector<8x128xf32>
    %206 = vector.extract_strided_slice %189 {offsets = [0, 256], sizes = [8, 128], strides = [1, 1]} : vector<8x512xf32> to vector<8x128xf32>
    %207 = math.tanh %206 : vector<8x128xf32>
    %208 = vector.extract_strided_slice %189 {offsets = [0, 384], sizes = [8, 128], strides = [1, 1]} : vector<8x512xf32> to vector<8x128xf32>
    %cst_86 = arith.constant 5.000000e-01 : f32
    %209 = vector.broadcast %cst_86 : f32 to vector<8x128xf32>
    %210 = arith.mulf %209, %208 : vector<8x128xf32>
    %211 = math.tanh %210 : vector<8x128xf32>
    %cst_87 = arith.constant 5.000000e-01 : f32
    %212 = vector.broadcast %cst_87 : f32 to vector<8x128xf32>
    %213 = arith.mulf %212, %211 : vector<8x128xf32>
    %cst_88 = arith.constant 5.000000e-01 : f32
    %214 = vector.broadcast %cst_88 : f32 to vector<8x128xf32>
    %215 = arith.addf %213, %214 : vector<8x128xf32>
    %216 = arith.mulf %205, %175 : vector<8x128xf32>
    %217 = arith.mulf %197, %207 : vector<8x128xf32>
    %218 = arith.addf %216, %217 : vector<8x128xf32>
    %219 = math.tanh %218 : vector<8x128xf32>
    %220 = arith.mulf %215, %219 : vector<8x128xf32>
    %221 = arith.truncf %220 : vector<8x128xf32> to vector<8x128xbf16>
    %222 = arith.index_cast %c4_i32 : i32 to index
    %c0_89 = arith.constant 0 : index
    %c0_90 = arith.constant 0 : index
    %223 = vector.load %arg9[%222, %c0_89, %c0_90] : memref<8x8x128xbf16, #tpu.memory_space<vmem>>, vector<1x8x128xbf16>
    %224 = vector.shape_cast %223 : vector<1x8x128xbf16> to vector<8x128xbf16>
    %225 = vector.shape_cast %221 : vector<8x128xbf16> to vector<1x8x128xbf16>
    tpu.vector_store %arg9[%222, %c0_89, %c0_90], %225 {strides = array<i32>} : memref<8x8x128xbf16, #tpu.memory_space<vmem>>, vector<1x8x128xbf16>,
    %c5_i32 = arith.constant 5 : i32
    %226 = arith.index_cast %c5_i32 : i32 to index
    %c0_91 = arith.constant 0 : index
    %c0_92 = arith.constant 0 : index
    %227 = vector.load %arg8[%226, %c0_91, %c0_92] : memref<8x8x512xf32, #tpu.memory_space<vmem>>, vector<1x8x512xf32>
    %228 = vector.shape_cast %227 : vector<1x8x512xf32> to vector<8x512xf32>
    %229 = arith.truncf %220 : vector<8x128xf32> to vector<8x128xbf16>
    %c0_93 = arith.constant 0 : index
    %c0_94 = arith.constant 0 : index
    %230 = vector.load %arg4[%c0_93, %c0_94] : memref<128x512xbf16, #tpu.memory_space<vmem>>, vector<128x512xbf16>
    %cst_95 = arith.constant dense<0.000000e+00> : vector<8x512xf32>
    %231 = tpu.matmul %229, %230, %cst_95 {dimension_numbers = #tpu.dot_dimension_numbers<[1], [0], [0], [1], [0, 0, 1, 1], [], []>} : vector<8x128xbf16>, vector<128x512xbf16>, vector<8x512xf32> -> vector<8x512xf32>
    %232 = arith.addf %228, %231 : vector<8x512xf32>
    %233 = vector.extract_strided_slice %232 {offsets = [0, 0], sizes = [8, 128], strides = [1, 1]} : vector<8x512xf32> to vector<8x128xf32>
    %cst_96 = arith.constant 5.000000e-01 : f32
    %234 = vector.broadcast %cst_96 : f32 to vector<8x128xf32>
    %235 = arith.mulf %234, %233 : vector<8x128xf32>
    %236 = math.tanh %235 : vector<8x128xf32>
    %cst_97 = arith.constant 5.000000e-01 : f32
    %237 = vector.broadcast %cst_97 : f32 to vector<8x128xf32>
    %238 = arith.mulf %237, %236 : vector<8x128xf32>
    %cst_98 = arith.constant 5.000000e-01 : f32
    %239 = vector.broadcast %cst_98 : f32 to vector<8x128xf32>
    %240 = arith.addf %238, %239 : vector<8x128xf32>
    %241 = vector.extract_strided_slice %232 {offsets = [0, 128], sizes = [8, 128], strides = [1, 1]} : vector<8x512xf32> to vector<8x128xf32>
    %cst_99 = arith.constant 5.000000e-01 : f32
    %242 = vector.broadcast %cst_99 : f32 to vector<8x128xf32>
    %243 = arith.mulf %242, %241 : vector<8x128xf32>
    %244 = math.tanh %243 : vector<8x128xf32>
    %cst_100 = arith.constant 5.000000e-01 : f32
    %245 = vector.broadcast %cst_100 : f32 to vector<8x128xf32>
    %246 = arith.mulf %245, %244 : vector<8x128xf32>
    %cst_101 = arith.constant 5.000000e-01 : f32
    %247 = vector.broadcast %cst_101 : f32 to vector<8x128xf32>
    %248 = arith.addf %246, %247 : vector<8x128xf32>
    %249 = vector.extract_strided_slice %232 {offsets = [0, 256], sizes = [8, 128], strides = [1, 1]} : vector<8x512xf32> to vector<8x128xf32>
    %250 = math.tanh %249 : vector<8x128xf32>
    %251 = vector.extract_strided_slice %232 {offsets = [0, 384], sizes = [8, 128], strides = [1, 1]} : vector<8x512xf32> to vector<8x128xf32>
    %cst_102 = arith.constant 5.000000e-01 : f32
    %252 = vector.broadcast %cst_102 : f32 to vector<8x128xf32>
    %253 = arith.mulf %252, %251 : vector<8x128xf32>
    %254 = math.tanh %253 : vector<8x128xf32>
    %cst_103 = arith.constant 5.000000e-01 : f32
    %255 = vector.broadcast %cst_103 : f32 to vector<8x128xf32>
    %256 = arith.mulf %255, %254 : vector<8x128xf32>
    %cst_104 = arith.constant 5.000000e-01 : f32
    %257 = vector.broadcast %cst_104 : f32 to vector<8x128xf32>
    %258 = arith.addf %256, %257 : vector<8x128xf32>
    %259 = arith.mulf %248, %218 : vector<8x128xf32>
    %260 = arith.mulf %240, %250 : vector<8x128xf32>
    %261 = arith.addf %259, %260 : vector<8x128xf32>
    %262 = math.tanh %261 : vector<8x128xf32>
    %263 = arith.mulf %258, %262 : vector<8x128xf32>
    %264 = arith.truncf %263 : vector<8x128xf32> to vector<8x128xbf16>
    %265 = arith.index_cast %c5_i32 : i32 to index
    %c0_105 = arith.constant 0 : index
    %c0_106 = arith.constant 0 : index
    %266 = vector.load %arg9[%265, %c0_105, %c0_106] : memref<8x8x128xbf16, #tpu.memory_space<vmem>>, vector<1x8x128xbf16>
    %267 = vector.shape_cast %266 : vector<1x8x128xbf16> to vector<8x128xbf16>
    %268 = vector.shape_cast %264 : vector<8x128xbf16> to vector<1x8x128xbf16>
    tpu.vector_store %arg9[%265, %c0_105, %c0_106], %268 {strides = array<i32>} : memref<8x8x128xbf16, #tpu.memory_space<vmem>>, vector<1x8x128xbf16>,
    %c6_i32 = arith.constant 6 : i32
    %269 = arith.index_cast %c6_i32 : i32 to index
    %c0_107 = arith.constant 0 : index
    %c0_108 = arith.constant 0 : index
    %270 = vector.load %arg8[%269, %c0_107, %c0_108] : memref<8x8x512xf32, #tpu.memory_space<vmem>>, vector<1x8x512xf32>
    %271 = vector.shape_cast %270 : vector<1x8x512xf32> to vector<8x512xf32>
    %272 = arith.truncf %263 : vector<8x128xf32> to vector<8x128xbf16>
    %c0_109 = arith.constant 0 : index
    %c0_110 = arith.constant 0 : index
    %273 = vector.load %arg4[%c0_109, %c0_110] : memref<128x512xbf16, #tpu.memory_space<vmem>>, vector<128x512xbf16>
    %cst_111 = arith.constant dense<0.000000e+00> : vector<8x512xf32>
    %274 = tpu.matmul %272, %273, %cst_111 {dimension_numbers = #tpu.dot_dimension_numbers<[1], [0], [0], [1], [0, 0, 1, 1], [], []>} : vector<8x128xbf16>, vector<128x512xbf16>, vector<8x512xf32> -> vector<8x512xf32>
    %275 = arith.addf %271, %274 : vector<8x512xf32>
    %276 = vector.extract_strided_slice %275 {offsets = [0, 0], sizes = [8, 128], strides = [1, 1]} : vector<8x512xf32> to vector<8x128xf32>
    %cst_112 = arith.constant 5.000000e-01 : f32
    %277 = vector.broadcast %cst_112 : f32 to vector<8x128xf32>
    %278 = arith.mulf %277, %276 : vector<8x128xf32>
    %279 = math.tanh %278 : vector<8x128xf32>
    %cst_113 = arith.constant 5.000000e-01 : f32
    %280 = vector.broadcast %cst_113 : f32 to vector<8x128xf32>
    %281 = arith.mulf %280, %279 : vector<8x128xf32>
    %cst_114 = arith.constant 5.000000e-01 : f32
    %282 = vector.broadcast %cst_114 : f32 to vector<8x128xf32>
    %283 = arith.addf %281, %282 : vector<8x128xf32>
    %284 = vector.extract_strided_slice %275 {offsets = [0, 128], sizes = [8, 128], strides = [1, 1]} : vector<8x512xf32> to vector<8x128xf32>
    %cst_115 = arith.constant 5.000000e-01 : f32
    %285 = vector.broadcast %cst_115 : f32 to vector<8x128xf32>
    %286 = arith.mulf %285, %284 : vector<8x128xf32>
    %287 = math.tanh %286 : vector<8x128xf32>
    %cst_116 = arith.constant 5.000000e-01 : f32
    %288 = vector.broadcast %cst_116 : f32 to vector<8x128xf32>
    %289 = arith.mulf %288, %287 : vector<8x128xf32>
    %cst_117 = arith.constant 5.000000e-01 : f32
    %290 = vector.broadcast %cst_117 : f32 to vector<8x128xf32>
    %291 = arith.addf %289, %290 : vector<8x128xf32>
    %292 = vector.extract_strided_slice %275 {offsets = [0, 256], sizes = [8, 128], strides = [1, 1]} : vector<8x512xf32> to vector<8x128xf32>
    %293 = math.tanh %292 : vector<8x128xf32>
    %294 = vector.extract_strided_slice %275 {offsets = [0, 384], sizes = [8, 128], strides = [1, 1]} : vector<8x512xf32> to vector<8x128xf32>
    %cst_118 = arith.constant 5.000000e-01 : f32
    %295 = vector.broadcast %cst_118 : f32 to vector<8x128xf32>
    %296 = arith.mulf %295, %294 : vector<8x128xf32>
    %297 = math.tanh %296 : vector<8x128xf32>
    %cst_119 = arith.constant 5.000000e-01 : f32
    %298 = vector.broadcast %cst_119 : f32 to vector<8x128xf32>
    %299 = arith.mulf %298, %297 : vector<8x128xf32>
    %cst_120 = arith.constant 5.000000e-01 : f32
    %300 = vector.broadcast %cst_120 : f32 to vector<8x128xf32>
    %301 = arith.addf %299, %300 : vector<8x128xf32>
    %302 = arith.mulf %291, %261 : vector<8x128xf32>
    %303 = arith.mulf %283, %293 : vector<8x128xf32>
    %304 = arith.addf %302, %303 : vector<8x128xf32>
    %305 = math.tanh %304 : vector<8x128xf32>
    %306 = arith.mulf %301, %305 : vector<8x128xf32>
    %307 = arith.truncf %306 : vector<8x128xf32> to vector<8x128xbf16>
    %308 = arith.index_cast %c6_i32 : i32 to index
    %c0_121 = arith.constant 0 : index
    %c0_122 = arith.constant 0 : index
    %309 = vector.load %arg9[%308, %c0_121, %c0_122] : memref<8x8x128xbf16, #tpu.memory_space<vmem>>, vector<1x8x128xbf16>
    %310 = vector.shape_cast %309 : vector<1x8x128xbf16> to vector<8x128xbf16>
    %311 = vector.shape_cast %307 : vector<8x128xbf16> to vector<1x8x128xbf16>
    tpu.vector_store %arg9[%308, %c0_121, %c0_122], %311 {strides = array<i32>} : memref<8x8x128xbf16, #tpu.memory_space<vmem>>, vector<1x8x128xbf16>,
    %c7_i32 = arith.constant 7 : i32
    %312 = arith.index_cast %c7_i32 : i32 to index
    %c0_123 = arith.constant 0 : index
    %c0_124 = arith.constant 0 : index
    %313 = vector.load %arg8[%312, %c0_123, %c0_124] : memref<8x8x512xf32, #tpu.memory_space<vmem>>, vector<1x8x512xf32>
    %314 = vector.shape_cast %313 : vector<1x8x512xf32> to vector<8x512xf32>
    %315 = arith.truncf %306 : vector<8x128xf32> to vector<8x128xbf16>
    %c0_125 = arith.constant 0 : index
    %c0_126 = arith.constant 0 : index
    %316 = vector.load %arg4[%c0_125, %c0_126] : memref<128x512xbf16, #tpu.memory_space<vmem>>, vector<128x512xbf16>
    %cst_127 = arith.constant dense<0.000000e+00> : vector<8x512xf32>
    %317 = tpu.matmul %315, %316, %cst_127 {dimension_numbers = #tpu.dot_dimension_numbers<[1], [0], [0], [1], [0, 0, 1, 1], [], []>} : vector<8x128xbf16>, vector<128x512xbf16>, vector<8x512xf32> -> vector<8x512xf32>
    %318 = arith.addf %314, %317 : vector<8x512xf32>
    %319 = vector.extract_strided_slice %318 {offsets = [0, 0], sizes = [8, 128], strides = [1, 1]} : vector<8x512xf32> to vector<8x128xf32>
    %cst_128 = arith.constant 5.000000e-01 : f32
    %320 = vector.broadcast %cst_128 : f32 to vector<8x128xf32>
    %321 = arith.mulf %320, %319 : vector<8x128xf32>
    %322 = math.tanh %321 : vector<8x128xf32>
    %cst_129 = arith.constant 5.000000e-01 : f32
    %323 = vector.broadcast %cst_129 : f32 to vector<8x128xf32>
    %324 = arith.mulf %323, %322 : vector<8x128xf32>
    %cst_130 = arith.constant 5.000000e-01 : f32
    %325 = vector.broadcast %cst_130 : f32 to vector<8x128xf32>
    %326 = arith.addf %324, %325 : vector<8x128xf32>
    %327 = vector.extract_strided_slice %318 {offsets = [0, 128], sizes = [8, 128], strides = [1, 1]} : vector<8x512xf32> to vector<8x128xf32>
    %cst_131 = arith.constant 5.000000e-01 : f32
    %328 = vector.broadcast %cst_131 : f32 to vector<8x128xf32>
    %329 = arith.mulf %328, %327 : vector<8x128xf32>
    %330 = math.tanh %329 : vector<8x128xf32>
    %cst_132 = arith.constant 5.000000e-01 : f32
    %331 = vector.broadcast %cst_132 : f32 to vector<8x128xf32>
    %332 = arith.mulf %331, %330 : vector<8x128xf32>
    %cst_133 = arith.constant 5.000000e-01 : f32
    %333 = vector.broadcast %cst_133 : f32 to vector<8x128xf32>
    %334 = arith.addf %332, %333 : vector<8x128xf32>
    %335 = vector.extract_strided_slice %318 {offsets = [0, 256], sizes = [8, 128], strides = [1, 1]} : vector<8x512xf32> to vector<8x128xf32>
    %336 = math.tanh %335 : vector<8x128xf32>
    %337 = vector.extract_strided_slice %318 {offsets = [0, 384], sizes = [8, 128], strides = [1, 1]} : vector<8x512xf32> to vector<8x128xf32>
    %cst_134 = arith.constant 5.000000e-01 : f32
    %338 = vector.broadcast %cst_134 : f32 to vector<8x128xf32>
    %339 = arith.mulf %338, %337 : vector<8x128xf32>
    %340 = math.tanh %339 : vector<8x128xf32>
    %cst_135 = arith.constant 5.000000e-01 : f32
    %341 = vector.broadcast %cst_135 : f32 to vector<8x128xf32>
    %342 = arith.mulf %341, %340 : vector<8x128xf32>
    %cst_136 = arith.constant 5.000000e-01 : f32
    %343 = vector.broadcast %cst_136 : f32 to vector<8x128xf32>
    %344 = arith.addf %342, %343 : vector<8x128xf32>
    %345 = arith.mulf %334, %304 : vector<8x128xf32>
    %346 = arith.mulf %326, %336 : vector<8x128xf32>
    %347 = arith.addf %345, %346 : vector<8x128xf32>
    %348 = math.tanh %347 : vector<8x128xf32>
    %349 = arith.mulf %344, %348 : vector<8x128xf32>
    %350 = arith.truncf %349 : vector<8x128xf32> to vector<8x128xbf16>
    %351 = arith.index_cast %c7_i32 : i32 to index
    %c0_137 = arith.constant 0 : index
    %c0_138 = arith.constant 0 : index
    %352 = vector.load %arg9[%351, %c0_137, %c0_138] : memref<8x8x128xbf16, #tpu.memory_space<vmem>>, vector<1x8x128xbf16>
    %353 = vector.shape_cast %352 : vector<1x8x128xbf16> to vector<8x128xbf16>
    %354 = vector.shape_cast %350 : vector<8x128xbf16> to vector<1x8x128xbf16>
    tpu.vector_store %arg9[%351, %c0_137, %c0_138], %354 {strides = array<i32>} : memref<8x8x128xbf16, #tpu.memory_space<vmem>>, vector<1x8x128xbf16>,
    %c8_i32 = arith.constant 8 : i32
    %c0_139 = arith.constant 0 : index
    %c0_140 = arith.constant 0 : index
    %c0_141 = arith.constant 0 : index
    %355 = vector.load %arg9[%c0_139, %c0_140, %c0_141] : memref<8x8x128xbf16, #tpu.memory_space<vmem>>, vector<8x8x128xbf16>
    %356 = vector.shape_cast %355 : vector<8x8x128xbf16> to vector<64x128xbf16>
    %c0_142 = arith.constant 0 : index
    %c0_143 = arith.constant 0 : index
    %357 = vector.load %arg5[%c0_142, %c0_143] : memref<128x8xbf16, #tpu.memory_space<vmem>>, vector<128x8xbf16>
    %cst_144 = arith.constant dense<0.000000e+00> : vector<64x8xf32>
    %358 = tpu.matmul %356, %357, %cst_144 {dimension_numbers = #tpu.dot_dimension_numbers<[1], [0], [0], [1], [0, 0, 1, 1], [], []>} : vector<64x128xbf16>, vector<128x8xbf16>, vector<64x8xf32> -> vector<64x8xf32>
    %c0_145 = arith.constant 0 : index
    %c0_146 = arith.constant 0 : index
    %359 = vector.load %arg6[%c0_145, %c0_146] : memref<1x8xf32, #tpu.memory_space<vmem>>, vector<1x8xf32>
    %360 = vector.broadcast %359 : vector<1x8xf32> to vector<64x8xf32>
    %361 = arith.addf %358, %360 : vector<64x8xf32>
    %362 = vector.shape_cast %361 : vector<64x8xf32> to vector<8x8x8xf32>
    %c0_147 = arith.constant 0 : index
    %c0_148 = arith.constant 0 : index
    %c0_149 = arith.constant 0 : index
    %363 = vector.load %arg7[%c0_147, %c0_148, %c0_149] : memref<8x8x8xf32, #tpu.memory_space<vmem>>, vector<8x8x8xf32>
    tpu.vector_store %arg7[%c0_147, %c0_148, %c0_149], %362 {strides = array<i32>} : memref<8x8x8xf32, #tpu.memory_space<vmem>>, vector<8x8x8xf32>,
    return
  }
  func.func @transform_0(%arg0: i32) -> (i32, i32, i32) {
    %c0_i32 = arith.constant 0 : i32
    %c0_i32_0 = arith.constant 0 : i32
    %c0_i32_1 = arith.constant 0 : i32
    return %c0_i32, %arg0, %c0_i32_0 : i32, i32, i32
  }
  func.func @transform_1(%arg0: i32) -> (i32, i32) {
    %c0_i32 = arith.constant 0 : i32
    %c0_i32_0 = arith.constant 0 : i32
    %c0_i32_1 = arith.constant 0 : i32
    return %c0_i32, %c0_i32_0 : i32, i32
  }
  func.func @transform_2(%arg0: i32) -> (i32, i32) {
    %c0_i32 = arith.constant 0 : i32
    %c0_i32_0 = arith.constant 0 : i32
    %c0_i32_1 = arith.constant 0 : i32
    return %c0_i32, %c0_i32_0 : i32, i32
  }
  func.func @transform_3(%arg0: i32) -> (i32, i32) {
    %c0_i32 = arith.constant 0 : i32
    %c0_i32_0 = arith.constant 0 : i32
    %c0_i32_1 = arith.constant 0 : i32
    return %c0_i32, %c0_i32_0 : i32, i32
  }
  func.func @transform_4(%arg0: i32) -> (i32, i32) {
    %c0_i32 = arith.constant 0 : i32
    %c0_i32_0 = arith.constant 0 : i32
    %c0_i32_1 = arith.constant 0 : i32
    return %c0_i32, %c0_i32_0 : i32, i32
  }
  func.func @transform_5(%arg0: i32) -> (i32, i32) {
    %c0_i32 = arith.constant 0 : i32
    %c0_i32_0 = arith.constant 0 : i32
    %c0_i32_1 = arith.constant 0 : i32
    return %c0_i32, %c0_i32_0 : i32, i32
  }
  func.func @transform_6(%arg0: i32) -> (i32, i32, i32) {
    %c0_i32 = arith.constant 0 : i32
    %c0_i32_0 = arith.constant 0 : i32
    %c0_i32_1 = arith.constant 0 : i32
    return %c0_i32, %arg0, %c0_i32_0 : i32, i32, i32
  }
}

</mosaic_0001>

<llo_original>
// kernel: tpu_custom_call.1
$region0: #{tpu_custom_call.1}
  #allocation0 [shape = 'u32[]', space=smem, size = 0x4, offset = 0x4, fixed_abs, tag = 'smem constant byte address 0x4 - core index']
  #allocation1 [shape = 'u32[144,128]{1,0:T(1,128)}', space=vmem, size = 0x12000, scoped, tag = 'internal scratch']
  #allocation2 [shape = 'f32[8,8,512]{2,1,0:T(8,128)}', space=vmem, size = 0x20000, scoped, tag = 'scratch operand']
  #allocation3 [shape = 'bf16[8,8,128]{2,1,0:T(8,128)(2,1)}', space=vmem, size = 0x4000, scoped, tag = 'scratch operand']
  %s0 = inlined_call_operand.vmem [shape: bf16[8,8,12], index: 0, kind: input, shape index: {}]
  %s1 = inlined_call_operand.vmem [shape: bf16[12,512], index: 1, kind: input, shape index: {}]
  %s2 = inlined_call_operand.vmem [shape: f32[1,512], index: 2, kind: input, shape index: {}]
  %s3 = inlined_call_operand.hbm [shape: bf16[128,512], index: 3, kind: input, shape index: {}]
  %s4 = inlined_call_operand.vmem [shape: bf16[128,8], index: 4, kind: input, shape index: {}]
  %s5 = inlined_call_operand.vmem [shape: f32[1,8], index: 5, kind: input, shape index: {}]
  %s6 = inlined_call_operand.hbm [shape: f32[8,8,8], index: 6, kind: output, shape index: {}]
  %s7 = sld [smem:[#allocation0]]
  $region38: #{tpu_custom_call.1} parent=0
    _
  %s9 = ssub.s32 1, %s7
  %s10 = scalar_select 0, %s9, %s7
  $region1: #{tpu_custom_call.1} parent=0
    #allocation4 [shape = 'u8[131072]{0}', space=vmem, size = 0x20000, scoped, tag = 'input window, operand 3, single buffered']
    #allocation5 [shape = 's32[1]{0}', space=sflag, size = 0x4, scoped, tag = 'scoped memory for tpu_custom_call.1']
    #allocation6 [shape = 's32[1]{0}', space=sflag, size = 0x4, scoped, tag = 'scoped memory for tpu_custom_call.1']
    #allocation7 [shape = 'u8[32768]{0}', space=vmem, size = 0x8000, scoped, tag = 'output window, operand 0, single buffered']
    %11 = vsyncpa [#allocation5], 0
    %12 = vsyncpa [#allocation6], 0
    // Predicated region
    $region2: #{tpu_custom_call.1} parent=1 // pred_check
      _
    $region3: #{tpu_custom_call.1} parent=1 // pred_check_branch
      %14 = sbr.rel (0) target = $region5
    $region4: #{tpu_custom_call.1} parent=1 // pred_region
      _
    $region5: #{tpu_custom_call.1} parent=1 // pred_fallthru
      _
    // Predicated region
    $region6: #{tpu_custom_call.1} parent=1 // pred_check
      _
    $region7: #{tpu_custom_call.1} parent=1 // pred_check_branch
      %16 = sbr.rel (0) target = $region9
    $region8: #{tpu_custom_call.1} parent=1 // pred_region
      _
    $region9: #{tpu_custom_call.1} parent=1 // pred_fallthru
      _
    // Predicated region
    $region10: #{tpu_custom_call.1} parent=1 // pred_check
      _
    $region11: #{tpu_custom_call.1} parent=1 // pred_check_branch
      %18 = sbr.rel (0) target = $region13
    $region12: #{tpu_custom_call.1} parent=1 // pred_region
      _
    $region13: #{tpu_custom_call.1} parent=1 // pred_fallthru
      _
    // Predicated region
    $region14: #{tpu_custom_call.1} parent=1 // pred_check
      _
    $region15: #{tpu_custom_call.1} parent=1 // pred_check_branch
      %20 = sbr.rel (0) target = $region17
    $region16: #{tpu_custom_call.1} parent=1 // pred_region
      %s22 = ssub.s32 4096, 4096
      %23 = vsyncadd [#allocation5], %s22
      %s24 = sshll.u32 [#allocation4], 4
      %s25 = int_to_ptr.vmem [resolvable:$true] %s24
      %30 = dma.hbm_to_vmem [thread:$0]  %s3, 4096, %s25, [#allocation5], 256, 256, 16
    $region17: #{tpu_custom_call.1} parent=1 // pred_fallthru
      _
    // Predicated region
    $region18: #{tpu_custom_call.1} parent=1 // pred_check
      _
    $region19: #{tpu_custom_call.1} parent=1 // pred_check_branch
      %32 = sbr.rel (0) target = $region21
    $region20: #{tpu_custom_call.1} parent=1 // pred_region
      _
    $region21: #{tpu_custom_call.1} parent=1 // pred_fallthru
      _
    // Predicated region
    $region22: #{tpu_custom_call.1} parent=1 // pred_check
      _
    $region23: #{tpu_custom_call.1} parent=1 // pred_check_branch
      %34 = sbr.rel (0) target = $region25
    $region24: #{tpu_custom_call.1} parent=1 // pred_region
      _
    $region25: #{tpu_custom_call.1} parent=1 // pred_fallthru
      _
    // Predicated region
    $region26: #{tpu_custom_call.1} parent=1 // pred_check
      _
    $region27: #{tpu_custom_call.1} parent=1 // pred_check_branch
      %36 = sbr.rel (0) target = $region29
    $region28: #{tpu_custom_call.1} parent=1 // pred_region
      %37 = dma.done [#allocation5], 4096
    $region29: #{tpu_custom_call.1} parent=1 // pred_fallthru
      _
    %v39 = vld [vmem:[%s0] sm:$0xf]
    %v40 = vld [vmem:[%s0 + $0x4] sm:$0xf]
    %v41 = vld [vmem:[%s0 + $0x8] sm:$0xf]
    %v42 = vld [vmem:[%s0 + $0xc] sm:$0xf]
    %v43 = vld [vmem:[%s0 + $0x10] sm:$0xf]
    %v44 = vld [vmem:[%s0 + $0x14] sm:$0xf]
    %v45 = vld [vmem:[%s0 + $0x18] sm:$0xf]
    %v46 = vld [vmem:[%s0 + $0x1c] sm:$0xf]
    %v47 = vld [vmem:[%s1] sm:$0xff]
    %v48 = vld [vmem:[%s1 + $0x8] sm:$0xff]
    %v49 = vld [vmem:[%s1 + $0x10] sm:$0x33]
    %v50 = vld [vmem:[%s1 + $0x18] sm:$0x33]
    %v51 = vld [vmem:[%s2] sm:$0xf]
    %v53 = vlaneseq
    %v54 = vshrl.u32 %v53, 7
    %v55 = vsub.s32 0, %v54
    %v56 = vrot.slane %v51, %v55
    %v57 = vlaneseq
    %v58 = vshrl.u32 %v57, 7
    %v59 = vsub.s32 1, %v58
    %v60 = vrot.slane %v51, %v59
    %v61 = vlaneseq
    %v62 = vshrl.u32 %v61, 7
    %v63 = vsub.s32 2, %v62
    %v64 = vrot.slane %v51, %v63
    %v65 = vlaneseq
    %v66 = vshrl.u32 %v65, 7
    %v67 = vsub.s32 3, %v66
    %v68 = vrot.slane %v51, %v67
    %v81 = vunpack.c.l.b16 %v39
    %v82 = vunpack.c.l.b16 %v40
    %v83 = vunpack.c.l.b16 %v41
    %v84 = vunpack.c.l.b16 %v42
    %v85 = vunpack.c.l.b16 %v43
    %v86 = vunpack.c.l.b16 %v44
    %v87 = vunpack.c.l.b16 %v45
    %v88 = vunpack.c.l.b16 %v46
    %v89 = vpack.c.b16 %v82, %v81
    %v90 = vpack.c.b16 %v84, %v83
    %v91 = vpack.c.b16 %v86, %v85
    %v92 = vpack.c.b16 %v88, %v87
    %v97 = vunpack.c.l.b16 %v47
    %v98 = vunpack.c.h.b16 %v47
    %v99 = vunpack.c.l.b16 %v48
    %v100 = vunpack.c.h.b16 %v48
    %v101 = vunpack.c.l.b16 %v49
    %v102 = vunpack.c.h.b16 %v49
    %v103 = vunpack.c.l.b16 %v50
    %v104 = vunpack.c.h.b16 %v50
    %v105 = vpack.c.b16 %v101, %v97
    %v106 = vpack.c.b16 %v102, %v98
    %v107 = vpack.c.b16 %v103, %v99
    %v108 = vpack.c.b16 %v104, %v100
    %vm109 = vcmask 97280
    %v111 = vsel %vm109, %v89, 0
    %v114 = vsel %vm109, %v90, 0
    %v117 = vsel %vm109, %v91, 0
    %v120 = vsel %vm109, %v92, 0
    %vm122 = vcmask 1045504
    %v124 = vsel %vm122, %v105, 0
    %v127 = vsel %vm122, %v106, 0
    %v130 = vsel %vm122, %v107, 0
    %v133 = vsel %vm122, %v108, 0
    %135 = vmatprep.subr.bf16.mxu0 %v127
    %136 = vmatpush1.bf16.msra.mxu0 %v124
    %137 = vmatprep.subr.bf16.mxu0 0
    %138 = vmatpush1.bf16.msra.mxu0 0
    %139 = vmatprep.subr.bf16.mxu0 0
    %140 = vmatpush1.bf16.msra.mxu0 0
    %141 = vmatprep.subr.bf16.mxu0 0
    %142 = vmatpush1.bf16.msra.mxu0 0
    %143 = vmatprep.subr.bf16.mxu0 0
    %144 = vmatpush1.bf16.msra.mxu0 0
    %145 = vmatprep.subr.bf16.mxu0 0
    %146 = vmatpush1.bf16.msra.mxu0 0
    %147 = vmatprep.subr.bf16.mxu0 0
    %148 = vmatpush1.bf16.msra.mxu0 0
    %149 = vmatprep.subr.bf16.mxu0 0
    %150 = vmatpush1.bf16.msra.mxu0 0
    %151 = vmatprep.subr.bf16.mxu0 0
    %152 = vmatpush1.bf16.msra.mxu0 0
    %153 = vmatprep.subr.bf16.mxu0 0
    %154 = vmatpush1.bf16.msra.mxu0 0
    %155 = vmatprep.subr.bf16.mxu0 0
    %156 = vmatpush1.bf16.msra.mxu0 0
    %157 = vmatprep.subr.bf16.mxu0 0
    %158 = vmatpush1.bf16.msra.mxu0 0
    %159 = vmatprep.subr.bf16.mxu0 0
    %160 = vmatpush1.bf16.msra.mxu0 0
    %161 = vmatprep.subr.bf16.mxu0 0
    %162 = vmatpush1.bf16.msra.mxu0 0
    %163 = vmatprep.subr.bf16.mxu0 0
    %164 = vmatpush1.bf16.msra.mxu0 0
    %165 = vmatprep.subr.bf16.mxu0 0
    %166 = vmatpush1.bf16.msra.mxu0 0
    %167 = vmatprep.mubr.bf16.mxu0 0
    %168 = vmatmul.mubr.bf16.gmra.mrb[0].mxu0 %v111
    %v169 = vpop.f32.mrb[0].mxu0
    %v170 = vadd.f32 %v56, %v169
    %v171 = vpop.f32.mrb[0].mxu0
    %v172 = vadd.f32 %v60, %v171
    %v173 = vpop.f32.mrb[0].mxu0
    %v174 = vadd.f32 %v56, %v173
    %v175 = vpop.f32.mrb[0].mxu0
    %v176 = vadd.f32 %v60, %v175
    %177 = vmatprep.mubr.bf16.mxu0 0
    %178 = vmatmul.mubr.bf16.gmra.mrb[0].mxu0 %v114
    %v179 = vpop.f32.mrb[0].mxu0
    %v180 = vadd.f32 %v56, %v179
    %v181 = vpop.f32.mrb[0].mxu0
    %v182 = vadd.f32 %v60, %v181
    %v183 = vpop.f32.mrb[0].mxu0
    %v184 = vadd.f32 %v56, %v183
    %v185 = vpop.f32.mrb[0].mxu0
    %v186 = vadd.f32 %v60, %v185
    %187 = vmatprep.mubr.bf16.mxu0 0
    %188 = vmatmul.mubr.bf16.gmra.mrb[0].mxu0 %v117
    %v189 = vpop.f32.mrb[0].mxu0
    %v190 = vadd.f32 %v56, %v189
    %v191 = vpop.f32.mrb[0].mxu0
    %v192 = vadd.f32 %v60, %v191
    %v193 = vpop.f32.mrb[0].mxu0
    %v194 = vadd.f32 %v56, %v193
    %v195 = vpop.f32.mrb[0].mxu0
    %v196 = vadd.f32 %v60, %v195
    %197 = vmatprep.mubr.bf16.mxu0 0
    %198 = vmatmul.mubr.bf16.gmra.mrb[0].mxu0 %v120
    %v199 = vpop.f32.mrb[0].mxu0
    %v200 = vadd.f32 %v56, %v199
    %v201 = vpop.f32.mrb[0].mxu0
    %v202 = vadd.f32 %v60, %v201
    %v203 = vpop.f32.mrb[0].mxu0
    %v204 = vadd.f32 %v56, %v203
    %v205 = vpop.f32.mrb[0].mxu0
    %v206 = vadd.f32 %v60, %v205
    %207 = vdwg.mxu0
    %208 = vmatprep.subr.bf16.mxu0 %v133
    %209 = vmatpush1.bf16.msra.mxu0 %v130
    %210 = vmatprep.subr.bf16.mxu0 0
    %211 = vmatpush1.bf16.msra.mxu0 0
    %212 = vmatprep.subr.bf16.mxu0 0
    %213 = vmatpush1.bf16.msra.mxu0 0
    %214 = vmatprep.subr.bf16.mxu0 0
    %215 = vmatpush1.bf16.msra.mxu0 0
    %216 = vmatprep.subr.bf16.mxu0 0
    %217 = vmatpush1.bf16.msra.mxu0 0
    %218 = vmatprep.subr.bf16.mxu0 0
    %219 = vmatpush1.bf16.msra.mxu0 0
    %220 = vmatprep.subr.bf16.mxu0 0
    %221 = vmatpush1.bf16.msra.mxu0 0
    %222 = vmatprep.subr.bf16.mxu0 0
    %223 = vmatpush1.bf16.msra.mxu0 0
    %224 = vmatprep.subr.bf16.mxu0 0
    %225 = vmatpush1.bf16.msra.mxu0 0
    %226 = vmatprep.subr.bf16.mxu0 0
    %227 = vmatpush1.bf16.msra.mxu0 0
    %228 = vmatprep.subr.bf16.mxu0 0
    %229 = vmatpush1.bf16.msra.mxu0 0
    %230 = vmatprep.subr.bf16.mxu0 0
    %231 = vmatpush1.bf16.msra.mxu0 0
    %232 = vmatprep.subr.bf16.mxu0 0
    %233 = vmatpush1.bf16.msra.mxu0 0
    %234 = vmatprep.subr.bf16.mxu0 0
    %235 = vmatpush1.bf16.msra.mxu0 0
    %236 = vmatprep.subr.bf16.mxu0 0
    %237 = vmatpush1.bf16.msra.mxu0 0
    %238 = vmatprep.subr.bf16.mxu0 0
    %239 = vmatpush1.bf16.msra.mxu0 0
    %240 = vmatprep.mubr.bf16.mxu0 0
    %241 = vmatmul.mubr.bf16.gmra.mrb[0].mxu0 %v111
    %v242 = vpop.f32.mrb[0].mxu0
    %v243 = vadd.f32 %v64, %v242
    %v244 = vpop.f32.mrb[0].mxu0
    %v245 = vadd.f32 %v68, %v244
    %v246 = vpop.f32.mrb[0].mxu0
    %v247 = vadd.f32 %v64, %v246
    %v248 = vpop.f32.mrb[0].mxu0
    %v249 = vadd.f32 %v68, %v248
    %250 = vmatprep.mubr.bf16.mxu0 0
    %251 = vmatmul.mubr.bf16.gmra.mrb[0].mxu0 %v114
    %v252 = vpop.f32.mrb[0].mxu0
    %v253 = vadd.f32 %v64, %v252
    %v254 = vpop.f32.mrb[0].mxu0
    %v255 = vadd.f32 %v68, %v254
    %v256 = vpop.f32.mrb[0].mxu0
    %v257 = vadd.f32 %v64, %v256
    %v258 = vpop.f32.mrb[0].mxu0
    %v259 = vadd.f32 %v68, %v258
    %260 = vmatprep.mubr.bf16.mxu0 0
    %261 = vmatmul.mubr.bf16.gmra.mrb[0].mxu0 %v117
    %v262 = vpop.f32.mrb[0].mxu0
    %v263 = vadd.f32 %v64, %v262
    %v264 = vpop.f32.mrb[0].mxu0
    %v265 = vadd.f32 %v68, %v264
    %v266 = vpop.f32.mrb[0].mxu0
    %v267 = vadd.f32 %v64, %v266
    %v268 = vpop.f32.mrb[0].mxu0
    %v269 = vadd.f32 %v68, %v268
    %270 = vmatprep.mubr.bf16.mxu0 0
    %271 = vmatmul.mubr.bf16.gmra.mrb[0].mxu0 %v120
    %v272 = vpop.f32.mrb[0].mxu0
    %v273 = vadd.f32 %v64, %v272
    %v274 = vpop.f32.mrb[0].mxu0
    %v275 = vadd.f32 %v68, %v274
    %v276 = vpop.f32.mrb[0].mxu0
    %v277 = vadd.f32 %v64, %v276
    %v278 = vpop.f32.mrb[0].mxu0
    %v279 = vadd.f32 %v68, %v278
    %280 = vdwg.mxu0
    %281 = vst [vmem:[#allocation2] sm:$0xff] %v170
    %282 = vst [vmem:[#allocation2 + $0x8] sm:$0xff] %v172
    %283 = vst [vmem:[#allocation2 + $0x10] sm:$0xff] %v243
    %284 = vst [vmem:[#allocation2 + $0x18] sm:$0xff] %v245
    %285 = vst [vmem:[#allocation2 + $0x20] sm:$0xff] %v174
    %286 = vst [vmem:[#allocation2 + $0x28] sm:$0xff] %v176
    %287 = vst [vmem:[#allocation2 + $0x30] sm:$0xff] %v247
    %288 = vst [vmem:[#allocation2 + $0x38] sm:$0xff] %v249
    %289 = vst [vmem:[#allocation2 + $0x40] sm:$0xff] %v180
    %290 = vst [vmem:[#allocation2 + $0x48] sm:$0xff] %v182
    %291 = vst [vmem:[#allocation2 + $0x50] sm:$0xff] %v253
    %292 = vst [vmem:[#allocation2 + $0x58] sm:$0xff] %v255
    %293 = vst [vmem:[#allocation2 + $0x60] sm:$0xff] %v184
    %294 = vst [vmem:[#allocation2 + $0x68] sm:$0xff] %v186
    %295 = vst [vmem:[#allocation2 + $0x70] sm:$0xff] %v257
    %296 = vst [vmem:[#allocation2 + $0x78] sm:$0xff] %v259
    %297 = vst [vmem:[#allocation2 + $0x80] sm:$0xff] %v190
    %298 = vst [vmem:[#allocation2 + $0x88] sm:$0xff] %v192
    %299 = vst [vmem:[#allocation2 + $0x90] sm:$0xff] %v263
    %300 = vst [vmem:[#allocation2 + $0x98] sm:$0xff] %v265
    %301 = vst [vmem:[#allocation2 + $0xa0] sm:$0xff] %v194
    %302 = vst [vmem:[#allocation2 + $0xa8] sm:$0xff] %v196
    %303 = vst [vmem:[#allocation2 + $0xb0] sm:$0xff] %v267
    %304 = vst [vmem:[#allocation2 + $0xb8] sm:$0xff] %v269
    %305 = vst [vmem:[#allocation2 + $0xc0] sm:$0xff] %v200
    %306 = vst [vmem:[#allocation2 + $0xc8] sm:$0xff] %v202
    %307 = vst [vmem:[#allocation2 + $0xd0] sm:$0xff] %v273
    %308 = vst [vmem:[#allocation2 + $0xd8] sm:$0xff] %v275
    %309 = vst [vmem:[#allocation2 + $0xe0] sm:$0xff] %v204
    %310 = vst [vmem:[#allocation2 + $0xe8] sm:$0xff] %v206
    %311 = vst [vmem:[#allocation2 + $0xf0] sm:$0xff] %v277
    %312 = vst [vmem:[#allocation2 + $0xf8] sm:$0xff] %v279
    %v313 = vld [vmem:[#allocation2] sm:$0xff]
    %v314 = vld [vmem:[#allocation2 + $0x8] sm:$0xff]
    %v315 = vld [vmem:[#allocation2 + $0x10] sm:$0xff]
    %v316 = vld [vmem:[#allocation2 + $0x18] sm:$0xff]
    %v317 = vld [vmem:[#allocation4] sm:$0xff]
    %v318 = vld [vmem:[#allocation4 + $0x8] sm:$0xff]
    %v319 = vld [vmem:[#allocation4 + $0x10] sm:$0xff]
    %v320 = vld [vmem:[#allocation4 + $0x18] sm:$0xff]
    %v321 = vld [vmem:[#allocation4 + $0x20] sm:$0xff]
    %v322 = vld [vmem:[#allocation4 + $0x28] sm:$0xff]
    %v323 = vld [vmem:[#allocation4 + $0x30] sm:$0xff]
    %v324 = vld [vmem:[#allocation4 + $0x38] sm:$0xff]
    %v325 = vld [vmem:[#allocation4 + $0x40] sm:$0xff]
    %v326 = vld [vmem:[#allocation4 + $0x48] sm:$0xff]
    %v327 = vld [vmem:[#allocation4 + $0x50] sm:$0xff]
    %v328 = vld [vmem:[#allocation4 + $0x58] sm:$0xff]
    %v329 = vld [vmem:[#allocation4 + $0x60] sm:$0xff]
    %v330 = vld [vmem:[#allocation4 + $0x68] sm:$0xff]
    %v331 = vld [vmem:[#allocation4 + $0x70] sm:$0xff]
    %v332 = vld [vmem:[#allocation4 + $0x78] sm:$0xff]
    %v333 = vld [vmem:[#allocation4 + $0x80] sm:$0xff]
    %v334 = vld [vmem:[#allocation4 + $0x88] sm:$0xff]
    %v335 = vld [vmem:[#allocation4 + $0x90] sm:$0xff]
    %v336 = vld [vmem:[#allocation4 + $0x98] sm:$0xff]
    %v337 = vld [vmem:[#allocation4 + $0xa0] sm:$0xff]
    %v338 = vld [vmem:[#allocation4 + $0xa8] sm:$0xff]
    %v339 = vld [vmem:[#allocation4 + $0xb0] sm:$0xff]
    %v340 = vld [vmem:[#allocation4 + $0xb8] sm:$0xff]
    %v341 = vld [vmem:[#allocation4 + $0xc0] sm:$0xff]
    %v342 = vld [vmem:[#allocation4 + $0xc8] sm:$0xff]
    %v343 = vld [vmem:[#allocation4 + $0xd0] sm:$0xff]
    %v344 = vld [vmem:[#allocation4 + $0xd8] sm:$0xff]
    %v345 = vld [vmem:[#allocation4 + $0xe0] sm:$0xff]
    %v346 = vld [vmem:[#allocation4 + $0xe8] sm:$0xff]
    %v347 = vld [vmem:[#allocation4 + $0xf0] sm:$0xff]
    %v348 = vld [vmem:[#allocation4 + $0xf8] sm:$0xff]
    %v381 = vunpack.c.l.b16 %v317
    %v382 = vunpack.c.h.b16 %v317
    %v383 = vunpack.c.l.b16 %v318
    %v384 = vunpack.c.h.b16 %v318
    %v385 = vunpack.c.l.b16 %v319
    %v386 = vunpack.c.h.b16 %v319
    %v387 = vunpack.c.l.b16 %v320
    %v388 = vunpack.c.h.b16 %v320
    %v389 = vunpack.c.l.b16 %v321
    %v390 = vunpack.c.h.b16 %v321
    %v391 = vunpack.c.l.b16 %v322
    %v392 = vunpack.c.h.b16 %v322
    %v393 = vunpack.c.l.b16 %v323
    %v394 = vunpack.c.h.b16 %v323
    %v395 = vunpack.c.l.b16 %v324
    %v396 = vunpack.c.h.b16 %v324
    %v397 = vunpack.c.l.b16 %v325
    %v398 = vunpack.c.h.b16 %v325
    %v399 = vunpack.c.l.b16 %v326
    %v400 = vunpack.c.h.b16 %v326
    %v401 = vunpack.c.l.b16 %v327
    %v402 = vunpack.c.h.b16 %v327
    %v403 = vunpack.c.l.b16 %v328
    %v404 = vunpack.c.h.b16 %v328
    %v405 = vunpack.c.l.b16 %v329
    %v406 = vunpack.c.h.b16 %v329
    %v407 = vunpack.c.l.b16 %v330
    %v408 = vunpack.c.h.b16 %v330
    %v409 = vunpack.c.l.b16 %v331
    %v410 = vunpack.c.h.b16 %v331
    %v411 = vunpack.c.l.b16 %v332
    %v412 = vunpack.c.h.b16 %v332
    %v413 = vunpack.c.l.b16 %v333
    %v414 = vunpack.c.h.b16 %v333
    %v415 = vunpack.c.l.b16 %v334
    %v416 = vunpack.c.h.b16 %v334
    %v417 = vunpack.c.l.b16 %v335
    %v418 = vunpack.c.h.b16 %v335
    %v419 = vunpack.c.l.b16 %v336
    %v420 = vunpack.c.h.b16 %v336
    %v421 = vunpack.c.l.b16 %v337
    %v422 = vunpack.c.h.b16 %v337
    %v423 = vunpack.c.l.b16 %v338
    %v424 = vunpack.c.h.b16 %v338
    %v425 = vunpack.c.l.b16 %v339
    %v426 = vunpack.c.h.b16 %v339
    %v427 = vunpack.c.l.b16 %v340
    %v428 = vunpack.c.h.b16 %v340
    %v429 = vunpack.c.l.b16 %v341
    %v430 = vunpack.c.h.b16 %v341
    %v431 = vunpack.c.l.b16 %v342
    %v432 = vunpack.c.h.b16 %v342
    %v433 = vunpack.c.l.b16 %v343
    %v434 = vunpack.c.h.b16 %v343
    %v435 = vunpack.c.l.b16 %v344
    %v436 = vunpack.c.h.b16 %v344
    %v437 = vunpack.c.l.b16 %v345
    %v438 = vunpack.c.h.b16 %v345
    %v439 = vunpack.c.l.b16 %v346
    %v440 = vunpack.c.h.b16 %v346
    %v441 = vunpack.c.l.b16 %v347
    %v442 = vunpack.c.h.b16 %v347
    %v443 = vunpack.c.l.b16 %v348
    %v444 = vunpack.c.h.b16 %v348
    %v445 = vpack.c.b16 %v385, %v381
    %v446 = vpack.c.b16 %v386, %v382
    %v447 = vpack.c.b16 %v387, %v383
    %v448 = vpack.c.b16 %v388, %v384
    %v449 = vpack.c.b16 %v393, %v389
    %v450 = vpack.c.b16 %v394, %v390
    %v451 = vpack.c.b16 %v395, %v391
    %v452 = vpack.c.b16 %v396, %v392
    %v453 = vpack.c.b16 %v401, %v397
    %v454 = vpack.c.b16 %v402, %v398
    %v455 = vpack.c.b16 %v403, %v399
    %v456 = vpack.c.b16 %v404, %v400
    %v457 = vpack.c.b16 %v409, %v405
    %v458 = vpack.c.b16 %v410, %v406
    %v459 = vpack.c.b16 %v411, %v407
    %v460 = vpack.c.b16 %v412, %v408
    %v461 = vpack.c.b16 %v417, %v413
    %v462 = vpack.c.b16 %v418, %v414
    %v463 = vpack.c.b16 %v419, %v415
    %v464 = vpack.c.b16 %v420, %v416
    %v465 = vpack.c.b16 %v425, %v421
    %v466 = vpack.c.b16 %v426, %v422
    %v467 = vpack.c.b16 %v427, %v423
    %v468 = vpack.c.b16 %v428, %v424
    %v469 = vpack.c.b16 %v433, %v429
    %v470 = vpack.c.b16 %v434, %v430
    %v471 = vpack.c.b16 %v435, %v431
    %v472 = vpack.c.b16 %v436, %v432
    %v473 = vpack.c.b16 %v441, %v437
    %v474 = vpack.c.b16 %v442, %v438
    %v475 = vpack.c.b16 %v443, %v439
    %v476 = vpack.c.b16 %v444, %v440
    %509 = vmatprep.subr.bf16.mxu0 %v446
    %510 = vmatpush1.bf16.msra.mxu0 %v445
    %511 = vmatprep.subr.bf16.mxu0 %v450
    %512 = vmatpush1.bf16.msra.mxu0 %v449
    %513 = vmatprep.subr.bf16.mxu0 %v454
    %514 = vmatpush1.bf16.msra.mxu0 %v453
    %515 = vmatprep.subr.bf16.mxu0 %v458
    %516 = vmatpush1.bf16.msra.mxu0 %v457
    %517 = vmatprep.subr.bf16.mxu0 %v462
    %518 = vmatpush1.bf16.msra.mxu0 %v461
    %519 = vmatprep.subr.bf16.mxu0 %v466
    %520 = vmatpush1.bf16.msra.mxu0 %v465
    %521 = vmatprep.subr.bf16.mxu0 %v470
    %522 = vmatpush1.bf16.msra.mxu0 %v469
    %523 = vmatprep.subr.bf16.mxu0 %v474
    %524 = vmatpush1.bf16.msra.mxu0 %v473
    %525 = vmatprep.subr.bf16.mxu0 0
    %526 = vmatpush1.bf16.msra.mxu0 0
    %527 = vmatprep.subr.bf16.mxu0 0
    %528 = vmatpush1.bf16.msra.mxu0 0
    %529 = vmatprep.subr.bf16.mxu0 0
    %530 = vmatpush1.bf16.msra.mxu0 0
    %531 = vmatprep.subr.bf16.mxu0 0
    %532 = vmatpush1.bf16.msra.mxu0 0
    %533 = vmatprep.subr.bf16.mxu0 0
    %534 = vmatpush1.bf16.msra.mxu0 0
    %535 = vmatprep.subr.bf16.mxu0 0
    %536 = vmatpush1.bf16.msra.mxu0 0
    %537 = vmatprep.subr.bf16.mxu0 0
    %538 = vmatpush1.bf16.msra.mxu0 0
    %539 = vmatprep.subr.bf16.mxu0 0
    %540 = vmatpush1.bf16.msra.mxu0 0
    %541 = vmatprep.mubr.bf16.mxu0 0
    %542 = vmatmul.mubr.bf16.gmra.mrb[0].mxu0 0
    %v543 = vpop.f32.mrb[0].mxu0
    %v544 = vadd.f32 0.0, %v543
    %v545 = vpop.f32.mrb[0].mxu0
    %v546 = vadd.f32 0.0, %v545
    %v547 = vpop.f32.mrb[0].mxu0
    %v548 = vpop.f32.mrb[0].mxu0
    %549 = vdwg.mxu0
    %550 = vmatprep.subr.bf16.mxu0 %v448
    %551 = vmatpush1.bf16.msra.mxu0 %v447
    %552 = vmatprep.subr.bf16.mxu0 %v452
    %553 = vmatpush1.bf16.msra.mxu0 %v451
    %554 = vmatprep.subr.bf16.mxu0 %v456
    %555 = vmatpush1.bf16.msra.mxu0 %v455
    %556 = vmatprep.subr.bf16.mxu0 %v460
    %557 = vmatpush1.bf16.msra.mxu0 %v459
    %558 = vmatprep.subr.bf16.mxu0 %v464
    %559 = vmatpush1.bf16.msra.mxu0 %v463
    %560 = vmatprep.subr.bf16.mxu0 %v468
    %561 = vmatpush1.bf16.msra.mxu0 %v467
    %562 = vmatprep.subr.bf16.mxu0 %v472
    %563 = vmatpush1.bf16.msra.mxu0 %v471
    %564 = vmatprep.subr.bf16.mxu0 %v476
    %565 = vmatpush1.bf16.msra.mxu0 %v475
    %566 = vmatprep.subr.bf16.mxu0 0
    %567 = vmatpush1.bf16.msra.mxu0 0
    %568 = vmatprep.subr.bf16.mxu0 0
    %569 = vmatpush1.bf16.msra.mxu0 0
    %570 = vmatprep.subr.bf16.mxu0 0
    %571 = vmatpush1.bf16.msra.mxu0 0
    %572 = vmatprep.subr.bf16.mxu0 0
    %573 = vmatpush1.bf16.msra.mxu0 0
    %574 = vmatprep.subr.bf16.mxu0 0
    %575 = vmatpush1.bf16.msra.mxu0 0
    %576 = vmatprep.subr.bf16.mxu0 0
    %577 = vmatpush1.bf16.msra.mxu0 0
    %578 = vmatprep.subr.bf16.mxu0 0
    %579 = vmatpush1.bf16.msra.mxu0 0
    %580 = vmatprep.subr.bf16.mxu0 0
    %581 = vmatpush1.bf16.msra.mxu0 0
    %582 = vmatprep.mubr.bf16.mxu0 0
    %583 = vmatmul.mubr.bf16.gmra.mrb[0].mxu0 0
    %v584 = vpop.f32.mrb[0].mxu0
    %v585 = vadd.f32 0.0, %v584
    %v586 = vpop.f32.mrb[0].mxu0
    %v587 = vadd.f32 0.0, %v586
    %v588 = vpop.f32.mrb[0].mxu0
    %v589 = vpop.f32.mrb[0].mxu0
    %590 = vdwg.mxu0
    %v591 = vadd.f32 %v313, %v544
    %v592 = vadd.f32 %v314, %v546
    %v593 = vadd.f32 %v315, %v585
    %v594 = vadd.f32 %v316, %v587
    %v595 = vmul.f32 %v591, 0.5
    %v596 = vtanh.pop %v595
    %v597 = vmul.f32 %v596, 0.5
    %v598 = vadd.f32 %v597, 0.5
    %v599 = vmul.f32 %v592, 0.5
    %v600 = vtanh.pop %v599
    %v601 = vmul.f32 %v600, 0.5
    %v602 = vadd.f32 %v601, 0.5
    %v603 = vtanh.pop %v593
    %v604 = vmul.f32 %v594, 0.5
    %v605 = vtanh.pop %v604
    %v606 = vmul.f32 %v605, 0.5
    %v607 = vadd.f32 %v606, 0.5
    %v608 = vmul.f32 %v602, 0.0
    %v609 = vmul.f32 %v598, %v603
    %v610 = vadd.f32 %v608, %v609
    %v611 = vtanh.pop %v610
    %v612 = vmul.f32 %v607, %v611
    %v613 = vpack.c.bf16 %v612, %v612
    %614 = vst [vmem:[#allocation3] sm:$0xf] %v613
    %s615 = scalar_lea.vmem [#allocation2], 32
    %v616 = vld [vmem:[%s615] sm:$0xff]
    %v617 = vld [vmem:[%s615 + $0x8] sm:$0xff]
    %v618 = vld [vmem:[%s615 + $0x10] sm:$0xff]
    %v619 = vld [vmem:[%s615 + $0x18] sm:$0xff]
    %v620 = vld [vmem:[#allocation4] sm:$0xff]
    %v621 = vld [vmem:[#allocation4 + $0x8] sm:$0xff]
    %v622 = vld [vmem:[#allocation4 + $0x10] sm:$0xff]
    %v623 = vld [vmem:[#allocation4 + $0x18] sm:$0xff]
    %v624 = vld [vmem:[#allocation4 + $0x20] sm:$0xff]
    %v625 = vld [vmem:[#allocation4 + $0x28] sm:$0xff]
    %v626 = vld [vmem:[#allocation4 + $0x30] sm:$0xff]
    %v627 = vld [vmem:[#allocation4 + $0x38] sm:$0xff]
    %v628 = vld [vmem:[#allocation4 + $0x40] sm:$0xff]
    %v629 = vld [vmem:[#allocation4 + $0x48] sm:$0xff]
    %v630 = vld [vmem:[#allocation4 + $0x50] sm:$0xff]
    %v631 = vld [vmem:[#allocation4 + $0x58] sm:$0xff]
    %v632 = vld [vmem:[#allocation4 + $0x60] sm:$0xff]
    %v633 = vld [vmem:[#allocation4 + $0x68] sm:$0xff]
    %v634 = vld [vmem:[#allocation4 + $0x70] sm:$0xff]
    %v635 = vld [vmem:[#allocation4 + $0x78] sm:$0xff]
    %v636 = vld [vmem:[#allocation4 + $0x80] sm:$0xff]
    %v637 = vld [vmem:[#allocation4 + $0x88] sm:$0xff]
    %v638 = vld [vmem:[#allocation4 + $0x90] sm:$0xff]
    %v639 = vld [vmem:[#allocation4 + $0x98] sm:$0xff]
    %v640 = vld [vmem:[#allocation4 + $0xa0] sm:$0xff]
    %v641 = vld [vmem:[#allocation4 + $0xa8] sm:$0xff]
    %v642 = vld [vmem:[#allocation4 + $0xb0] sm:$0xff]
    %v643 = vld [vmem:[#allocation4 + $0xb8] sm:$0xff]
    %v644 = vld [vmem:[#allocation4 + $0xc0] sm:$0xff]
    %v645 = vld [vmem:[#allocation4 + $0xc8] sm:$0xff]
    %v646 = vld [vmem:[#allocation4 + $0xd0] sm:$0xff]
    %v647 = vld [vmem:[#allocation4 + $0xd8] sm:$0xff]
    %v648 = vld [vmem:[#allocation4 + $0xe0] sm:$0xff]
    %v649 = vld [vmem:[#allocation4 + $0xe8] sm:$0xff]
    %v650 = vld [vmem:[#allocation4 + $0xf0] sm:$0xff]
    %v651 = vld [vmem:[#allocation4 + $0xf8] sm:$0xff]
    %v684 = vunpack.c.l.b16 %v620
    %v685 = vunpack.c.h.b16 %v620
    %v686 = vunpack.c.l.b16 %v621
    %v687 = vunpack.c.h.b16 %v621
    %v688 = vunpack.c.l.b16 %v622
    %v689 = vunpack.c.h.b16 %v622
    %v690 = vunpack.c.l.b16 %v623
    %v691 = vunpack.c.h.b16 %v623
    %v692 = vunpack.c.l.b16 %v624
    %v693 = vunpack.c.h.b16 %v624
    %v694 = vunpack.c.l.b16 %v625
    %v695 = vunpack.c.h.b16 %v625
    %v696 = vunpack.c.l.b16 %v626
    %v697 = vunpack.c.h.b16 %v626
    %v698 = vunpack.c.l.b16 %v627
    %v699 = vunpack.c.h.b16 %v627
    %v700 = vunpack.c.l.b16 %v628
    %v701 = vunpack.c.h.b16 %v628
    %v702 = vunpack.c.l.b16 %v629
    %v703 = vunpack.c.h.b16 %v629
    %v704 = vunpack.c.l.b16 %v630
    %v705 = vunpack.c.h.b16 %v630
    %v706 = vunpack.c.l.b16 %v631
    %v707 = vunpack.c.h.b16 %v631
    %v708 = vunpack.c.l.b16 %v632
    %v709 = vunpack.c.h.b16 %v632
    %v710 = vunpack.c.l.b16 %v633
    %v711 = vunpack.c.h.b16 %v633
    %v712 = vunpack.c.l.b16 %v634
    %v713 = vunpack.c.h.b16 %v634
    %v714 = vunpack.c.l.b16 %v635
    %v715 = vunpack.c.h.b16 %v635
    %v716 = vunpack.c.l.b16 %v636
    %v717 = vunpack.c.h.b16 %v636
    %v718 = vunpack.c.l.b16 %v637
    %v719 = vunpack.c.h.b16 %v637
    %v720 = vunpack.c.l.b16 %v638
    %v721 = vunpack.c.h.b16 %v638
    %v722 = vunpack.c.l.b16 %v639
    %v723 = vunpack.c.h.b16 %v639
    %v724 = vunpack.c.l.b16 %v640
    %v725 = vunpack.c.h.b16 %v640
    %v726 = vunpack.c.l.b16 %v641
    %v727 = vunpack.c.h.b16 %v641
    %v728 = vunpack.c.l.b16 %v642
    %v729 = vunpack.c.h.b16 %v642
    %v730 = vunpack.c.l.b16 %v643
    %v731 = vunpack.c.h.b16 %v643
    %v732 = vunpack.c.l.b16 %v644
    %v733 = vunpack.c.h.b16 %v644
    %v734 = vunpack.c.l.b16 %v645
    %v735 = vunpack.c.h.b16 %v645
    %v736 = vunpack.c.l.b16 %v646
    %v737 = vunpack.c.h.b16 %v646
    %v738 = vunpack.c.l.b16 %v647
    %v739 = vunpack.c.h.b16 %v647
    %v740 = vunpack.c.l.b16 %v648
    %v741 = vunpack.c.h.b16 %v648
    %v742 = vunpack.c.l.b16 %v649
    %v743 = vunpack.c.h.b16 %v649
    %v744 = vunpack.c.l.b16 %v650
    %v745 = vunpack.c.h.b16 %v650
    %v746 = vunpack.c.l.b16 %v651
    %v747 = vunpack.c.h.b16 %v651
    %v748 = vpack.c.b16 %v688, %v684
    %v749 = vpack.c.b16 %v689, %v685
    %v750 = vpack.c.b16 %v690, %v686
    %v751 = vpack.c.b16 %v691, %v687
    %v752 = vpack.c.b16 %v696, %v692
    %v753 = vpack.c.b16 %v697, %v693
    %v754 = vpack.c.b16 %v698, %v694
    %v755 = vpack.c.b16 %v699, %v695
    %v756 = vpack.c.b16 %v704, %v700
    %v757 = vpack.c.b16 %v705, %v701
    %v758 = vpack.c.b16 %v706, %v702
    %v759 = vpack.c.b16 %v707, %v703
    %v760 = vpack.c.b16 %v712, %v708
    %v761 = vpack.c.b16 %v713, %v709
    %v762 = vpack.c.b16 %v714, %v710
    %v763 = vpack.c.b16 %v715, %v711
    %v764 = vpack.c.b16 %v720, %v716
    %v765 = vpack.c.b16 %v721, %v717
    %v766 = vpack.c.b16 %v722, %v718
    %v767 = vpack.c.b16 %v723, %v719
    %v768 = vpack.c.b16 %v728, %v724
    %v769 = vpack.c.b16 %v729, %v725
    %v770 = vpack.c.b16 %v730, %v726
    %v771 = vpack.c.b16 %v731, %v727
    %v772 = vpack.c.b16 %v736, %v732
    %v773 = vpack.c.b16 %v737, %v733
    %v774 = vpack.c.b16 %v738, %v734
    %v775 = vpack.c.b16 %v739, %v735
    %v776 = vpack.c.b16 %v744, %v740
    %v777 = vpack.c.b16 %v745, %v741
    %v778 = vpack.c.b16 %v746, %v742
    %v779 = vpack.c.b16 %v747, %v743
    %812 = vmatprep.subr.bf16.mxu0 %v749
    %813 = vmatpush1.bf16.msra.mxu0 %v748
    %814 = vmatprep.subr.bf16.mxu0 %v753
    %815 = vmatpush1.bf16.msra.mxu0 %v752
    %816 = vmatprep.subr.bf16.mxu0 %v757
    %817 = vmatpush1.bf16.msra.mxu0 %v756
    %818 = vmatprep.subr.bf16.mxu0 %v761
    %819 = vmatpush1.bf16.msra.mxu0 %v760
    %820 = vmatprep.subr.bf16.mxu0 %v765
    %821 = vmatpush1.bf16.msra.mxu0 %v764
    %822 = vmatprep.subr.bf16.mxu0 %v769
    %823 = vmatpush1.bf16.msra.mxu0 %v768
    %824 = vmatprep.subr.bf16.mxu0 %v773
    %825 = vmatpush1.bf16.msra.mxu0 %v772
    %826 = vmatprep.subr.bf16.mxu0 %v777
    %827 = vmatpush1.bf16.msra.mxu0 %v776
    %828 = vmatprep.subr.bf16.mxu0 0
    %829 = vmatpush1.bf16.msra.mxu0 0
    %830 = vmatprep.subr.bf16.mxu0 0
    %831 = vmatpush1.bf16.msra.mxu0 0
    %832 = vmatprep.subr.bf16.mxu0 0
    %833 = vmatpush1.bf16.msra.mxu0 0
    %834 = vmatprep.subr.bf16.mxu0 0
    %835 = vmatpush1.bf16.msra.mxu0 0
    %836 = vmatprep.subr.bf16.mxu0 0
    %837 = vmatpush1.bf16.msra.mxu0 0
    %838 = vmatprep.subr.bf16.mxu0 0
    %839 = vmatpush1.bf16.msra.mxu0 0
    %840 = vmatprep.subr.bf16.mxu0 0
    %841 = vmatpush1.bf16.msra.mxu0 0
    %842 = vmatprep.subr.bf16.mxu0 0
    %843 = vmatpush1.bf16.msra.mxu0 0
    %844 = vmatprep.mubr.bf16.mxu0 0
    %845 = vmatmul.mubr.bf16.gmra.mrb[0].mxu0 %v613
    %v846 = vpop.f32.mrb[0].mxu0
    %v847 = vadd.f32 0.0, %v846
    %v848 = vpop.f32.mrb[0].mxu0
    %v849 = vadd.f32 0.0, %v848
    %v850 = vpop.f32.mrb[0].mxu0
    %v851 = vpop.f32.mrb[0].mxu0
    %852 = vdwg.mxu0
    %853 = vmatprep.subr.bf16.mxu0 %v751
    %854 = vmatpush1.bf16.msra.mxu0 %v750
    %855 = vmatprep.subr.bf16.mxu0 %v755
    %856 = vmatpush1.bf16.msra.mxu0 %v754
    %857 = vmatprep.subr.bf16.mxu0 %v759
    %858 = vmatpush1.bf16.msra.mxu0 %v758
    %859 = vmatprep.subr.bf16.mxu0 %v763
    %860 = vmatpush1.bf16.msra.mxu0 %v762
    %861 = vmatprep.subr.bf16.mxu0 %v767
    %862 = vmatpush1.bf16.msra.mxu0 %v766
    %863 = vmatprep.subr.bf16.mxu0 %v771
    %864 = vmatpush1.bf16.msra.mxu0 %v770
    %865 = vmatprep.subr.bf16.mxu0 %v775
    %866 = vmatpush1.bf16.msra.mxu0 %v774
    %867 = vmatprep.subr.bf16.mxu0 %v779
    %868 = vmatpush1.bf16.msra.mxu0 %v778
    %869 = vmatprep.subr.bf16.mxu0 0
    %870 = vmatpush1.bf16.msra.mxu0 0
    %871 = vmatprep.subr.bf16.mxu0 0
    %872 = vmatpush1.bf16.msra.mxu0 0
    %873 = vmatprep.subr.bf16.mxu0 0
    %874 = vmatpush1.bf16.msra.mxu0 0
    %875 = vmatprep.subr.bf16.mxu0 0
    %876 = vmatpush1.bf16.msra.mxu0 0
    %877 = vmatprep.subr.bf16.mxu0 0
    %878 = vmatpush1.bf16.msra.mxu0 0
    %879 = vmatprep.subr.bf16.mxu0 0
    %880 = vmatpush1.bf16.msra.mxu0 0
    %881 = vmatprep.subr.bf16.mxu0 0
    %882 = vmatpush1.bf16.msra.mxu0 0
    %883 = vmatprep.subr.bf16.mxu0 0
    %884 = vmatpush1.bf16.msra.mxu0 0
    %885 = vmatprep.mubr.bf16.mxu0 0
    %886 = vmatmul.mubr.bf16.gmra.mrb[0].mxu0 %v613
    %v887 = vpop.f32.mrb[0].mxu0
    %v888 = vadd.f32 0.0, %v887
    %v889 = vpop.f32.mrb[0].mxu0
    %v890 = vadd.f32 0.0, %v889
    %v891 = vpop.f32.mrb[0].mxu0
    %v892 = vpop.f32.mrb[0].mxu0
    %893 = vdwg.mxu0
    %v894 = vadd.f32 %v616, %v847
    %v895 = vadd.f32 %v617, %v849
    %v896 = vadd.f32 %v618, %v888
    %v897 = vadd.f32 %v619, %v890
    %v898 = vmul.f32 %v894, 0.5
    %v899 = vtanh.pop %v898
    %v900 = vmul.f32 %v899, 0.5
    %v901 = vadd.f32 %v900, 0.5
    %v902 = vmul.f32 %v895, 0.5
    %v903 = vtanh.pop %v902
    %v904 = vmul.f32 %v903, 0.5
    %v905 = vadd.f32 %v904, 0.5
    %v906 = vtanh.pop %v896
    %v907 = vmul.f32 %v897, 0.5
    %v908 = vtanh.pop %v907
    %v909 = vmul.f32 %v908, 0.5
    %v910 = vadd.f32 %v909, 0.5
    %v911 = vmul.f32 %v905, %v610
    %v912 = vmul.f32 %v901, %v906
    %v913 = vadd.f32 %v911, %v912
    %v914 = vtanh.pop %v913
    %v915 = vmul.f32 %v910, %v914
    %v916 = vpack.c.bf16 %v915, %v915
    %s917 = scalar_lea.vmem [#allocation3], 4
    %918 = vst [vmem:[%s917] sm:$0xf] %v916
    %s919 = scalar_lea.vmem [#allocation2], 64
    %v920 = vld [vmem:[%s919] sm:$0xff]
    %v921 = vld [vmem:[%s919 + $0x8] sm:$0xff]
    %v922 = vld [vmem:[%s919 + $0x10] sm:$0xff]
    %v923 = vld [vmem:[%s919 + $0x18] sm:$0xff]
    %v924 = vld [vmem:[#allocation4] sm:$0xff]
    %v925 = vld [vmem:[#allocation4 + $0x8] sm:$0xff]
    %v926 = vld [vmem:[#allocation4 + $0x10] sm:$0xff]
    %v927 = vld [vmem:[#allocation4 + $0x18] sm:$0xff]
    %v928 = vld [vmem:[#allocation4 + $0x20] sm:$0xff]
    %v929 = vld [vmem:[#allocation4 + $0x28] sm:$0xff]
    %v930 = vld [vmem:[#allocation4 + $0x30] sm:$0xff]
    %v931 = vld [vmem:[#allocation4 + $0x38] sm:$0xff]
    %v932 = vld [vmem:[#allocation4 + $0x40] sm:$0xff]
    %v933 = vld [vmem:[#allocation4 + $0x48] sm:$0xff]
    %v934 = vld [vmem:[#allocation4 + $0x50] sm:$0xff]
    %v935 = vld [vmem:[#allocation4 + $0x58] sm:$0xff]
    %v936 = vld [vmem:[#allocation4 + $0x60] sm:$0xff]
    %v937 = vld [vmem:[#allocation4 + $0x68] sm:$0xff]
    %v938 = vld [vmem:[#allocation4 + $0x70] sm:$0xff]
    %v939 = vld [vmem:[#allocation4 + $0x78] sm:$0xff]
    %v940 = vld [vmem:[#allocation4 + $0x80] sm:$0xff]
    %v941 = vld [vmem:[#allocation4 + $0x88] sm:$0xff]
    %v942 = vld [vmem:[#allocation4 + $0x90] sm:$0xff]
    %v943 = vld [vmem:[#allocation4 + $0x98] sm:$0xff]
    %v944 = vld [vmem:[#allocation4 + $0xa0] sm:$0xff]
    %v945 = vld [vmem:[#allocation4 + $0xa8] sm:$0xff]
    %v946 = vld [vmem:[#allocation4 + $0xb0] sm:$0xff]
    %v947 = vld [vmem:[#allocation4 + $0xb8] sm:$0xff]
    %v948 = vld [vmem:[#allocation4 + $0xc0] sm:$0xff]
    %v949 = vld [vmem:[#allocation4 + $0xc8] sm:$0xff]
    %v950 = vld [vmem:[#allocation4 + $0xd0] sm:$0xff]
    %v951 = vld [vmem:[#allocation4 + $0xd8] sm:$0xff]
    %v952 = vld [vmem:[#allocation4 + $0xe0] sm:$0xff]
    %v953 = vld [vmem:[#allocation4 + $0xe8] sm:$0xff]
    %v954 = vld [vmem:[#allocation4 + $0xf0] sm:$0xff]
    %v955 = vld [vmem:[#allocation4 + $0xf8] sm:$0xff]
    %v988 = vunpack.c.l.b16 %v924
    %v989 = vunpack.c.h.b16 %v924
    %v990 = vunpack.c.l.b16 %v925
    %v991 = vunpack.c.h.b16 %v925
    %v992 = vunpack.c.l.b16 %v926
    %v993 = vunpack.c.h.b16 %v926
    %v994 = vunpack.c.l.b16 %v927
    %v995 = vunpack.c.h.b16 %v927
    %v996 = vunpack.c.l.b16 %v928
    %v997 = vunpack.c.h.b16 %v928
    %v998 = vunpack.c.l.b16 %v929
    %v999 = vunpack.c.h.b16 %v929
    %v1000 = vunpack.c.l.b16 %v930
    %v1001 = vunpack.c.h.b16 %v930
    %v1002 = vunpack.c.l.b16 %v931
    %v1003 = vunpack.c.h.b16 %v931
    %v1004 = vunpack.c.l.b16 %v932
    %v1005 = vunpack.c.h.b16 %v932
    %v1006 = vunpack.c.l.b16 %v933
    %v1007 = vunpack.c.h.b16 %v933
    %v1008 = vunpack.c.l.b16 %v934
    %v1009 = vunpack.c.h.b16 %v934
    %v1010 = vunpack.c.l.b16 %v935
    %v1011 = vunpack.c.h.b16 %v935
    %v1012 = vunpack.c.l.b16 %v936
    %v1013 = vunpack.c.h.b16 %v936
    %v1014 = vunpack.c.l.b16 %v937
    %v1015 = vunpack.c.h.b16 %v937
    %v1016 = vunpack.c.l.b16 %v938
    %v1017 = vunpack.c.h.b16 %v938
    %v1018 = vunpack.c.l.b16 %v939
    %v1019 = vunpack.c.h.b16 %v939
    %v1020 = vunpack.c.l.b16 %v940
    %v1021 = vunpack.c.h.b16 %v940
    %v1022 = vunpack.c.l.b16 %v941
    %v1023 = vunpack.c.h.b16 %v941
    %v1024 = vunpack.c.l.b16 %v942
    %v1025 = vunpack.c.h.b16 %v942
    %v1026 = vunpack.c.l.b16 %v943
    %v1027 = vunpack.c.h.b16 %v943
    %v1028 = vunpack.c.l.b16 %v944
    %v1029 = vunpack.c.h.b16 %v944
    %v1030 = vunpack.c.l.b16 %v945
    %v1031 = vunpack.c.h.b16 %v945
    %v1032 = vunpack.c.l.b16 %v946
    %v1033 = vunpack.c.h.b16 %v946
    %v1034 = vunpack.c.l.b16 %v947
    %v1035 = vunpack.c.h.b16 %v947
    %v1036 = vunpack.c.l.b16 %v948
    %v1037 = vunpack.c.h.b16 %v948
    %v1038 = vunpack.c.l.b16 %v949
    %v1039 = vunpack.c.h.b16 %v949
    %v1040 = vunpack.c.l.b16 %v950
    %v1041 = vunpack.c.h.b16 %v950
    %v1042 = vunpack.c.l.b16 %v951
    %v1043 = vunpack.c.h.b16 %v951
    %v1044 = vunpack.c.l.b16 %v952
    %v1045 = vunpack.c.h.b16 %v952
    %v1046 = vunpack.c.l.b16 %v953
    %v1047 = vunpack.c.h.b16 %v953
    %v1048 = vunpack.c.l.b16 %v954
    %v1049 = vunpack.c.h.b16 %v954
    %v1050 = vunpack.c.l.b16 %v955
    %v1051 = vunpack.c.h.b16 %v955
    %v1052 = vpack.c.b16 %v992, %v988
    %v1053 = vpack.c.b16 %v993, %v989
    %v1054 = vpack.c.b16 %v994, %v990
    %v1055 = vpack.c.b16 %v995, %v991
    %v1056 = vpack.c.b16 %v1000, %v996
    %v1057 = vpack.c.b16 %v1001, %v997
    %v1058 = vpack.c.b16 %v1002, %v998
    %v1059 = vpack.c.b16 %v1003, %v999
    %v1060 = vpack.c.b16 %v1008, %v1004
    %v1061 = vpack.c.b16 %v1009, %v1005
    %v1062 = vpack.c.b16 %v1010, %v1006
    %v1063 = vpack.c.b16 %v1011, %v1007
    %v1064 = vpack.c.b16 %v1016, %v1012
    %v1065 = vpack.c.b16 %v1017, %v1013
    %v1066 = vpack.c.b16 %v1018, %v1014
    %v1067 = vpack.c.b16 %v1019, %v1015
    %v1068 = vpack.c.b16 %v1024, %v1020
    %v1069 = vpack.c.b16 %v1025, %v1021
    %v1070 = vpack.c.b16 %v1026, %v1022
    %v1071 = vpack.c.b16 %v1027, %v1023
    %v1072 = vpack.c.b16 %v1032, %v1028
    %v1073 = vpack.c.b16 %v1033, %v1029
    %v1074 = vpack.c.b16 %v1034, %v1030
    %v1075 = vpack.c.b16 %v1035, %v1031
    %v1076 = vpack.c.b16 %v1040, %v1036
    %v1077 = vpack.c.b16 %v1041, %v1037
    %v1078 = vpack.c.b16 %v1042, %v1038
    %v1079 = vpack.c.b16 %v1043, %v1039
    %v1080 = vpack.c.b16 %v1048, %v1044
    %v1081 = vpack.c.b16 %v1049, %v1045
    %v1082 = vpack.c.b16 %v1050, %v1046
    %v1083 = vpack.c.b16 %v1051, %v1047
    %1116 = vmatprep.subr.bf16.mxu0 %v1053
    %1117 = vmatpush1.bf16.msra.mxu0 %v1052
    %1118 = vmatprep.subr.bf16.mxu0 %v1057
    %1119 = vmatpush1.bf16.msra.mxu0 %v1056
    %1120 = vmatprep.subr.bf16.mxu0 %v1061
    %1121 = vmatpush1.bf16.msra.mxu0 %v1060
    %1122 = vmatprep.subr.bf16.mxu0 %v1065
    %1123 = vmatpush1.bf16.msra.mxu0 %v1064
    %1124 = vmatprep.subr.bf16.mxu0 %v1069
    %1125 = vmatpush1.bf16.msra.mxu0 %v1068
    %1126 = vmatprep.subr.bf16.mxu0 %v1073
    %1127 = vmatpush1.bf16.msra.mxu0 %v1072
    %1128 = vmatprep.subr.bf16.mxu0 %v1077
    %1129 = vmatpush1.bf16.msra.mxu0 %v1076
    %1130 = vmatprep.subr.bf16.mxu0 %v1081
    %1131 = vmatpush1.bf16.msra.mxu0 %v1080
    %1132 = vmatprep.subr.bf16.mxu0 0
    %1133 = vmatpush1.bf16.msra.mxu0 0
    %1134 = vmatprep.subr.bf16.mxu0 0
    %1135 = vmatpush1.bf16.msra.mxu0 0
    %1136 = vmatprep.subr.bf16.mxu0 0
    %1137 = vmatpush1.bf16.msra.mxu0 0
    %1138 = vmatprep.subr.bf16.mxu0 0
    %1139 = vmatpush1.bf16.msra.mxu0 0
    %1140 = vmatprep.subr.bf16.mxu0 0
    %1141 = vmatpush1.bf16.msra.mxu0 0
    %1142 = vmatprep.subr.bf16.mxu0 0
    %1143 = vmatpush1.bf16.msra.mxu0 0
    %1144 = vmatprep.subr.bf16.mxu0 0
    %1145 = vmatpush1.bf16.msra.mxu0 0
    %1146 = vmatprep.subr.bf16.mxu0 0
    %1147 = vmatpush1.bf16.msra.mxu0 0
    %1148 = vmatprep.mubr.bf16.mxu0 0
    %1149 = vmatmul.mubr.bf16.gmra.mrb[0].mxu0 %v916
    %v1150 = vpop.f32.mrb[0].mxu0
    %v1151 = vadd.f32 0.0, %v1150
    %v1152 = vpop.f32.mrb[0].mxu0
    %v1153 = vadd.f32 0.0, %v1152
    %v1154 = vpop.f32.mrb[0].mxu0
    %v1155 = vpop.f32.mrb[0].mxu0
    %1156 = vdwg.mxu0
    %1157 = vmatprep.subr.bf16.mxu0 %v1055
    %1158 = vmatpush1.bf16.msra.mxu0 %v1054
    %1159 = vmatprep.subr.bf16.mxu0 %v1059
    %1160 = vmatpush1.bf16.msra.mxu0 %v1058
    %1161 = vmatprep.subr.bf16.mxu0 %v1063
    %1162 = vmatpush1.bf16.msra.mxu0 %v1062
    %1163 = vmatprep.subr.bf16.mxu0 %v1067
    %1164 = vmatpush1.bf16.msra.mxu0 %v1066
    %1165 = vmatprep.subr.bf16.mxu0 %v1071
    %1166 = vmatpush1.bf16.msra.mxu0 %v1070
    %1167 = vmatprep.subr.bf16.mxu0 %v1075
    %1168 = vmatpush1.bf16.msra.mxu0 %v1074
    %1169 = vmatprep.subr.bf16.mxu0 %v1079
    %1170 = vmatpush1.bf16.msra.mxu0 %v1078
    %1171 = vmatprep.subr.bf16.mxu0 %v1083
    %1172 = vmatpush1.bf16.msra.mxu0 %v1082
    %1173 = vmatprep.subr.bf16.mxu0 0
    %1174 = vmatpush1.bf16.msra.mxu0 0
    %1175 = vmatprep.subr.bf16.mxu0 0
    %1176 = vmatpush1.bf16.msra.mxu0 0
    %1177 = vmatprep.subr.bf16.mxu0 0
    %1178 = vmatpush1.bf16.msra.mxu0 0
    %1179 = vmatprep.subr.bf16.mxu0 0
    %1180 = vmatpush1.bf16.msra.mxu0 0
    %1181 = vmatprep.subr.bf16.mxu0 0
    %1182 = vmatpush1.bf16.msra.mxu0 0
    %1183 = vmatprep.subr.bf16.mxu0 0
    %1184 = vmatpush1.bf16.msra.mxu0 0
    %1185 = vmatprep.subr.bf16.mxu0 0
    %1186 = vmatpush1.bf16.msra.mxu0 0
    %1187 = vmatprep.subr.bf16.mxu0 0
    %1188 = vmatpush1.bf16.msra.mxu0 0
    %1189 = vmatprep.mubr.bf16.mxu0 0
    %1190 = vmatmul.mubr.bf16.gmra.mrb[0].mxu0 %v916
    %v1191 = vpop.f32.mrb[0].mxu0
    %v1192 = vadd.f32 0.0, %v1191
    %v1193 = vpop.f32.mrb[0].mxu0
    %v1194 = vadd.f32 0.0, %v1193
    %v1195 = vpop.f32.mrb[0].mxu0
    %v1196 = vpop.f32.mrb[0].mxu0
    %1197 = vdwg.mxu0
    %v1198 = vadd.f32 %v920, %v1151
    %v1199 = vadd.f32 %v921, %v1153
    %v1200 = vadd.f32 %v922, %v1192
    %v1201 = vadd.f32 %v923, %v1194
    %v1202 = vmul.f32 %v1198, 0.5
    %v1203 = vtanh.pop %v1202
    %v1204 = vmul.f32 %v1203, 0.5
    %v1205 = vadd.f32 %v1204, 0.5
    %v1206 = vmul.f32 %v1199, 0.5
    %v1207 = vtanh.pop %v1206
    %v1208 = vmul.f32 %v1207, 0.5
    %v1209 = vadd.f32 %v1208, 0.5
    %v1210 = vtanh.pop %v1200
    %v1211 = vmul.f32 %v1201, 0.5
    %v1212 = vtanh.pop %v1211
    %v1213 = vmul.f32 %v1212, 0.5
    %v1214 = vadd.f32 %v1213, 0.5
    %v1215 = vmul.f32 %v1209, %v913
    %v1216 = vmul.f32 %v1205, %v1210
    %v1217 = vadd.f32 %v1215, %v1216
    %v1218 = vtanh.pop %v1217
    %v1219 = vmul.f32 %v1214, %v1218
    %v1220 = vpack.c.bf16 %v1219, %v1219
    %s1221 = scalar_lea.vmem [#allocation3], 8
    %1222 = vst [vmem:[%s1221] sm:$0xf] %v1220
    %s1223 = scalar_lea.vmem [#allocation2], 96
    %v1224 = vld [vmem:[%s1223] sm:$0xff]
    %v1225 = vld [vmem:[%s1223 + $0x8] sm:$0xff]
    %v1226 = vld [vmem:[%s1223 + $0x10] sm:$0xff]
    %v1227 = vld [vmem:[%s1223 + $0x18] sm:$0xff]
    %v1228 = vld [vmem:[#allocation4] sm:$0xff]
    %v1229 = vld [vmem:[#allocation4 + $0x8] sm:$0xff]
    %v1230 = vld [vmem:[#allocation4 + $0x10] sm:$0xff]
    %v1231 = vld [vmem:[#allocation4 + $0x18] sm:$0xff]
    %v1232 = vld [vmem:[#allocation4 + $0x20] sm:$0xff]
    %v1233 = vld [vmem:[#allocation4 + $0x28] sm:$0xff]
    %v1234 = vld [vmem:[#allocation4 + $0x30] sm:$0xff]
    %v1235 = vld [vmem:[#allocation4 + $0x38] sm:$0xff]
    %v1236 = vld [vmem:[#allocation4 + $0x40] sm:$0xff]
    %v1237 = vld [vmem:[#allocation4 + $0x48] sm:$0xff]
    %v1238 = vld [vmem:[#allocation4 + $0x50] sm:$0xff]
    %v1239 = vld [vmem:[#allocation4 + $0x58] sm:$0xff]
    %v1240 = vld [vmem:[#allocation4 + $0x60] sm:$0xff]
    %v1241 = vld [vmem:[#allocation4 + $0x68] sm:$0xff]
    %v1242 = vld [vmem:[#allocation4 + $0x70] sm:$0xff]
    %v1243 = vld [vmem:[#allocation4 + $0x78] sm:$0xff]
    %v1244 = vld [vmem:[#allocation4 + $0x80] sm:$0xff]
    %v1245 = vld [vmem:[#allocation4 + $0x88] sm:$0xff]
    %v1246 = vld [vmem:[#allocation4 + $0x90] sm:$0xff]
    %v1247 = vld [vmem:[#allocation4 + $0x98] sm:$0xff]
    %v1248 = vld [vmem:[#allocation4 + $0xa0] sm:$0xff]
    %v1249 = vld [vmem:[#allocation4 + $0xa8] sm:$0xff]
    %v1250 = vld [vmem:[#allocation4 + $0xb0] sm:$0xff]
    %v1251 = vld [vmem:[#allocation4 + $0xb8] sm:$0xff]
    %v1252 = vld [vmem:[#allocation4 + $0xc0] sm:$0xff]
    %v1253 = vld [vmem:[#allocation4 + $0xc8] sm:$0xff]
    %v1254 = vld [vmem:[#allocation4 + $0xd0] sm:$0xff]
    %v1255 = vld [vmem:[#allocation4 + $0xd8] sm:$0xff]
    %v1256 = vld [vmem:[#allocation4 + $0xe0] sm:$0xff]
    %v1257 = vld [vmem:[#allocation4 + $0xe8] sm:$0xff]
    %v1258 = vld [vmem:[#allocation4 + $0xf0] sm:$0xff]
    %v1259 = vld [vmem:[#allocation4 + $0xf8] sm:$0xff]
    %v1292 = vunpack.c.l.b16 %v1228
    %v1293 = vunpack.c.h.b16 %v1228
    %v1294 = vunpack.c.l.b16 %v1229
    %v1295 = vunpack.c.h.b16 %v1229
    %v1296 = vunpack.c.l.b16 %v1230
    %v1297 = vunpack.c.h.b16 %v1230
    %v1298 = vunpack.c.l.b16 %v1231
    %v1299 = vunpack.c.h.b16 %v1231
    %v1300 = vunpack.c.l.b16 %v1232
    %v1301 = vunpack.c.h.b16 %v1232
    %v1302 = vunpack.c.l.b16 %v1233
    %v1303 = vunpack.c.h.b16 %v1233
    %v1304 = vunpack.c.l.b16 %v1234
    %v1305 = vunpack.c.h.b16 %v1234
    %v1306 = vunpack.c.l.b16 %v1235
    %v1307 = vunpack.c.h.b16 %v1235
    %v1308 = vunpack.c.l.b16 %v1236
    %v1309 = vunpack.c.h.b16 %v1236
    %v1310 = vunpack.c.l.b16 %v1237
    %v1311 = vunpack.c.h.b16 %v1237
    %v1312 = vunpack.c.l.b16 %v1238
    %v1313 = vunpack.c.h.b16 %v1238
    %v1314 = vunpack.c.l.b16 %v1239
    %v1315 = vunpack.c.h.b16 %v1239
    %v1316 = vunpack.c.l.b16 %v1240
    %v1317 = vunpack.c.h.b16 %v1240
    %v1318 = vunpack.c.l.b16 %v1241
    %v1319 = vunpack.c.h.b16 %v1241
    %v1320 = vunpack.c.l.b16 %v1242
    %v1321 = vunpack.c.h.b16 %v1242
    %v1322 = vunpack.c.l.b16 %v1243
    %v1323 = vunpack.c.h.b16 %v1243
    %v1324 = vunpack.c.l.b16 %v1244
    %v1325 = vunpack.c.h.b16 %v1244
    %v1326 = vunpack.c.l.b16 %v1245
    %v1327 = vunpack.c.h.b16 %v1245
    %v1328 = vunpack.c.l.b16 %v1246
    %v1329 = vunpack.c.h.b16 %v1246
    %v1330 = vunpack.c.l.b16 %v1247
    %v1331 = vunpack.c.h.b16 %v1247
    %v1332 = vunpack.c.l.b16 %v1248
    %v1333 = vunpack.c.h.b16 %v1248
    %v1334 = vunpack.c.l.b16 %v1249
    %v1335 = vunpack.c.h.b16 %v1249
    %v1336 = vunpack.c.l.b16 %v1250
    %v1337 = vunpack.c.h.b16 %v1250
    %v1338 = vunpack.c.l.b16 %v1251
    %v1339 = vunpack.c.h.b16 %v1251
    %v1340 = vunpack.c.l.b16 %v1252
    %v1341 = vunpack.c.h.b16 %v1252
    %v1342 = vunpack.c.l.b16 %v1253
    %v1343 = vunpack.c.h.b16 %v1253
    %v1344 = vunpack.c.l.b16 %v1254
    %v1345 = vunpack.c.h.b16 %v1254
    %v1346 = vunpack.c.l.b16 %v1255
    %v1347 = vunpack.c.h.b16 %v1255
    %v1348 = vunpack.c.l.b16 %v1256
    %v1349 = vunpack.c.h.b16 %v1256
    %v1350 = vunpack.c.l.b16 %v1257
    %v1351 = vunpack.c.h.b16 %v1257
    %v1352 = vunpack.c.l.b16 %v1258
    %v1353 = vunpack.c.h.b16 %v1258
    %v1354 = vunpack.c.l.b16 %v1259
    %v1355 = vunpack.c.h.b16 %v1259
    %v1356 = vpack.c.b16 %v1296, %v1292
    %v1357 = vpack.c.b16 %v1297, %v1293
    %v1358 = vpack.c.b16 %v1298, %v1294
    %v1359 = vpack.c.b16 %v1299, %v1295
    %v1360 = vpack.c.b16 %v1304, %v1300
    %v1361 = vpack.c.b16 %v1305, %v1301
    %v1362 = vpack.c.b16 %v1306, %v1302
    %v1363 = vpack.c.b16 %v1307, %v1303
    %v1364 = vpack.c.b16 %v1312, %v1308
    %v1365 = vpack.c.b16 %v1313, %v1309
    %v1366 = vpack.c.b16 %v1314, %v1310
    %v1367 = vpack.c.b16 %v1315, %v1311
    %v1368 = vpack.c.b16 %v1320, %v1316
    %v1369 = vpack.c.b16 %v1321, %v1317
    %v1370 = vpack.c.b16 %v1322, %v1318
    %v1371 = vpack.c.b16 %v1323, %v1319
    %v1372 = vpack.c.b16 %v1328, %v1324
    %v1373 = vpack.c.b16 %v1329, %v1325
    %v1374 = vpack.c.b16 %v1330, %v1326
    %v1375 = vpack.c.b16 %v1331, %v1327
    %v1376 = vpack.c.b16 %v1336, %v1332
    %v1377 = vpack.c.b16 %v1337, %v1333
    %v1378 = vpack.c.b16 %v1338, %v1334
    %v1379 = vpack.c.b16 %v1339, %v1335
    %v1380 = vpack.c.b16 %v1344, %v1340
    %v1381 = vpack.c.b16 %v1345, %v1341
    %v1382 = vpack.c.b16 %v1346, %v1342
    %v1383 = vpack.c.b16 %v1347, %v1343
    %v1384 = vpack.c.b16 %v1352, %v1348
    %v1385 = vpack.c.b16 %v1353, %v1349
    %v1386 = vpack.c.b16 %v1354, %v1350
    %v1387 = vpack.c.b16 %v1355, %v1351
    %1420 = vmatprep.subr.bf16.mxu0 %v1357
    %1421 = vmatpush1.bf16.msra.mxu0 %v1356
    %1422 = vmatprep.subr.bf16.mxu0 %v1361
    %1423 = vmatpush1.bf16.msra.mxu0 %v1360
    %1424 = vmatprep.subr.bf16.mxu0 %v1365
    %1425 = vmatpush1.bf16.msra.mxu0 %v1364
    %1426 = vmatprep.subr.bf16.mxu0 %v1369
    %1427 = vmatpush1.bf16.msra.mxu0 %v1368
    %1428 = vmatprep.subr.bf16.mxu0 %v1373
    %1429 = vmatpush1.bf16.msra.mxu0 %v1372
    %1430 = vmatprep.subr.bf16.mxu0 %v1377
    %1431 = vmatpush1.bf16.msra.mxu0 %v1376
    %1432 = vmatprep.subr.bf16.mxu0 %v1381
    %1433 = vmatpush1.bf16.msra.mxu0 %v1380
    %1434 = vmatprep.subr.bf16.mxu0 %v1385
    %1435 = vmatpush1.bf16.msra.mxu0 %v1384
    %1436 = vmatprep.subr.bf16.mxu0 0
    %1437 = vmatpush1.bf16.msra.mxu0 0
    %1438 = vmatprep.subr.bf16.mxu0 0
    %1439 = vmatpush1.bf16.msra.mxu0 0
    %1440 = vmatprep.subr.bf16.mxu0 0
    %1441 = vmatpush1.bf16.msra.mxu0 0
    %1442 = vmatprep.subr.bf16.mxu0 0
    %1443 = vmatpush1.bf16.msra.mxu0 0
    %1444 = vmatprep.subr.bf16.mxu0 0
    %1445 = vmatpush1.bf16.msra.mxu0 0
    %1446 = vmatprep.subr.bf16.mxu0 0
    %1447 = vmatpush1.bf16.msra.mxu0 0
    %1448 = vmatprep.subr.bf16.mxu0 0
    %1449 = vmatpush1.bf16.msra.mxu0 0
    %1450 = vmatprep.subr.bf16.mxu0 0
    %1451 = vmatpush1.bf16.msra.mxu0 0
    %1452 = vmatprep.mubr.bf16.mxu0 0
    %1453 = vmatmul.mubr.bf16.gmra.mrb[0].mxu0 %v1220
    %v1454 = vpop.f32.mrb[0].mxu0
    %v1455 = vadd.f32 0.0, %v1454
    %v1456 = vpop.f32.mrb[0].mxu0
    %v1457 = vadd.f32 0.0, %v1456
    %v1458 = vpop.f32.mrb[0].mxu0
    %v1459 = vpop.f32.mrb[0].mxu0
    %1460 = vdwg.mxu0
    %1461 = vmatprep.subr.bf16.mxu0 %v1359
    %1462 = vmatpush1.bf16.msra.mxu0 %v1358
    %1463 = vmatprep.subr.bf16.mxu0 %v1363
    %1464 = vmatpush1.bf16.msra.mxu0 %v1362
    %1465 = vmatprep.subr.bf16.mxu0 %v1367
    %1466 = vmatpush1.bf16.msra.mxu0 %v1366
    %1467 = vmatprep.subr.bf16.mxu0 %v1371
    %1468 = vmatpush1.bf16.msra.mxu0 %v1370
    %1469 = vmatprep.subr.bf16.mxu0 %v1375
    %1470 = vmatpush1.bf16.msra.mxu0 %v1374
    %1471 = vmatprep.subr.bf16.mxu0 %v1379
    %1472 = vmatpush1.bf16.msra.mxu0 %v1378
    %1473 = vmatprep.subr.bf16.mxu0 %v1383
    %1474 = vmatpush1.bf16.msra.mxu0 %v1382
    %1475 = vmatprep.subr.bf16.mxu0 %v1387
    %1476 = vmatpush1.bf16.msra.mxu0 %v1386
    %1477 = vmatprep.subr.bf16.mxu0 0
    %1478 = vmatpush1.bf16.msra.mxu0 0
    %1479 = vmatprep.subr.bf16.mxu0 0
    %1480 = vmatpush1.bf16.msra.mxu0 0
    %1481 = vmatprep.subr.bf16.mxu0 0
    %1482 = vmatpush1.bf16.msra.mxu0 0
    %1483 = vmatprep.subr.bf16.mxu0 0
    %1484 = vmatpush1.bf16.msra.mxu0 0
    %1485 = vmatprep.subr.bf16.mxu0 0
    %1486 = vmatpush1.bf16.msra.mxu0 0
    %1487 = vmatprep.subr.bf16.mxu0 0
    %1488 = vmatpush1.bf16.msra.mxu0 0
    %1489 = vmatprep.subr.bf16.mxu0 0
    %1490 = vmatpush1.bf16.msra.mxu0 0
    %1491 = vmatprep.subr.bf16.mxu0 0
    %1492 = vmatpush1.bf16.msra.mxu0 0
    %1493 = vmatprep.mubr.bf16.mxu0 0
    %1494 = vmatmul.mubr.bf16.gmra.mrb[0].mxu0 %v1220
    %v1495 = vpop.f32.mrb[0].mxu0
    %v1496 = vadd.f32 0.0, %v1495
    %v1497 = vpop.f32.mrb[0].mxu0
    %v1498 = vadd.f32 0.0, %v1497
    %v1499 = vpop.f32.mrb[0].mxu0
    %v1500 = vpop.f32.mrb[0].mxu0
    %1501 = vdwg.mxu0
    %v1502 = vadd.f32 %v1224, %v1455
    %v1503 = vadd.f32 %v1225, %v1457
    %v1504 = vadd.f32 %v1226, %v1496
    %v1505 = vadd.f32 %v1227, %v1498
    %v1506 = vmul.f32 %v1502, 0.5
    %v1507 = vtanh.pop %v1506
    %v1508 = vmul.f32 %v1507, 0.5
    %v1509 = vadd.f32 %v1508, 0.5
    %v1510 = vmul.f32 %v1503, 0.5
    %v1511 = vtanh.pop %v1510
    %v1512 = vmul.f32 %v1511, 0.5
    %v1513 = vadd.f32 %v1512, 0.5
    %v1514 = vtanh.pop %v1504
    %v1515 = vmul.f32 %v1505, 0.5
    %v1516 = vtanh.pop %v1515
    %v1517 = vmul.f32 %v1516, 0.5
    %v1518 = vadd.f32 %v1517, 0.5
    %v1519 = vmul.f32 %v1513, %v1217
    %v1520 = vmul.f32 %v1509, %v1514
    %v1521 = vadd.f32 %v1519, %v1520
    %v1522 = vtanh.pop %v1521
    %v1523 = vmul.f32 %v1518, %v1522
    %v1524 = vpack.c.bf16 %v1523, %v1523
    %s1525 = scalar_lea.vmem [#allocation3], 12
    %1526 = vst [vmem:[%s1525] sm:$0xf] %v1524
    %s1527 = scalar_lea.vmem [#allocation2], 128
    %v1528 = vld [vmem:[%s1527] sm:$0xff]
    %v1529 = vld [vmem:[%s1527 + $0x8] sm:$0xff]
    %v1530 = vld [vmem:[%s1527 + $0x10] sm:$0xff]
    %v1531 = vld [vmem:[%s1527 + $0x18] sm:$0xff]
    %v1532 = vld [vmem:[#allocation4] sm:$0xff]
    %v1533 = vld [vmem:[#allocation4 + $0x8] sm:$0xff]
    %v1534 = vld [vmem:[#allocation4 + $0x10] sm:$0xff]
    %v1535 = vld [vmem:[#allocation4 + $0x18] sm:$0xff]
    %v1536 = vld [vmem:[#allocation4 + $0x20] sm:$0xff]
    %v1537 = vld [vmem:[#allocation4 + $0x28] sm:$0xff]
    %v1538 = vld [vmem:[#allocation4 + $0x30] sm:$0xff]
    %v1539 = vld [vmem:[#allocation4 + $0x38] sm:$0xff]
    %v1540 = vld [vmem:[#allocation4 + $0x40] sm:$0xff]
    %v1541 = vld [vmem:[#allocation4 + $0x48] sm:$0xff]
    %v1542 = vld [vmem:[#allocation4 + $0x50] sm:$0xff]
    %v1543 = vld [vmem:[#allocation4 + $0x58] sm:$0xff]
    %v1544 = vld [vmem:[#allocation4 + $0x60] sm:$0xff]
    %v1545 = vld [vmem:[#allocation4 + $0x68] sm:$0xff]
    %v1546 = vld [vmem:[#allocation4 + $0x70] sm:$0xff]
    %v1547 = vld [vmem:[#allocation4 + $0x78] sm:$0xff]
    %v1548 = vld [vmem:[#allocation4 + $0x80] sm:$0xff]
    %v1549 = vld [vmem:[#allocation4 + $0x88] sm:$0xff]
    %v1550 = vld [vmem:[#allocation4 + $0x90] sm:$0xff]
    %v1551 = vld [vmem:[#allocation4 + $0x98] sm:$0xff]
    %v1552 = vld [vmem:[#allocation4 + $0xa0] sm:$0xff]
    %v1553 = vld [vmem:[#allocation4 + $0xa8] sm:$0xff]
    %v1554 = vld [vmem:[#allocation4 + $0xb0] sm:$0xff]
    %v1555 = vld [vmem:[#allocation4 + $0xb8] sm:$0xff]
    %v1556 = vld [vmem:[#allocation4 + $0xc0] sm:$0xff]
    %v1557 = vld [vmem:[#allocation4 + $0xc8] sm:$0xff]
    %v1558 = vld [vmem:[#allocation4 + $0xd0] sm:$0xff]
    %v1559 = vld [vmem:[#allocation4 + $0xd8] sm:$0xff]
    %v1560 = vld [vmem:[#allocation4 + $0xe0] sm:$0xff]
    %v1561 = vld [vmem:[#allocation4 + $0xe8] sm:$0xff]
    %v1562 = vld [vmem:[#allocation4 + $0xf0] sm:$0xff]
    %v1563 = vld [vmem:[#allocation4 + $0xf8] sm:$0xff]
    %v1596 = vunpack.c.l.b16 %v1532
    %v1597 = vunpack.c.h.b16 %v1532
    %v1598 = vunpack.c.l.b16 %v1533
    %v1599 = vunpack.c.h.b16 %v1533
    %v1600 = vunpack.c.l.b16 %v1534
    %v1601 = vunpack.c.h.b16 %v1534
    %v1602 = vunpack.c.l.b16 %v1535
    %v1603 = vunpack.c.h.b16 %v1535
    %v1604 = vunpack.c.l.b16 %v1536
    %v1605 = vunpack.c.h.b16 %v1536
    %v1606 = vunpack.c.l.b16 %v1537
    %v1607 = vunpack.c.h.b16 %v1537
    %v1608 = vunpack.c.l.b16 %v1538
    %v1609 = vunpack.c.h.b16 %v1538
    %v1610 = vunpack.c.l.b16 %v1539
    %v1611 = vunpack.c.h.b16 %v1539
    %v1612 = vunpack.c.l.b16 %v1540
    %v1613 = vunpack.c.h.b16 %v1540
    %v1614 = vunpack.c.l.b16 %v1541
    %v1615 = vunpack.c.h.b16 %v1541
    %v1616 = vunpack.c.l.b16 %v1542
    %v1617 = vunpack.c.h.b16 %v1542
    %v1618 = vunpack.c.l.b16 %v1543
    %v1619 = vunpack.c.h.b16 %v1543
    %v1620 = vunpack.c.l.b16 %v1544
    %v1621 = vunpack.c.h.b16 %v1544
    %v1622 = vunpack.c.l.b16 %v1545
    %v1623 = vunpack.c.h.b16 %v1545
    %v1624 = vunpack.c.l.b16 %v1546
    %v1625 = vunpack.c.h.b16 %v1546
    %v1626 = vunpack.c.l.b16 %v1547
    %v1627 = vunpack.c.h.b16 %v1547
    %v1628 = vunpack.c.l.b16 %v1548
    %v1629 = vunpack.c.h.b16 %v1548
    %v1630 = vunpack.c.l.b16 %v1549
    %v1631 = vunpack.c.h.b16 %v1549
    %v1632 = vunpack.c.l.b16 %v1550
    %v1633 = vunpack.c.h.b16 %v1550
    %v1634 = vunpack.c.l.b16 %v1551
    %v1635 = vunpack.c.h.b16 %v1551
    %v1636 = vunpack.c.l.b16 %v1552
    %v1637 = vunpack.c.h.b16 %v1552
    %v1638 = vunpack.c.l.b16 %v1553
    %v1639 = vunpack.c.h.b16 %v1553
    %v1640 = vunpack.c.l.b16 %v1554
    %v1641 = vunpack.c.h.b16 %v1554
    %v1642 = vunpack.c.l.b16 %v1555
    %v1643 = vunpack.c.h.b16 %v1555
    %v1644 = vunpack.c.l.b16 %v1556
    %v1645 = vunpack.c.h.b16 %v1556
    %v1646 = vunpack.c.l.b16 %v1557
    %v1647 = vunpack.c.h.b16 %v1557
    %v1648 = vunpack.c.l.b16 %v1558
    %v1649 = vunpack.c.h.b16 %v1558
    %v1650 = vunpack.c.l.b16 %v1559
    %v1651 = vunpack.c.h.b16 %v1559
    %v1652 = vunpack.c.l.b16 %v1560
    %v1653 = vunpack.c.h.b16 %v1560
    %v1654 = vunpack.c.l.b16 %v1561
    %v1655 = vunpack.c.h.b16 %v1561
    %v1656 = vunpack.c.l.b16 %v1562
    %v1657 = vunpack.c.h.b16 %v1562
    %v1658 = vunpack.c.l.b16 %v1563
    %v1659 = vunpack.c.h.b16 %v1563
    %v1660 = vpack.c.b16 %v1600, %v1596
    %v1661 = vpack.c.b16 %v1601, %v1597
    %v1662 = vpack.c.b16 %v1602, %v1598
    %v1663 = vpack.c.b16 %v1603, %v1599
    %v1664 = vpack.c.b16 %v1608, %v1604
    %v1665 = vpack.c.b16 %v1609, %v1605
    %v1666 = vpack.c.b16 %v1610, %v1606
    %v1667 = vpack.c.b16 %v1611, %v1607
    %v1668 = vpack.c.b16 %v1616, %v1612
    %v1669 = vpack.c.b16 %v1617, %v1613
    %v1670 = vpack.c.b16 %v1618, %v1614
    %v1671 = vpack.c.b16 %v1619, %v1615
    %v1672 = vpack.c.b16 %v1624, %v1620
    %v1673 = vpack.c.b16 %v1625, %v1621
    %v1674 = vpack.c.b16 %v1626, %v1622
    %v1675 = vpack.c.b16 %v1627, %v1623
    %v1676 = vpack.c.b16 %v1632, %v1628
    %v1677 = vpack.c.b16 %v1633, %v1629
    %v1678 = vpack.c.b16 %v1634, %v1630
    %v1679 = vpack.c.b16 %v1635, %v1631
    %v1680 = vpack.c.b16 %v1640, %v1636
    %v1681 = vpack.c.b16 %v1641, %v1637
    %v1682 = vpack.c.b16 %v1642, %v1638
    %v1683 = vpack.c.b16 %v1643, %v1639
    %v1684 = vpack.c.b16 %v1648, %v1644
    %v1685 = vpack.c.b16 %v1649, %v1645
    %v1686 = vpack.c.b16 %v1650, %v1646
    %v1687 = vpack.c.b16 %v1651, %v1647
    %v1688 = vpack.c.b16 %v1656, %v1652
    %v1689 = vpack.c.b16 %v1657, %v1653
    %v1690 = vpack.c.b16 %v1658, %v1654
    %v1691 = vpack.c.b16 %v1659, %v1655
    %1724 = vmatprep.subr.bf16.mxu0 %v1661
    %1725 = vmatpush1.bf16.msra.mxu0 %v1660
    %1726 = vmatprep.subr.bf16.mxu0 %v1665
    %1727 = vmatpush1.bf16.msra.mxu0 %v1664
    %1728 = vmatprep.subr.bf16.mxu0 %v1669
    %1729 = vmatpush1.bf16.msra.mxu0 %v1668
    %1730 = vmatprep.subr.bf16.mxu0 %v1673
    %1731 = vmatpush1.bf16.msra.mxu0 %v1672
    %1732 = vmatprep.subr.bf16.mxu0 %v1677
    %1733 = vmatpush1.bf16.msra.mxu0 %v1676
    %1734 = vmatprep.subr.bf16.mxu0 %v1681
    %1735 = vmatpush1.bf16.msra.mxu0 %v1680
    %1736 = vmatprep.subr.bf16.mxu0 %v1685
    %1737 = vmatpush1.bf16.msra.mxu0 %v1684
    %1738 = vmatprep.subr.bf16.mxu0 %v1689
    %1739 = vmatpush1.bf16.msra.mxu0 %v1688
    %1740 = vmatprep.subr.bf16.mxu0 0
    %1741 = vmatpush1.bf16.msra.mxu0 0
    %1742 = vmatprep.subr.bf16.mxu0 0
    %1743 = vmatpush1.bf16.msra.mxu0 0
    %1744 = vmatprep.subr.bf16.mxu0 0
    %1745 = vmatpush1.bf16.msra.mxu0 0
    %1746 = vmatprep.subr.bf16.mxu0 0
    %1747 = vmatpush1.bf16.msra.mxu0 0
    %1748 = vmatprep.subr.bf16.mxu0 0
    %1749 = vmatpush1.bf16.msra.mxu0 0
    %1750 = vmatprep.subr.bf16.mxu0 0
    %1751 = vmatpush1.bf16.msra.mxu0 0
    %1752 = vmatprep.subr.bf16.mxu0 0
    %1753 = vmatpush1.bf16.msra.mxu0 0
    %1754 = vmatprep.subr.bf16.mxu0 0
    %1755 = vmatpush1.bf16.msra.mxu0 0
    %1756 = vmatprep.mubr.bf16.mxu0 0
    %1757 = vmatmul.mubr.bf16.gmra.mrb[0].mxu0 %v1524
    %v1758 = vpop.f32.mrb[0].mxu0
    %v1759 = vadd.f32 0.0, %v1758
    %v1760 = vpop.f32.mrb[0].mxu0
    %v1761 = vadd.f32 0.0, %v1760
    %v1762 = vpop.f32.mrb[0].mxu0
    %v1763 = vpop.f32.mrb[0].mxu0
    %1764 = vdwg.mxu0
    %1765 = vmatprep.subr.bf16.mxu0 %v1663
    %1766 = vmatpush1.bf16.msra.mxu0 %v1662
    %1767 = vmatprep.subr.bf16.mxu0 %v1667
    %1768 = vmatpush1.bf16.msra.mxu0 %v1666
    %1769 = vmatprep.subr.bf16.mxu0 %v1671
    %1770 = vmatpush1.bf16.msra.mxu0 %v1670
    %1771 = vmatprep.subr.bf16.mxu0 %v1675
    %1772 = vmatpush1.bf16.msra.mxu0 %v1674
    %1773 = vmatprep.subr.bf16.mxu0 %v1679
    %1774 = vmatpush1.bf16.msra.mxu0 %v1678
    %1775 = vmatprep.subr.bf16.mxu0 %v1683
    %1776 = vmatpush1.bf16.msra.mxu0 %v1682
    %1777 = vmatprep.subr.bf16.mxu0 %v1687
    %1778 = vmatpush1.bf16.msra.mxu0 %v1686
    %1779 = vmatprep.subr.bf16.mxu0 %v1691
    %1780 = vmatpush1.bf16.msra.mxu0 %v1690
    %1781 = vmatprep.subr.bf16.mxu0 0
    %1782 = vmatpush1.bf16.msra.mxu0 0
    %1783 = vmatprep.subr.bf16.mxu0 0
    %1784 = vmatpush1.bf16.msra.mxu0 0
    %1785 = vmatprep.subr.bf16.mxu0 0
    %1786 = vmatpush1.bf16.msra.mxu0 0
    %1787 = vmatprep.subr.bf16.mxu0 0
    %1788 = vmatpush1.bf16.msra.mxu0 0
    %1789 = vmatprep.subr.bf16.mxu0 0
    %1790 = vmatpush1.bf16.msra.mxu0 0
    %1791 = vmatprep.subr.bf16.mxu0 0
    %1792 = vmatpush1.bf16.msra.mxu0 0
    %1793 = vmatprep.subr.bf16.mxu0 0
    %1794 = vmatpush1.bf16.msra.mxu0 0
    %1795 = vmatprep.subr.bf16.mxu0 0
    %1796 = vmatpush1.bf16.msra.mxu0 0
    %1797 = vmatprep.mubr.bf16.mxu0 0
    %1798 = vmatmul.mubr.bf16.gmra.mrb[0].mxu0 %v1524
    %v1799 = vpop.f32.mrb[0].mxu0
    %v1800 = vadd.f32 0.0, %v1799
    %v1801 = vpop.f32.mrb[0].mxu0
    %v1802 = vadd.f32 0.0, %v1801
    %v1803 = vpop.f32.mrb[0].mxu0
    %v1804 = vpop.f32.mrb[0].mxu0
    %1805 = vdwg.mxu0
    %v1806 = vadd.f32 %v1528, %v1759
    %v1807 = vadd.f32 %v1529, %v1761
    %v1808 = vadd.f32 %v1530, %v1800
    %v1809 = vadd.f32 %v1531, %v1802
    %v1810 = vmul.f32 %v1806, 0.5
    %v1811 = vtanh.pop %v1810
    %v1812 = vmul.f32 %v1811, 0.5
    %v1813 = vadd.f32 %v1812, 0.5
    %v1814 = vmul.f32 %v1807, 0.5
    %v1815 = vtanh.pop %v1814
    %v1816 = vmul.f32 %v1815, 0.5
    %v1817 = vadd.f32 %v1816, 0.5
    %v1818 = vtanh.pop %v1808
    %v1819 = vmul.f32 %v1809, 0.5
    %v1820 = vtanh.pop %v1819
    %v1821 = vmul.f32 %v1820, 0.5
    %v1822 = vadd.f32 %v1821, 0.5
    %v1823 = vmul.f32 %v1817, %v1521
    %v1824 = vmul.f32 %v1813, %v1818
    %v1825 = vadd.f32 %v1823, %v1824
    %v1826 = vtanh.pop %v1825
    %v1827 = vmul.f32 %v1822, %v1826
    %v1828 = vpack.c.bf16 %v1827, %v1827
    %s1829 = scalar_lea.vmem [#allocation3], 16
    %1830 = vst [vmem:[%s1829] sm:$0xf] %v1828
    %s1831 = scalar_lea.vmem [#allocation2], 160
    %v1832 = vld [vmem:[%s1831] sm:$0xff]
    %v1833 = vld [vmem:[%s1831 + $0x8] sm:$0xff]
    %v1834 = vld [vmem:[%s1831 + $0x10] sm:$0xff]
    %v1835 = vld [vmem:[%s1831 + $0x18] sm:$0xff]
    %v1836 = vld [vmem:[#allocation4] sm:$0xff]
    %v1837 = vld [vmem:[#allocation4 + $0x8] sm:$0xff]
    %v1838 = vld [vmem:[#allocation4 + $0x10] sm:$0xff]
    %v1839 = vld [vmem:[#allocation4 + $0x18] sm:$0xff]
    %v1840 = vld [vmem:[#allocation4 + $0x20] sm:$0xff]
    %v1841 = vld [vmem:[#allocation4 + $0x28] sm:$0xff]
    %v1842 = vld [vmem:[#allocation4 + $0x30] sm:$0xff]
    %v1843 = vld [vmem:[#allocation4 + $0x38] sm:$0xff]
    %v1844 = vld [vmem:[#allocation4 + $0x40] sm:$0xff]
    %v1845 = vld [vmem:[#allocation4 + $0x48] sm:$0xff]
    %v1846 = vld [vmem:[#allocation4 + $0x50] sm:$0xff]
    %v1847 = vld [vmem:[#allocation4 + $0x58] sm:$0xff]
    %v1848 = vld [vmem:[#allocation4 + $0x60] sm:$0xff]
    %v1849 = vld [vmem:[#allocation4 + $0x68] sm:$0xff]
    %v1850 = vld [vmem:[#allocation4 + $0x70] sm:$0xff]
    %v1851 = vld [vmem:[#allocation4 + $0x78] sm:$0xff]
    %v1852 = vld [vmem:[#allocation4 + $0x80] sm:$0xff]
    %v1853 = vld [vmem:[#allocation4 + $0x88] sm:$0xff]
    %v1854 = vld [vmem:[#allocation4 + $0x90] sm:$0xff]
    %v1855 = vld [vmem:[#allocation4 + $0x98] sm:$0xff]
    %v1856 = vld [vmem:[#allocation4 + $0xa0] sm:$0xff]
    %v1857 = vld [vmem:[#allocation4 + $0xa8] sm:$0xff]
    %v1858 = vld [vmem:[#allocation4 + $0xb0] sm:$0xff]
    %v1859 = vld [vmem:[#allocation4 + $0xb8] sm:$0xff]
    %v1860 = vld [vmem:[#allocation4 + $0xc0] sm:$0xff]
    %v1861 = vld [vmem:[#allocation4 + $0xc8] sm:$0xff]
    %v1862 = vld [vmem:[#allocation4 + $0xd0] sm:$0xff]
    %v1863 = vld [vmem:[#allocation4 + $0xd8] sm:$0xff]
    %v1864 = vld [vmem:[#allocation4 + $0xe0] sm:$0xff]
    %v1865 = vld [vmem:[#allocation4 + $0xe8] sm:$0xff]
    %v1866 = vld [vmem:[#allocation4 + $0xf0] sm:$0xff]
    %v1867 = vld [vmem:[#allocation4 + $0xf8] sm:$0xff]
    %v1900 = vunpack.c.l.b16 %v1836
    %v1901 = vunpack.c.h.b16 %v1836
    %v1902 = vunpack.c.l.b16 %v1837
    %v1903 = vunpack.c.h.b16 %v1837
    %v1904 = vunpack.c.l.b16 %v1838
    %v1905 = vunpack.c.h.b16 %v1838
    %v1906 = vunpack.c.l.b16 %v1839
    %v1907 = vunpack.c.h.b16 %v1839
    %v1908 = vunpack.c.l.b16 %v1840
    %v1909 = vunpack.c.h.b16 %v1840
    %v1910 = vunpack.c.l.b16 %v1841
    %v1911 = vunpack.c.h.b16 %v1841
    %v1912 = vunpack.c.l.b16 %v1842
    %v1913 = vunpack.c.h.b16 %v1842
    %v1914 = vunpack.c.l.b16 %v1843
    %v1915 = vunpack.c.h.b16 %v1843
    %v1916 = vunpack.c.l.b16 %v1844
    %v1917 = vunpack.c.h.b16 %v1844
    %v1918 = vunpack.c.l.b16 %v1845
    %v1919 = vunpack.c.h.b16 %v1845
    %v1920 = vunpack.c.l.b16 %v1846
    %v1921 = vunpack.c.h.b16 %v1846
    %v1922 = vunpack.c.l.b16 %v1847
    %v1923 = vunpack.c.h.b16 %v1847
    %v1924 = vunpack.c.l.b16 %v1848
    %v1925 = vunpack.c.h.b16 %v1848
    %v1926 = vunpack.c.l.b16 %v1849
    %v1927 = vunpack.c.h.b16 %v1849
    %v1928 = vunpack.c.l.b16 %v1850
    %v1929 = vunpack.c.h.b16 %v1850
    %v1930 = vunpack.c.l.b16 %v1851
    %v1931 = vunpack.c.h.b16 %v1851
    %v1932 = vunpack.c.l.b16 %v1852
    %v1933 = vunpack.c.h.b16 %v1852
    %v1934 = vunpack.c.l.b16 %v1853
    %v1935 = vunpack.c.h.b16 %v1853
    %v1936 = vunpack.c.l.b16 %v1854
    %v1937 = vunpack.c.h.b16 %v1854
    %v1938 = vunpack.c.l.b16 %v1855
    %v1939 = vunpack.c.h.b16 %v1855
    %v1940 = vunpack.c.l.b16 %v1856
    %v1941 = vunpack.c.h.b16 %v1856
    %v1942 = vunpack.c.l.b16 %v1857
    %v1943 = vunpack.c.h.b16 %v1857
    %v1944 = vunpack.c.l.b16 %v1858
    %v1945 = vunpack.c.h.b16 %v1858
    %v1946 = vunpack.c.l.b16 %v1859
    %v1947 = vunpack.c.h.b16 %v1859
    %v1948 = vunpack.c.l.b16 %v1860
    %v1949 = vunpack.c.h.b16 %v1860
    %v1950 = vunpack.c.l.b16 %v1861
    %v1951 = vunpack.c.h.b16 %v1861
    %v1952 = vunpack.c.l.b16 %v1862
    %v1953 = vunpack.c.h.b16 %v1862
    %v1954 = vunpack.c.l.b16 %v1863
    %v1955 = vunpack.c.h.b16 %v1863
    %v1956 = vunpack.c.l.b16 %v1864
    %v1957 = vunpack.c.h.b16 %v1864
    %v1958 = vunpack.c.l.b16 %v1865
    %v1959 = vunpack.c.h.b16 %v1865
    %v1960 = vunpack.c.l.b16 %v1866
    %v1961 = vunpack.c.h.b16 %v1866
    %v1962 = vunpack.c.l.b16 %v1867
    %v1963 = vunpack.c.h.b16 %v1867
    %v1964 = vpack.c.b16 %v1904, %v1900
    %v1965 = vpack.c.b16 %v1905, %v1901
    %v1966 = vpack.c.b16 %v1906, %v1902
    %v1967 = vpack.c.b16 %v1907, %v1903
    %v1968 = vpack.c.b16 %v1912, %v1908
    %v1969 = vpack.c.b16 %v1913, %v1909
    %v1970 = vpack.c.b16 %v1914, %v1910
    %v1971 = vpack.c.b16 %v1915, %v1911
    %v1972 = vpack.c.b16 %v1920, %v1916
    %v1973 = vpack.c.b16 %v1921, %v1917
    %v1974 = vpack.c.b16 %v1922, %v1918
    %v1975 = vpack.c.b16 %v1923, %v1919
    %v1976 = vpack.c.b16 %v1928, %v1924
    %v1977 = vpack.c.b16 %v1929, %v1925
    %v1978 = vpack.c.b16 %v1930, %v1926
    %v1979 = vpack.c.b16 %v1931, %v1927
    %v1980 = vpack.c.b16 %v1936, %v1932
    %v1981 = vpack.c.b16 %v1937, %v1933
    %v1982 = vpack.c.b16 %v1938, %v1934
    %v1983 = vpack.c.b16 %v1939, %v1935
    %v1984 = vpack.c.b16 %v1944, %v1940
    %v1985 = vpack.c.b16 %v1945, %v1941
    %v1986 = vpack.c.b16 %v1946, %v1942
    %v1987 = vpack.c.b16 %v1947, %v1943
    %v1988 = vpack.c.b16 %v1952, %v1948
    %v1989 = vpack.c.b16 %v1953, %v1949
    %v1990 = vpack.c.b16 %v1954, %v1950
    %v1991 = vpack.c.b16 %v1955, %v1951
    %v1992 = vpack.c.b16 %v1960, %v1956
    %v1993 = vpack.c.b16 %v1961, %v1957
    %v1994 = vpack.c.b16 %v1962, %v1958
    %v1995 = vpack.c.b16 %v1963, %v1959
    %2028 = vmatprep.subr.bf16.mxu0 %v1965
    %2029 = vmatpush1.bf16.msra.mxu0 %v1964
    %2030 = vmatprep.subr.bf16.mxu0 %v1969
    %2031 = vmatpush1.bf16.msra.mxu0 %v1968
    %2032 = vmatprep.subr.bf16.mxu0 %v1973
    %2033 = vmatpush1.bf16.msra.mxu0 %v1972
    %2034 = vmatprep.subr.bf16.mxu0 %v1977
    %2035 = vmatpush1.bf16.msra.mxu0 %v1976
    %2036 = vmatprep.subr.bf16.mxu0 %v1981
    %2037 = vmatpush1.bf16.msra.mxu0 %v1980
    %2038 = vmatprep.subr.bf16.mxu0 %v1985
    %2039 = vmatpush1.bf16.msra.mxu0 %v1984
    %2040 = vmatprep.subr.bf16.mxu0 %v1989
    %2041 = vmatpush1.bf16.msra.mxu0 %v1988
    %2042 = vmatprep.subr.bf16.mxu0 %v1993
    %2043 = vmatpush1.bf16.msra.mxu0 %v1992
    %2044 = vmatprep.subr.bf16.mxu0 0
    %2045 = vmatpush1.bf16.msra.mxu0 0
    %2046 = vmatprep.subr.bf16.mxu0 0
    %2047 = vmatpush1.bf16.msra.mxu0 0
    %2048 = vmatprep.subr.bf16.mxu0 0
    %2049 = vmatpush1.bf16.msra.mxu0 0
    %2050 = vmatprep.subr.bf16.mxu0 0
    %2051 = vmatpush1.bf16.msra.mxu0 0
    %2052 = vmatprep.subr.bf16.mxu0 0
    %2053 = vmatpush1.bf16.msra.mxu0 0
    %2054 = vmatprep.subr.bf16.mxu0 0
    %2055 = vmatpush1.bf16.msra.mxu0 0
    %2056 = vmatprep.subr.bf16.mxu0 0
    %2057 = vmatpush1.bf16.msra.mxu0 0
    %2058 = vmatprep.subr.bf16.mxu0 0
    %2059 = vmatpush1.bf16.msra.mxu0 0
    %2060 = vmatprep.mubr.bf16.mxu0 0
    %2061 = vmatmul.mubr.bf16.gmra.mrb[0].mxu0 %v1828
    %v2062 = vpop.f32.mrb[0].mxu0
    %v2063 = vadd.f32 0.0, %v2062
    %v2064 = vpop.f32.mrb[0].mxu0
    %v2065 = vadd.f32 0.0, %v2064
    %v2066 = vpop.f32.mrb[0].mxu0
    %v2067 = vpop.f32.mrb[0].mxu0
    %2068 = vdwg.mxu0
    %2069 = vmatprep.subr.bf16.mxu0 %v1967
    %2070 = vmatpush1.bf16.msra.mxu0 %v1966
    %2071 = vmatprep.subr.bf16.mxu0 %v1971
    %2072 = vmatpush1.bf16.msra.mxu0 %v1970
    %2073 = vmatprep.subr.bf16.mxu0 %v1975
    %2074 = vmatpush1.bf16.msra.mxu0 %v1974
    %2075 = vmatprep.subr.bf16.mxu0 %v1979
    %2076 = vmatpush1.bf16.msra.mxu0 %v1978
    %2077 = vmatprep.subr.bf16.mxu0 %v1983
    %2078 = vmatpush1.bf16.msra.mxu0 %v1982
    %2079 = vmatprep.subr.bf16.mxu0 %v1987
    %2080 = vmatpush1.bf16.msra.mxu0 %v1986
    %2081 = vmatprep.subr.bf16.mxu0 %v1991
    %2082 = vmatpush1.bf16.msra.mxu0 %v1990
    %2083 = vmatprep.subr.bf16.mxu0 %v1995
    %2084 = vmatpush1.bf16.msra.mxu0 %v1994
    %2085 = vmatprep.subr.bf16.mxu0 0
    %2086 = vmatpush1.bf16.msra.mxu0 0
    %2087 = vmatprep.subr.bf16.mxu0 0
    %2088 = vmatpush1.bf16.msra.mxu0 0
    %2089 = vmatprep.subr.bf16.mxu0 0
    %2090 = vmatpush1.bf16.msra.mxu0 0
    %2091 = vmatprep.subr.bf16.mxu0 0
    %2092 = vmatpush1.bf16.msra.mxu0 0
    %2093 = vmatprep.subr.bf16.mxu0 0
    %2094 = vmatpush1.bf16.msra.mxu0 0
    %2095 = vmatprep.subr.bf16.mxu0 0
    %2096 = vmatpush1.bf16.msra.mxu0 0
    %2097 = vmatprep.subr.bf16.mxu0 0
    %2098 = vmatpush1.bf16.msra.mxu0 0
    %2099 = vmatprep.subr.bf16.mxu0 0
    %2100 = vmatpush1.bf16.msra.mxu0 0
    %2101 = vmatprep.mubr.bf16.mxu0 0
    %2102 = vmatmul.mubr.bf16.gmra.mrb[0].mxu0 %v1828
    %v2103 = vpop.f32.mrb[0].mxu0
    %v2104 = vadd.f32 0.0, %v2103
    %v2105 = vpop.f32.mrb[0].mxu0
    %v2106 = vadd.f32 0.0, %v2105
    %v2107 = vpop.f32.mrb[0].mxu0
    %v2108 = vpop.f32.mrb[0].mxu0
    %2109 = vdwg.mxu0
    %v2110 = vadd.f32 %v1832, %v2063
    %v2111 = vadd.f32 %v1833, %v2065
    %v2112 = vadd.f32 %v1834, %v2104
    %v2113 = vadd.f32 %v1835, %v2106
    %v2114 = vmul.f32 %v2110, 0.5
    %v2115 = vtanh.pop %v2114
    %v2116 = vmul.f32 %v2115, 0.5
    %v2117 = vadd.f32 %v2116, 0.5
    %v2118 = vmul.f32 %v2111, 0.5
    %v2119 = vtanh.pop %v2118
    %v2120 = vmul.f32 %v2119, 0.5
    %v2121 = vadd.f32 %v2120, 0.5
    %v2122 = vtanh.pop %v2112
    %v2123 = vmul.f32 %v2113, 0.5
    %v2124 = vtanh.pop %v2123
    %v2125 = vmul.f32 %v2124, 0.5
    %v2126 = vadd.f32 %v2125, 0.5
    %v2127 = vmul.f32 %v2121, %v1825
    %v2128 = vmul.f32 %v2117, %v2122
    %v2129 = vadd.f32 %v2127, %v2128
    %v2130 = vtanh.pop %v2129
    %v2131 = vmul.f32 %v2126, %v2130
    %v2132 = vpack.c.bf16 %v2131, %v2131
    %s2133 = scalar_lea.vmem [#allocation3], 20
    %2134 = vst [vmem:[%s2133] sm:$0xf] %v2132
    %s2135 = scalar_lea.vmem [#allocation2], 192
    %v2136 = vld [vmem:[%s2135] sm:$0xff]
    %v2137 = vld [vmem:[%s2135 + $0x8] sm:$0xff]
    %v2138 = vld [vmem:[%s2135 + $0x10] sm:$0xff]
    %v2139 = vld [vmem:[%s2135 + $0x18] sm:$0xff]
    %v2140 = vld [vmem:[#allocation4] sm:$0xff]
    %v2141 = vld [vmem:[#allocation4 + $0x8] sm:$0xff]
    %v2142 = vld [vmem:[#allocation4 + $0x10] sm:$0xff]
    %v2143 = vld [vmem:[#allocation4 + $0x18] sm:$0xff]
    %v2144 = vld [vmem:[#allocation4 + $0x20] sm:$0xff]
    %v2145 = vld [vmem:[#allocation4 + $0x28] sm:$0xff]
    %v2146 = vld [vmem:[#allocation4 + $0x30] sm:$0xff]
    %v2147 = vld [vmem:[#allocation4 + $0x38] sm:$0xff]
    %v2148 = vld [vmem:[#allocation4 + $0x40] sm:$0xff]
    %v2149 = vld [vmem:[#allocation4 + $0x48] sm:$0xff]
    %v2150 = vld [vmem:[#allocation4 + $0x50] sm:$0xff]
    %v2151 = vld [vmem:[#allocation4 + $0x58] sm:$0xff]
    %v2152 = vld [vmem:[#allocation4 + $0x60] sm:$0xff]
    %v2153 = vld [vmem:[#allocation4 + $0x68] sm:$0xff]
    %v2154 = vld [vmem:[#allocation4 + $0x70] sm:$0xff]
    %v2155 = vld [vmem:[#allocation4 + $0x78] sm:$0xff]
    %v2156 = vld [vmem:[#allocation4 + $0x80] sm:$0xff]
    %v2157 = vld [vmem:[#allocation4 + $0x88] sm:$0xff]
    %v2158 = vld [vmem:[#allocation4 + $0x90] sm:$0xff]
    %v2159 = vld [vmem:[#allocation4 + $0x98] sm:$0xff]
    %v2160 = vld [vmem:[#allocation4 + $0xa0] sm:$0xff]
    %v2161 = vld [vmem:[#allocation4 + $0xa8] sm:$0xff]
    %v2162 = vld [vmem:[#allocation4 + $0xb0] sm:$0xff]
    %v2163 = vld [vmem:[#allocation4 + $0xb8] sm:$0xff]
    %v2164 = vld [vmem:[#allocation4 + $0xc0] sm:$0xff]
    %v2165 = vld [vmem:[#allocation4 + $0xc8] sm:$0xff]
    %v2166 = vld [vmem:[#allocation4 + $0xd0] sm:$0xff]
    %v2167 = vld [vmem:[#allocation4 + $0xd8] sm:$0xff]
    %v2168 = vld [vmem:[#allocation4 + $0xe0] sm:$0xff]
    %v2169 = vld [vmem:[#allocation4 + $0xe8] sm:$0xff]
    %v2170 = vld [vmem:[#allocation4 + $0xf0] sm:$0xff]
    %v2171 = vld [vmem:[#allocation4 + $0xf8] sm:$0xff]
    %v2204 = vunpack.c.l.b16 %v2140
    %v2205 = vunpack.c.h.b16 %v2140
    %v2206 = vunpack.c.l.b16 %v2141
    %v2207 = vunpack.c.h.b16 %v2141
    %v2208 = vunpack.c.l.b16 %v2142
    %v2209 = vunpack.c.h.b16 %v2142
    %v2210 = vunpack.c.l.b16 %v2143
    %v2211 = vunpack.c.h.b16 %v2143
    %v2212 = vunpack.c.l.b16 %v2144
    %v2213 = vunpack.c.h.b16 %v2144
    %v2214 = vunpack.c.l.b16 %v2145
    %v2215 = vunpack.c.h.b16 %v2145
    %v2216 = vunpack.c.l.b16 %v2146
    %v2217 = vunpack.c.h.b16 %v2146
    %v2218 = vunpack.c.l.b16 %v2147
    %v2219 = vunpack.c.h.b16 %v2147
    %v2220 = vunpack.c.l.b16 %v2148
    %v2221 = vunpack.c.h.b16 %v2148
    %v2222 = vunpack.c.l.b16 %v2149
    %v2223 = vunpack.c.h.b16 %v2149
    %v2224 = vunpack.c.l.b16 %v2150
    %v2225 = vunpack.c.h.b16 %v2150
    %v2226 = vunpack.c.l.b16 %v2151
    %v2227 = vunpack.c.h.b16 %v2151
    %v2228 = vunpack.c.l.b16 %v2152
    %v2229 = vunpack.c.h.b16 %v2152
    %v2230 = vunpack.c.l.b16 %v2153
    %v2231 = vunpack.c.h.b16 %v2153
    %v2232 = vunpack.c.l.b16 %v2154
    %v2233 = vunpack.c.h.b16 %v2154
    %v2234 = vunpack.c.l.b16 %v2155
    %v2235 = vunpack.c.h.b16 %v2155
    %v2236 = vunpack.c.l.b16 %v2156
    %v2237 = vunpack.c.h.b16 %v2156
    %v2238 = vunpack.c.l.b16 %v2157
    %v2239 = vunpack.c.h.b16 %v2157
    %v2240 = vunpack.c.l.b16 %v2158
    %v2241 = vunpack.c.h.b16 %v2158
    %v2242 = vunpack.c.l.b16 %v2159
    %v2243 = vunpack.c.h.b16 %v2159
    %v2244 = vunpack.c.l.b16 %v2160
    %v2245 = vunpack.c.h.b16 %v2160
    %v2246 = vunpack.c.l.b16 %v2161
    %v2247 = vunpack.c.h.b16 %v2161
    %v2248 = vunpack.c.l.b16 %v2162
    %v2249 = vunpack.c.h.b16 %v2162
    %v2250 = vunpack.c.l.b16 %v2163
    %v2251 = vunpack.c.h.b16 %v2163
    %v2252 = vunpack.c.l.b16 %v2164
    %v2253 = vunpack.c.h.b16 %v2164
    %v2254 = vunpack.c.l.b16 %v2165
    %v2255 = vunpack.c.h.b16 %v2165
    %v2256 = vunpack.c.l.b16 %v2166
    %v2257 = vunpack.c.h.b16 %v2166
    %v2258 = vunpack.c.l.b16 %v2167
    %v2259 = vunpack.c.h.b16 %v2167
    %v2260 = vunpack.c.l.b16 %v2168
    %v2261 = vunpack.c.h.b16 %v2168
    %v2262 = vunpack.c.l.b16 %v2169
    %v2263 = vunpack.c.h.b16 %v2169
    %v2264 = vunpack.c.l.b16 %v2170
    %v2265 = vunpack.c.h.b16 %v2170
    %v2266 = vunpack.c.l.b16 %v2171
    %v2267 = vunpack.c.h.b16 %v2171
    %v2268 = vpack.c.b16 %v2208, %v2204
    %v2269 = vpack.c.b16 %v2209, %v2205
    %v2270 = vpack.c.b16 %v2210, %v2206
    %v2271 = vpack.c.b16 %v2211, %v2207
    %v2272 = vpack.c.b16 %v2216, %v2212
    %v2273 = vpack.c.b16 %v2217, %v2213
    %v2274 = vpack.c.b16 %v2218, %v2214
    %v2275 = vpack.c.b16 %v2219, %v2215
    %v2276 = vpack.c.b16 %v2224, %v2220
    %v2277 = vpack.c.b16 %v2225, %v2221
    %v2278 = vpack.c.b16 %v2226, %v2222
    %v2279 = vpack.c.b16 %v2227, %v2223
    %v2280 = vpack.c.b16 %v2232, %v2228
    %v2281 = vpack.c.b16 %v2233, %v2229
    %v2282 = vpack.c.b16 %v2234, %v2230
    %v2283 = vpack.c.b16 %v2235, %v2231
    %v2284 = vpack.c.b16 %v2240, %v2236
    %v2285 = vpack.c.b16 %v2241, %v2237
    %v2286 = vpack.c.b16 %v2242, %v2238
    %v2287 = vpack.c.b16 %v2243, %v2239
    %v2288 = vpack.c.b16 %v2248, %v2244
    %v2289 = vpack.c.b16 %v2249, %v2245
    %v2290 = vpack.c.b16 %v2250, %v2246
    %v2291 = vpack.c.b16 %v2251, %v2247
    %v2292 = vpack.c.b16 %v2256, %v2252
    %v2293 = vpack.c.b16 %v2257, %v2253
    %v2294 = vpack.c.b16 %v2258, %v2254
    %v2295 = vpack.c.b16 %v2259, %v2255
    %v2296 = vpack.c.b16 %v2264, %v2260
    %v2297 = vpack.c.b16 %v2265, %v2261
    %v2298 = vpack.c.b16 %v2266, %v2262
    %v2299 = vpack.c.b16 %v2267, %v2263
    %2332 = vmatprep.subr.bf16.mxu0 %v2269
    %2333 = vmatpush1.bf16.msra.mxu0 %v2268
    %2334 = vmatprep.subr.bf16.mxu0 %v2273
    %2335 = vmatpush1.bf16.msra.mxu0 %v2272
    %2336 = vmatprep.subr.bf16.mxu0 %v2277
    %2337 = vmatpush1.bf16.msra.mxu0 %v2276
    %2338 = vmatprep.subr.bf16.mxu0 %v2281
    %2339 = vmatpush1.bf16.msra.mxu0 %v2280
    %2340 = vmatprep.subr.bf16.mxu0 %v2285
    %2341 = vmatpush1.bf16.msra.mxu0 %v2284
    %2342 = vmatprep.subr.bf16.mxu0 %v2289
    %2343 = vmatpush1.bf16.msra.mxu0 %v2288
    %2344 = vmatprep.subr.bf16.mxu0 %v2293
    %2345 = vmatpush1.bf16.msra.mxu0 %v2292
    %2346 = vmatprep.subr.bf16.mxu0 %v2297
    %2347 = vmatpush1.bf16.msra.mxu0 %v2296
    %2348 = vmatprep.subr.bf16.mxu0 0
    %2349 = vmatpush1.bf16.msra.mxu0 0
    %2350 = vmatprep.subr.bf16.mxu0 0
    %2351 = vmatpush1.bf16.msra.mxu0 0
    %2352 = vmatprep.subr.bf16.mxu0 0
    %2353 = vmatpush1.bf16.msra.mxu0 0
    %2354 = vmatprep.subr.bf16.mxu0 0
    %2355 = vmatpush1.bf16.msra.mxu0 0
    %2356 = vmatprep.subr.bf16.mxu0 0
    %2357 = vmatpush1.bf16.msra.mxu0 0
    %2358 = vmatprep.subr.bf16.mxu0 0
    %2359 = vmatpush1.bf16.msra.mxu0 0
    %2360 = vmatprep.subr.bf16.mxu0 0
    %2361 = vmatpush1.bf16.msra.mxu0 0
    %2362 = vmatprep.subr.bf16.mxu0 0
    %2363 = vmatpush1.bf16.msra.mxu0 0
    %2364 = vmatprep.mubr.bf16.mxu0 0
    %2365 = vmatmul.mubr.bf16.gmra.mrb[0].mxu0 %v2132
    %v2366 = vpop.f32.mrb[0].mxu0
    %v2367 = vadd.f32 0.0, %v2366
    %v2368 = vpop.f32.mrb[0].mxu0
    %v2369 = vadd.f32 0.0, %v2368
    %v2370 = vpop.f32.mrb[0].mxu0
    %v2371 = vpop.f32.mrb[0].mxu0
    %2372 = vdwg.mxu0
    %2373 = vmatprep.subr.bf16.mxu0 %v2271
    %2374 = vmatpush1.bf16.msra.mxu0 %v2270
    %2375 = vmatprep.subr.bf16.mxu0 %v2275
    %2376 = vmatpush1.bf16.msra.mxu0 %v2274
    %2377 = vmatprep.subr.bf16.mxu0 %v2279
    %2378 = vmatpush1.bf16.msra.mxu0 %v2278
    %2379 = vmatprep.subr.bf16.mxu0 %v2283
    %2380 = vmatpush1.bf16.msra.mxu0 %v2282
    %2381 = vmatprep.subr.bf16.mxu0 %v2287
    %2382 = vmatpush1.bf16.msra.mxu0 %v2286
    %2383 = vmatprep.subr.bf16.mxu0 %v2291
    %2384 = vmatpush1.bf16.msra.mxu0 %v2290
    %2385 = vmatprep.subr.bf16.mxu0 %v2295
    %2386 = vmatpush1.bf16.msra.mxu0 %v2294
    %2387 = vmatprep.subr.bf16.mxu0 %v2299
    %2388 = vmatpush1.bf16.msra.mxu0 %v2298
    %2389 = vmatprep.subr.bf16.mxu0 0
    %2390 = vmatpush1.bf16.msra.mxu0 0
    %2391 = vmatprep.subr.bf16.mxu0 0
    %2392 = vmatpush1.bf16.msra.mxu0 0
    %2393 = vmatprep.subr.bf16.mxu0 0
    %2394 = vmatpush1.bf16.msra.mxu0 0
    %2395 = vmatprep.subr.bf16.mxu0 0
    %2396 = vmatpush1.bf16.msra.mxu0 0
    %2397 = vmatprep.subr.bf16.mxu0 0
    %2398 = vmatpush1.bf16.msra.mxu0 0
    %2399 = vmatprep.subr.bf16.mxu0 0
    %2400 = vmatpush1.bf16.msra.mxu0 0
    %2401 = vmatprep.subr.bf16.mxu0 0
    %2402 = vmatpush1.bf16.msra.mxu0 0
    %2403 = vmatprep.subr.bf16.mxu0 0
    %2404 = vmatpush1.bf16.msra.mxu0 0
    %2405 = vmatprep.mubr.bf16.mxu0 0
    %2406 = vmatmul.mubr.bf16.gmra.mrb[0].mxu0 %v2132
    %v2407 = vpop.f32.mrb[0].mxu0
    %v2408 = vadd.f32 0.0, %v2407
    %v2409 = vpop.f32.mrb[0].mxu0
    %v2410 = vadd.f32 0.0, %v2409
    %v2411 = vpop.f32.mrb[0].mxu0
    %v2412 = vpop.f32.mrb[0].mxu0
    %2413 = vdwg.mxu0
    %v2414 = vadd.f32 %v2136, %v2367
    %v2415 = vadd.f32 %v2137, %v2369
    %v2416 = vadd.f32 %v2138, %v2408
    %v2417 = vadd.f32 %v2139, %v2410
    %v2418 = vmul.f32 %v2414, 0.5
    %v2419 = vtanh.pop %v2418
    %v2420 = vmul.f32 %v2419, 0.5
    %v2421 = vadd.f32 %v2420, 0.5
    %v2422 = vmul.f32 %v2415, 0.5
    %v2423 = vtanh.pop %v2422
    %v2424 = vmul.f32 %v2423, 0.5
    %v2425 = vadd.f32 %v2424, 0.5
    %v2426 = vtanh.pop %v2416
    %v2427 = vmul.f32 %v2417, 0.5
    %v2428 = vtanh.pop %v2427
    %v2429 = vmul.f32 %v2428, 0.5
    %v2430 = vadd.f32 %v2429, 0.5
    %v2431 = vmul.f32 %v2425, %v2129
    %v2432 = vmul.f32 %v2421, %v2426
    %v2433 = vadd.f32 %v2431, %v2432
    %v2434 = vtanh.pop %v2433
    %v2435 = vmul.f32 %v2430, %v2434
    %v2436 = vpack.c.bf16 %v2435, %v2435
    %s2437 = scalar_lea.vmem [#allocation3], 24
    %2438 = vst [vmem:[%s2437] sm:$0xf] %v2436
    %s2439 = scalar_lea.vmem [#allocation2], 224
    %v2440 = vld [vmem:[%s2439] sm:$0xff]
    %v2441 = vld [vmem:[%s2439 + $0x8] sm:$0xff]
    %v2442 = vld [vmem:[%s2439 + $0x10] sm:$0xff]
    %v2443 = vld [vmem:[%s2439 + $0x18] sm:$0xff]
    %v2444 = vld [vmem:[#allocation4] sm:$0xff]
    %v2445 = vld [vmem:[#allocation4 + $0x8] sm:$0xff]
    %v2446 = vld [vmem:[#allocation4 + $0x10] sm:$0xff]
    %v2447 = vld [vmem:[#allocation4 + $0x18] sm:$0xff]
    %v2448 = vld [vmem:[#allocation4 + $0x20] sm:$0xff]
    %v2449 = vld [vmem:[#allocation4 + $0x28] sm:$0xff]
    %v2450 = vld [vmem:[#allocation4 + $0x30] sm:$0xff]
    %v2451 = vld [vmem:[#allocation4 + $0x38] sm:$0xff]
    %v2452 = vld [vmem:[#allocation4 + $0x40] sm:$0xff]
    %v2453 = vld [vmem:[#allocation4 + $0x48] sm:$0xff]
    %v2454 = vld [vmem:[#allocation4 + $0x50] sm:$0xff]
    %v2455 = vld [vmem:[#allocation4 + $0x58] sm:$0xff]
    %v2456 = vld [vmem:[#allocation4 + $0x60] sm:$0xff]
    %v2457 = vld [vmem:[#allocation4 + $0x68] sm:$0xff]
    %v2458 = vld [vmem:[#allocation4 + $0x70] sm:$0xff]
    %v2459 = vld [vmem:[#allocation4 + $0x78] sm:$0xff]
    %v2460 = vld [vmem:[#allocation4 + $0x80] sm:$0xff]
    %v2461 = vld [vmem:[#allocation4 + $0x88] sm:$0xff]
    %v2462 = vld [vmem:[#allocation4 + $0x90] sm:$0xff]
    %v2463 = vld [vmem:[#allocation4 + $0x98] sm:$0xff]
    %v2464 = vld [vmem:[#allocation4 + $0xa0] sm:$0xff]
    %v2465 = vld [vmem:[#allocation4 + $0xa8] sm:$0xff]
    %v2466 = vld [vmem:[#allocation4 + $0xb0] sm:$0xff]
    %v2467 = vld [vmem:[#allocation4 + $0xb8] sm:$0xff]
    %v2468 = vld [vmem:[#allocation4 + $0xc0] sm:$0xff]
    %v2469 = vld [vmem:[#allocation4 + $0xc8] sm:$0xff]
    %v2470 = vld [vmem:[#allocation4 + $0xd0] sm:$0xff]
    %v2471 = vld [vmem:[#allocation4 + $0xd8] sm:$0xff]
    %v2472 = vld [vmem:[#allocation4 + $0xe0] sm:$0xff]
    %v2473 = vld [vmem:[#allocation4 + $0xe8] sm:$0xff]
    %v2474 = vld [vmem:[#allocation4 + $0xf0] sm:$0xff]
    %v2475 = vld [vmem:[#allocation4 + $0xf8] sm:$0xff]
    %v2508 = vunpack.c.l.b16 %v2444
    %v2509 = vunpack.c.h.b16 %v2444
    %v2510 = vunpack.c.l.b16 %v2445
    %v2511 = vunpack.c.h.b16 %v2445
    %v2512 = vunpack.c.l.b16 %v2446
    %v2513 = vunpack.c.h.b16 %v2446
    %v2514 = vunpack.c.l.b16 %v2447
    %v2515 = vunpack.c.h.b16 %v2447
    %v2516 = vunpack.c.l.b16 %v2448
    %v2517 = vunpack.c.h.b16 %v2448
    %v2518 = vunpack.c.l.b16 %v2449
    %v2519 = vunpack.c.h.b16 %v2449
    %v2520 = vunpack.c.l.b16 %v2450
    %v2521 = vunpack.c.h.b16 %v2450
    %v2522 = vunpack.c.l.b16 %v2451
    %v2523 = vunpack.c.h.b16 %v2451
    %v2524 = vunpack.c.l.b16 %v2452
    %v2525 = vunpack.c.h.b16 %v2452
    %v2526 = vunpack.c.l.b16 %v2453
    %v2527 = vunpack.c.h.b16 %v2453
    %v2528 = vunpack.c.l.b16 %v2454
    %v2529 = vunpack.c.h.b16 %v2454
    %v2530 = vunpack.c.l.b16 %v2455
    %v2531 = vunpack.c.h.b16 %v2455
    %v2532 = vunpack.c.l.b16 %v2456
    %v2533 = vunpack.c.h.b16 %v2456
    %v2534 = vunpack.c.l.b16 %v2457
    %v2535 = vunpack.c.h.b16 %v2457
    %v2536 = vunpack.c.l.b16 %v2458
    %v2537 = vunpack.c.h.b16 %v2458
    %v2538 = vunpack.c.l.b16 %v2459
    %v2539 = vunpack.c.h.b16 %v2459
    %v2540 = vunpack.c.l.b16 %v2460
    %v2541 = vunpack.c.h.b16 %v2460
    %v2542 = vunpack.c.l.b16 %v2461
    %v2543 = vunpack.c.h.b16 %v2461
    %v2544 = vunpack.c.l.b16 %v2462
    %v2545 = vunpack.c.h.b16 %v2462
    %v2546 = vunpack.c.l.b16 %v2463
    %v2547 = vunpack.c.h.b16 %v2463
    %v2548 = vunpack.c.l.b16 %v2464
    %v2549 = vunpack.c.h.b16 %v2464
    %v2550 = vunpack.c.l.b16 %v2465
    %v2551 = vunpack.c.h.b16 %v2465
    %v2552 = vunpack.c.l.b16 %v2466
    %v2553 = vunpack.c.h.b16 %v2466
    %v2554 = vunpack.c.l.b16 %v2467
    %v2555 = vunpack.c.h.b16 %v2467
    %v2556 = vunpack.c.l.b16 %v2468
    %v2557 = vunpack.c.h.b16 %v2468
    %v2558 = vunpack.c.l.b16 %v2469
    %v2559 = vunpack.c.h.b16 %v2469
    %v2560 = vunpack.c.l.b16 %v2470
    %v2561 = vunpack.c.h.b16 %v2470
    %v2562 = vunpack.c.l.b16 %v2471
    %v2563 = vunpack.c.h.b16 %v2471
    %v2564 = vunpack.c.l.b16 %v2472
    %v2565 = vunpack.c.h.b16 %v2472
    %v2566 = vunpack.c.l.b16 %v2473
    %v2567 = vunpack.c.h.b16 %v2473
    %v2568 = vunpack.c.l.b16 %v2474
    %v2569 = vunpack.c.h.b16 %v2474
    %v2570 = vunpack.c.l.b16 %v2475
    %v2571 = vunpack.c.h.b16 %v2475
    %v2572 = vpack.c.b16 %v2512, %v2508
    %v2573 = vpack.c.b16 %v2513, %v2509
    %v2574 = vpack.c.b16 %v2514, %v2510
    %v2575 = vpack.c.b16 %v2515, %v2511
    %v2576 = vpack.c.b16 %v2520, %v2516
    %v2577 = vpack.c.b16 %v2521, %v2517
    %v2578 = vpack.c.b16 %v2522, %v2518
    %v2579 = vpack.c.b16 %v2523, %v2519
    %v2580 = vpack.c.b16 %v2528, %v2524
    %v2581 = vpack.c.b16 %v2529, %v2525
    %v2582 = vpack.c.b16 %v2530, %v2526
    %v2583 = vpack.c.b16 %v2531, %v2527
    %v2584 = vpack.c.b16 %v2536, %v2532
    %v2585 = vpack.c.b16 %v2537, %v2533
    %v2586 = vpack.c.b16 %v2538, %v2534
    %v2587 = vpack.c.b16 %v2539, %v2535
    %v2588 = vpack.c.b16 %v2544, %v2540
    %v2589 = vpack.c.b16 %v2545, %v2541
    %v2590 = vpack.c.b16 %v2546, %v2542
    %v2591 = vpack.c.b16 %v2547, %v2543
    %v2592 = vpack.c.b16 %v2552, %v2548
    %v2593 = vpack.c.b16 %v2553, %v2549
    %v2594 = vpack.c.b16 %v2554, %v2550
    %v2595 = vpack.c.b16 %v2555, %v2551
    %v2596 = vpack.c.b16 %v2560, %v2556
    %v2597 = vpack.c.b16 %v2561, %v2557
    %v2598 = vpack.c.b16 %v2562, %v2558
    %v2599 = vpack.c.b16 %v2563, %v2559
    %v2600 = vpack.c.b16 %v2568, %v2564
    %v2601 = vpack.c.b16 %v2569, %v2565
    %v2602 = vpack.c.b16 %v2570, %v2566
    %v2603 = vpack.c.b16 %v2571, %v2567
    %2636 = vmatprep.subr.bf16.mxu0 %v2573
    %2637 = vmatpush1.bf16.msra.mxu0 %v2572
    %2638 = vmatprep.subr.bf16.mxu0 %v2577
    %2639 = vmatpush1.bf16.msra.mxu0 %v2576
    %2640 = vmatprep.subr.bf16.mxu0 %v2581
    %2641 = vmatpush1.bf16.msra.mxu0 %v2580
    %2642 = vmatprep.subr.bf16.mxu0 %v2585
    %2643 = vmatpush1.bf16.msra.mxu0 %v2584
    %2644 = vmatprep.subr.bf16.mxu0 %v2589
    %2645 = vmatpush1.bf16.msra.mxu0 %v2588
    %2646 = vmatprep.subr.bf16.mxu0 %v2593
    %2647 = vmatpush1.bf16.msra.mxu0 %v2592
    %2648 = vmatprep.subr.bf16.mxu0 %v2597
    %2649 = vmatpush1.bf16.msra.mxu0 %v2596
    %2650 = vmatprep.subr.bf16.mxu0 %v2601
    %2651 = vmatpush1.bf16.msra.mxu0 %v2600
    %2652 = vmatprep.subr.bf16.mxu0 0
    %2653 = vmatpush1.bf16.msra.mxu0 0
    %2654 = vmatprep.subr.bf16.mxu0 0
    %2655 = vmatpush1.bf16.msra.mxu0 0
    %2656 = vmatprep.subr.bf16.mxu0 0
    %2657 = vmatpush1.bf16.msra.mxu0 0
    %2658 = vmatprep.subr.bf16.mxu0 0
    %2659 = vmatpush1.bf16.msra.mxu0 0
    %2660 = vmatprep.subr.bf16.mxu0 0
    %2661 = vmatpush1.bf16.msra.mxu0 0
    %2662 = vmatprep.subr.bf16.mxu0 0
    %2663 = vmatpush1.bf16.msra.mxu0 0
    %2664 = vmatprep.subr.bf16.mxu0 0
    %2665 = vmatpush1.bf16.msra.mxu0 0
    %2666 = vmatprep.subr.bf16.mxu0 0
    %2667 = vmatpush1.bf16.msra.mxu0 0
    %2668 = vmatprep.mubr.bf16.mxu0 0
    %2669 = vmatmul.mubr.bf16.gmra.mrb[0].mxu0 %v2436
    %v2670 = vpop.f32.mrb[0].mxu0
    %v2671 = vadd.f32 0.0, %v2670
    %v2672 = vpop.f32.mrb[0].mxu0
    %v2673 = vadd.f32 0.0, %v2672
    %v2674 = vpop.f32.mrb[0].mxu0
    %v2675 = vpop.f32.mrb[0].mxu0
    %2676 = vdwg.mxu0
    %2677 = vmatprep.subr.bf16.mxu0 %v2575
    %2678 = vmatpush1.bf16.msra.mxu0 %v2574
    %2679 = vmatprep.subr.bf16.mxu0 %v2579
    %2680 = vmatpush1.bf16.msra.mxu0 %v2578
    %2681 = vmatprep.subr.bf16.mxu0 %v2583
    %2682 = vmatpush1.bf16.msra.mxu0 %v2582
    %2683 = vmatprep.subr.bf16.mxu0 %v2587
    %2684 = vmatpush1.bf16.msra.mxu0 %v2586
    %2685 = vmatprep.subr.bf16.mxu0 %v2591
    %2686 = vmatpush1.bf16.msra.mxu0 %v2590
    %2687 = vmatprep.subr.bf16.mxu0 %v2595
    %2688 = vmatpush1.bf16.msra.mxu0 %v2594
    %2689 = vmatprep.subr.bf16.mxu0 %v2599
    %2690 = vmatpush1.bf16.msra.mxu0 %v2598
    %2691 = vmatprep.subr.bf16.mxu0 %v2603
    %2692 = vmatpush1.bf16.msra.mxu0 %v2602
    %2693 = vmatprep.subr.bf16.mxu0 0
    %2694 = vmatpush1.bf16.msra.mxu0 0
    %2695 = vmatprep.subr.bf16.mxu0 0
    %2696 = vmatpush1.bf16.msra.mxu0 0
    %2697 = vmatprep.subr.bf16.mxu0 0
    %2698 = vmatpush1.bf16.msra.mxu0 0
    %2699 = vmatprep.subr.bf16.mxu0 0
    %2700 = vmatpush1.bf16.msra.mxu0 0
    %2701 = vmatprep.subr.bf16.mxu0 0
    %2702 = vmatpush1.bf16.msra.mxu0 0
    %2703 = vmatprep.subr.bf16.mxu0 0
    %2704 = vmatpush1.bf16.msra.mxu0 0
    %2705 = vmatprep.subr.bf16.mxu0 0
    %2706 = vmatpush1.bf16.msra.mxu0 0
    %2707 = vmatprep.subr.bf16.mxu0 0
    %2708 = vmatpush1.bf16.msra.mxu0 0
    %2709 = vmatprep.mubr.bf16.mxu0 0
    %2710 = vmatmul.mubr.bf16.gmra.mrb[0].mxu0 %v2436
    %v2711 = vpop.f32.mrb[0].mxu0
    %v2712 = vadd.f32 0.0, %v2711
    %v2713 = vpop.f32.mrb[0].mxu0
    %v2714 = vadd.f32 0.0, %v2713
    %v2715 = vpop.f32.mrb[0].mxu0
    %v2716 = vpop.f32.mrb[0].mxu0
    %2717 = vdwg.mxu0
    %v2718 = vadd.f32 %v2440, %v2671
    %v2719 = vadd.f32 %v2441, %v2673
    %v2720 = vadd.f32 %v2442, %v2712
    %v2721 = vadd.f32 %v2443, %v2714
    %v2722 = vmul.f32 %v2718, 0.5
    %v2723 = vtanh.pop %v2722
    %v2724 = vmul.f32 %v2723, 0.5
    %v2725 = vadd.f32 %v2724, 0.5
    %v2726 = vmul.f32 %v2719, 0.5
    %v2727 = vtanh.pop %v2726
    %v2728 = vmul.f32 %v2727, 0.5
    %v2729 = vadd.f32 %v2728, 0.5
    %v2730 = vtanh.pop %v2720
    %v2731 = vmul.f32 %v2721, 0.5
    %v2732 = vtanh.pop %v2731
    %v2733 = vmul.f32 %v2732, 0.5
    %v2734 = vadd.f32 %v2733, 0.5
    %v2735 = vmul.f32 %v2729, %v2433
    %v2736 = vmul.f32 %v2725, %v2730
    %v2737 = vadd.f32 %v2735, %v2736
    %v2738 = vtanh.pop %v2737
    %v2739 = vmul.f32 %v2734, %v2738
    %v2740 = vpack.c.bf16 %v2739, %v2739
    %s2741 = scalar_lea.vmem [#allocation3], 28
    %2742 = vst [vmem:[%s2741] sm:$0xf] %v2740
    %v2743 = vld [vmem:[#allocation3] sm:$0xf]
    %v2744 = vld [vmem:[#allocation3 + $0x4] sm:$0xf]
    %v2745 = vld [vmem:[#allocation3 + $0x8] sm:$0xf]
    %v2746 = vld [vmem:[#allocation3 + $0xc] sm:$0xf]
    %v2747 = vld [vmem:[#allocation3 + $0x10] sm:$0xf]
    %v2748 = vld [vmem:[#allocation3 + $0x14] sm:$0xf]
    %v2749 = vld [vmem:[#allocation3 + $0x18] sm:$0xf]
    %v2750 = vld [vmem:[#allocation3 + $0x1c] sm:$0xf]
    %v2751 = vld [vmem:[%s4] sm:$0xf]
    %v2752 = vld [vmem:[%s4 + $0x4] sm:$0xf]
    %v2753 = vld [vmem:[%s4 + $0x8] sm:$0xf]
    %v2754 = vld [vmem:[%s4 + $0xc] sm:$0xf]
    %v2755 = vld [vmem:[%s4 + $0x10] sm:$0xf]
    %v2756 = vld [vmem:[%s4 + $0x14] sm:$0xf]
    %v2757 = vld [vmem:[%s4 + $0x18] sm:$0xf]
    %v2758 = vld [vmem:[%s4 + $0x1c] sm:$0xf]
    %v2759 = vld [vmem:[%s4 + $0x20] sm:$0xf]
    %v2760 = vld [vmem:[%s4 + $0x24] sm:$0xf]
    %v2761 = vld [vmem:[%s4 + $0x28] sm:$0xf]
    %v2762 = vld [vmem:[%s4 + $0x2c] sm:$0xf]
    %v2763 = vld [vmem:[%s4 + $0x30] sm:$0xf]
    %v2764 = vld [vmem:[%s4 + $0x34] sm:$0xf]
    %v2765 = vld [vmem:[%s4 + $0x38] sm:$0xf]
    %v2766 = vld [vmem:[%s4 + $0x3c] sm:$0xf]
    %v2767 = vld [vmem:[%s5] sm:$0x1]
    %v2769 = vlaneseq
    %v2770 = vshrl.u32 %v2769, 7
    %v2771 = vsub.s32 0, %v2770
    %v2772 = vrot.slane %v2767, %v2771
    %v2782 = vunpack.c.l.b16 %v2743
    %v2783 = vunpack.c.l.b16 %v2744
    %v2784 = vunpack.c.l.b16 %v2745
    %v2785 = vunpack.c.l.b16 %v2746
    %v2786 = vunpack.c.l.b16 %v2747
    %v2787 = vunpack.c.l.b16 %v2748
    %v2788 = vunpack.c.l.b16 %v2749
    %v2789 = vunpack.c.l.b16 %v2750
    %v2790 = vpack.c.b16 %v2783, %v2782
    %v2791 = vpack.c.b16 %v2785, %v2784
    %v2792 = vpack.c.b16 %v2787, %v2786
    %v2793 = vpack.c.b16 %v2789, %v2788
    %v2814 = vunpack.c.l.b16 %v2751
    %v2815 = vunpack.c.l.b16 %v2752
    %v2816 = vunpack.c.l.b16 %v2753
    %v2817 = vunpack.c.l.b16 %v2754
    %v2818 = vunpack.c.l.b16 %v2755
    %v2819 = vunpack.c.l.b16 %v2756
    %v2820 = vunpack.c.l.b16 %v2757
    %v2821 = vunpack.c.l.b16 %v2758
    %v2822 = vunpack.c.l.b16 %v2759
    %v2823 = vunpack.c.l.b16 %v2760
    %v2824 = vunpack.c.l.b16 %v2761
    %v2825 = vunpack.c.l.b16 %v2762
    %v2826 = vunpack.c.l.b16 %v2763
    %v2827 = vunpack.c.l.b16 %v2764
    %v2828 = vunpack.c.l.b16 %v2765
    %v2829 = vunpack.c.l.b16 %v2766
    %v2830 = vpack.c.b16 %v2815, %v2814
    %v2831 = vpack.c.b16 %v2817, %v2816
    %v2832 = vpack.c.b16 %v2819, %v2818
    %v2833 = vpack.c.b16 %v2821, %v2820
    %v2834 = vpack.c.b16 %v2823, %v2822
    %v2835 = vpack.c.b16 %v2825, %v2824
    %v2836 = vpack.c.b16 %v2827, %v2826
    %v2837 = vpack.c.b16 %v2829, %v2828
    %2846 = vmatprep.subr.bf16.mxu0 0
    %2847 = vmatpush1.bf16.msra.mxu0 %v2830
    %2848 = vmatprep.subr.bf16.mxu0 0
    %2849 = vmatpush1.bf16.msra.mxu0 %v2831
    %2850 = vmatprep.subr.bf16.mxu0 0
    %2851 = vmatpush1.bf16.msra.mxu0 %v2832
    %2852 = vmatprep.subr.bf16.mxu0 0
    %2853 = vmatpush1.bf16.msra.mxu0 %v2833
    %2854 = vmatprep.subr.bf16.mxu0 0
    %2855 = vmatpush1.bf16.msra.mxu0 %v2834
    %2856 = vmatprep.subr.bf16.mxu0 0
    %2857 = vmatpush1.bf16.msra.mxu0 %v2835
    %2858 = vmatprep.subr.bf16.mxu0 0
    %2859 = vmatpush1.bf16.msra.mxu0 %v2836
    %2860 = vmatprep.subr.bf16.mxu0 0
    %2861 = vmatpush1.bf16.msra.mxu0 %v2837
    %2862 = vmatprep.subr.bf16.mxu0 0
    %2863 = vmatpush1.bf16.msra.mxu0 0
    %2864 = vmatprep.subr.bf16.mxu0 0
    %2865 = vmatpush1.bf16.msra.mxu0 0
    %2866 = vmatprep.subr.bf16.mxu0 0
    %2867 = vmatpush1.bf16.msra.mxu0 0
    %2868 = vmatprep.subr.bf16.mxu0 0
    %2869 = vmatpush1.bf16.msra.mxu0 0
    %2870 = vmatprep.subr.bf16.mxu0 0
    %2871 = vmatpush1.bf16.msra.mxu0 0
    %2872 = vmatprep.subr.bf16.mxu0 0
    %2873 = vmatpush1.bf16.msra.mxu0 0
    %2874 = vmatprep.subr.bf16.mxu0 0
    %2875 = vmatpush1.bf16.msra.mxu0 0
    %2876 = vmatprep.subr.bf16.mxu0 0
    %2877 = vmatpush1.bf16.msra.mxu0 0
    %2878 = vmatprep.mubr.bf16.mxu0 0
    %2879 = vmatmul.mubr.bf16.gmra.mrb[0].mxu0 %v2790
    %v2880 = vpop.f32.mrb[0].mxu0
    %v2881 = vadd.f32 %v2772, %v2880
    %v2882 = vpop.f32.mrb[0].mxu0
    %v2883 = vpop.f32.mrb[0].mxu0
    %v2884 = vadd.f32 %v2772, %v2883
    %v2885 = vpop.f32.mrb[0].mxu0
    %2886 = vmatprep.mubr.bf16.mxu0 0
    %2887 = vmatmul.mubr.bf16.gmra.mrb[0].mxu0 %v2791
    %v2888 = vpop.f32.mrb[0].mxu0
    %v2889 = vadd.f32 %v2772, %v2888
    %v2890 = vpop.f32.mrb[0].mxu0
    %v2891 = vpop.f32.mrb[0].mxu0
    %v2892 = vadd.f32 %v2772, %v2891
    %v2893 = vpop.f32.mrb[0].mxu0
    %2894 = vmatprep.mubr.bf16.mxu0 0
    %2895 = vmatmul.mubr.bf16.gmra.mrb[0].mxu0 %v2792
    %v2896 = vpop.f32.mrb[0].mxu0
    %v2897 = vadd.f32 %v2772, %v2896
    %v2898 = vpop.f32.mrb[0].mxu0
    %v2899 = vpop.f32.mrb[0].mxu0
    %v2900 = vadd.f32 %v2772, %v2899
    %v2901 = vpop.f32.mrb[0].mxu0
    %2902 = vmatprep.mubr.bf16.mxu0 0
    %2903 = vmatmul.mubr.bf16.gmra.mrb[0].mxu0 %v2793
    %v2904 = vpop.f32.mrb[0].mxu0
    %v2905 = vadd.f32 %v2772, %v2904
    %v2906 = vpop.f32.mrb[0].mxu0
    %v2907 = vpop.f32.mrb[0].mxu0
    %v2908 = vadd.f32 %v2772, %v2907
    %v2909 = vpop.f32.mrb[0].mxu0
    %2910 = vdwg.mxu0
    %vm2911 = vcmask 64512
    %2912 = vst.msk [vmem:[#allocation7] sm:$0xff] %vm2911, %v2881
    %2913 = vst.msk [vmem:[#allocation7 + $0x8] sm:$0xff] %vm2911, %v2884
    %2914 = vst.msk [vmem:[#allocation7 + $0x10] sm:$0xff] %vm2911, %v2889
    %2915 = vst.msk [vmem:[#allocation7 + $0x18] sm:$0xff] %vm2911, %v2892
    %2916 = vst.msk [vmem:[#allocation7 + $0x20] sm:$0xff] %vm2911, %v2897
    %2917 = vst.msk [vmem:[#allocation7 + $0x28] sm:$0xff] %vm2911, %v2900
    %2918 = vst.msk [vmem:[#allocation7 + $0x30] sm:$0xff] %vm2911, %v2905
    %2919 = vst.msk [vmem:[#allocation7 + $0x38] sm:$0xff] %vm2911, %v2908
    // Predicated region
    $region30: #{tpu_custom_call.1} parent=1 // pred_check
      _
    $region31: #{tpu_custom_call.1} parent=1 // pred_check_branch
      %2921 = sbr.rel (0) target = $region33
    $region32: #{tpu_custom_call.1} parent=1 // pred_region
      %s2923 = ssub.s32 1024, 1024
      %2924 = vsyncadd [#allocation6], %s2923
      %s2925 = sshll.u32 [#allocation7], 4
      %s2926 = int_to_ptr.vmem [resolvable:$true] %s2925
      %2931 = dma.vmem_to_hbm [thread:$0]  %s2926, 1024, %s6, [#allocation6], 128, 128, 8
    $region33: #{tpu_custom_call.1} parent=1 // pred_fallthru
      _
    // Predicated region
    $region34: #{tpu_custom_call.1} parent=1 // pred_check
      _
    $region35: #{tpu_custom_call.1} parent=1 // pred_check_branch
      %2933 = sbr.rel (0) target = $region37
    $region36: #{tpu_custom_call.1} parent=1 // pred_region
      %2934 = dma.done [#allocation6], 1024
    $region37: #{tpu_custom_call.1} parent=1 // pred_fallthru
      _
    %2935 = vsyncpa [#allocation5], 1
    %2936 = vsyncpa [#allocation6], 1

</llo_original>
